<compile_context>
chip_gen: v6e
topology: v6e:2x2x1
jax: 0.10.0
libtpu: 0.0.40
codegen_flags: <defaults>
</compile_context>

<pallas_src>
import jax
import jax.numpy as jnp
from jax import lax
from jax.experimental import pallas as pl
from jax.experimental.pallas import tpu as pltpu


def make_resblock_kernel(NB, H, W, KS, Cin, Cout, cdt):
    P = (KS - 1) // 2
    Hp, Wp = H + 2 * P, W + 2 * P
    M = NB * H * W
    K1 = KS * KS * Cin + Cin          # conv1 taps + raw-x columns (fused 1x1 shortcut)
    K2 = KS * KS * Cout

    def gather_taps(pad_ref):
        # Static Ref-slice views (zero cost); each load is one tap only, so live
        # ranges stay small and no full padded tensor is hoisted into vregs.
        return [pad_ref[:, kh:kh + H, kw:kw + W, :]
                for kh in range(KS) for kw in range(KS)]

    def fill_padded(pad_ref, interior):
        # One full-width (unmasked) memset + one interior write.  Must stay in
        # the per-step path: under dimension_semantics=("parallel",) each core
        # has its own uninitialized scratch instance.
        pad_ref[...] = jnp.zeros(pad_ref.shape, pad_ref.dtype)
        pad_ref[:, P:P + H, P:P + W, :] = interior

    def kernel(x_ref, w1s_ref, b1s_ref, w2_ref, b2_ref, out_ref,
               xpad_ref, h1pad_ref):
        x = x_ref[...]                                            # (NB, H, W, Cin)

        # ---- ConvBlock 1 (ReLU -> KSxKS 'same' conv), fused with 1x1 shortcut ----
        # ReLU(0) == 0, so applying ReLU before zero-padding is exact.
        fill_padded(xpad_ref, jnp.maximum(x, 0.0).astype(cdt))
        taps1 = gather_taps(xpad_ref) + [x.astype(cdt)]           # raw x = shortcut cols
        m1 = jnp.concatenate(taps1, axis=-1).reshape(M, K1)       # (M, K1), in-register
        h1sc = jnp.dot(m1, w1s_ref[...],
                       preferred_element_type=jnp.float32) + b1s_ref[...]  # (M, 2*Cout)
        h1 = h1sc[:, :Cout]                                       # conv1 output (f32)
        sc = h1sc[:, Cout:]                                       # 1x1 shortcut  (f32)

        # ---- ConvBlock 2 (ReLU -> KSxKS 'same' conv) ----
        fill_padded(h1pad_ref,
                    jnp.maximum(h1, 0.0).astype(cdt).reshape(NB, H, W, Cout))
        m2 = jnp.concatenate(gather_taps(h1pad_ref), axis=-1).reshape(M, K2)
        h2 = jnp.dot(m2, w2_ref[...],
                     preferred_element_type=jnp.float32) + b2_ref[...]     # (M, Cout)

        out_ref[...] = (h2 + sc).reshape(NB, H * W, Cout).astype(out_ref.dtype)

    return kernel


def resblock_pallas(x_nchw, w1, b1, w2, b2, ws, bs, kernel_size,
                    compute_dtype=jnp.float32, batch_block=1):
    """ResBlock forward. Weights in HWIO layout; x in NCHW; returns NCHW."""
    N, Cin, H, W = x_nchw.shape
    Cout = w1.shape[-1]
    KS = kernel_size
    P = (KS - 1) // 2
    Hp, Wp = H + 2 * P, W + 2 * P
    HW = H * W
    NB = batch_block
    assert N % NB == 0, "batch must be divisible by batch_block"
    K1 = KS * KS * Cin + Cin
    K2 = KS * KS * Cout

    # NCHW -> NHWC (layout plumbing stays in XLA, outside the kernel).
    x_nhwc = jnp.transpose(x_nchw, (0, 2, 3, 1)).astype(compute_dtype)

    # Block-diagonal weights for the fused (conv1 | 1x1 shortcut) matmul.
    # Row order (kh, kw, cin) matches the kernel's tap concatenation order.
    w1m = w1.reshape(KS * KS * Cin, Cout).astype(compute_dtype)
    wsm = ws.reshape(Cin, Cout).astype(compute_dtype)
    w1s = jnp.concatenate(
        [jnp.concatenate([w1m, jnp.zeros((KS * KS * Cin, Cout), compute_dtype)], axis=1),
         jnp.concatenate([jnp.zeros((Cin, Cout), compute_dtype), wsm], axis=1)],
        axis=0)                                                    # (K1, 2*Cout)
    b1s = jnp.concatenate([b1, bs]).reshape(1, 2 * Cout).astype(jnp.float32)
    w2m = w2.reshape(K2, Cout).astype(compute_dtype)
    b2r = b2.reshape(1, Cout).astype(jnp.float32)

    kernel = make_resblock_kernel(NB, H, W, KS, Cin, Cout, compute_dtype)

    out = pl.pallas_call(
        kernel,
        out_shape=jax.ShapeDtypeStruct((N, HW, Cout), jnp.float32),
        grid_spec=pltpu.PrefetchScalarGridSpec(
            num_scalar_prefetch=0,
            grid=(N // NB,),
            in_specs=[
                pl.BlockSpec((NB, H, W, Cin), lambda b: (b, 0, 0, 0)),
                pl.BlockSpec((K1, 2 * Cout), lambda b: (0, 0)),
                pl.BlockSpec((1, 2 * Cout), lambda b: (0, 0)),
                pl.BlockSpec((K2, Cout), lambda b: (0, 0)),
                pl.BlockSpec((1, Cout), lambda b: (0, 0)),
            ],
            out_specs=pl.BlockSpec((NB, HW, Cout), lambda b: (b, 0, 0)),
            scratch_shapes=[
                pltpu.VMEM((NB, Hp, Wp, Cin), compute_dtype),    # padded ReLU(x)
                pltpu.VMEM((NB, Hp, Wp, Cout), compute_dtype),   # padded ReLU(h1)
            ],
        ),
        compiler_params=pltpu.CompilerParams(
            dimension_semantics=("parallel",)),
    )(x_nhwc, w1s, b1s, w2m, b2r)

    # (N, HW, Cout) -> NHWC -> NCHW to match the PyTorch output convention.
    return jnp.transpose(out.reshape(N, H, W, Cout), (0, 3, 1, 2))


def resblock_reference(x_nchw, w1, b1, w2, b2, ws, bs):
    """Plain-JAX reference of the ResBlock forward (for correctness check)."""
    dn = ('NHWC', 'HWIO', 'NHWC')
    x = jnp.transpose(x_nchw, (0, 2, 3, 1)).astype(jnp.float32)

    def conv(inp, w, b):
        return lax.conv_general_dilated(inp, w, (1, 1), 'SAME',
                                        dimension_numbers=dn) + b

    h1 = conv(jax.nn.relu(x), w1, b1)
    h2 = conv(jax.nn.relu(h1), w2, b2)
    sc = conv(x, ws, bs)           # 1x1 conv, no activation, no norm
    return jnp.transpose(h2 + sc, (0, 3, 1, 2))


if __name__ == "__main__":
    # Small shapes consistent with the module: in_chans != out_chans so the
    # resample path is a 1x1 ConvBlock (act='none', norm='none').
    N, Cin, Cout, H, W, KS = 2, 4, 8, 16, 16, 3

    key = jax.random.PRNGKey(0)
    k = jax.random.split(key, 7)
    x = jax.random.normal(k[0], (N, Cin, H, W), jnp.float32)
    w1 = jax.random.normal(k[1], (KS, KS, Cin, Cout), jnp.float32) * 0.1
    b1 = jax.random.normal(k[2], (Cout,), jnp.float32) * 0.1
    w2 = jax.random.normal(k[3], (KS, KS, Cout, Cout), jnp.float32) * 0.1
    b2 = jax.random.normal(k[4], (Cout,), jnp.float32) * 0.1
    ws = jax.random.normal(k[5], (1, 1, Cin, Cout), jnp.float32) * 0.1
    bs = jax.random.normal(k[6], (Cout,), jnp.float32) * 0.1

    # float32 for the strict self-test (also the right choice on v5e);
    # pass compute_dtype=jnp.bfloat16 on v6e/v7x.
    out = resblock_pallas(x, w1, b1, w2, b2, ws, bs, KS)
    out = jax.block_until_ready(out)

    ref = resblock_reference(x, w1, b1, w2, b2, ws, bs)
    assert out.shape == (N, Cout, H, W)
    assert jnp.allclose(out, ref, atol=1e-4, rtol=1e-4), \
        f"max abs err = {jnp.max(jnp.abs(out - ref))}"

    print("KERNEL_OK")
</pallas_src>

<mosaic_0001>
module attributes {stable_mosaic.version = 11 : i64} {
  func.func @kernel(%arg0: i32, %arg1: memref<1x16x16x4xf32, #tpu.memory_space<vmem>>, %arg2: memref<40x16xf32, #tpu.memory_space<vmem>>, %arg3: memref<1x16xf32, #tpu.memory_space<vmem>>, %arg4: memref<72x8xf32, #tpu.memory_space<vmem>>, %arg5: memref<1x8xf32, #tpu.memory_space<vmem>>, %arg6: memref<1x256x8xf32, #tpu.memory_space<vmem>>, %arg7: memref<1x18x18x4xf32, #tpu.memory_space<vmem>>, %arg8: memref<1x18x18x8xf32, #tpu.memory_space<vmem>>) attributes {dimension_semantics = [#tpu.dimension_semantics<parallel>], iteration_bounds = array<i64: 2>, scalar_prefetch = 0 : i64, scratch_operands = 2 : i64, tpu.core_type = #tpu.core_type<tc>, window_params = [{transform_indices = @transform_0, window_bounds = array<i64: 1, 16, 16, 4>}, {pipeline_mode = #tpu.pipeline_mode<synchronous>, transform_indices = @transform_1, window_bounds = array<i64: 40, 16>}, {pipeline_mode = #tpu.pipeline_mode<synchronous>, transform_indices = @transform_2, window_bounds = array<i64: 1, 16>}, {pipeline_mode = #tpu.pipeline_mode<synchronous>, transform_indices = @transform_3, window_bounds = array<i64: 72, 8>}, {pipeline_mode = #tpu.pipeline_mode<synchronous>, transform_indices = @transform_4, window_bounds = array<i64: 1, 8>}, {transform_indices = @transform_5, window_bounds = array<i64: 1, 256, 8>}]} {
    %c0 = arith.constant 0 : index
    %c0_0 = arith.constant 0 : index
    %c0_1 = arith.constant 0 : index
    %c0_2 = arith.constant 0 : index
    %0 = vector.load %arg1[%c0, %c0_0, %c0_1, %c0_2] : memref<1x16x16x4xf32, #tpu.memory_space<vmem>>, vector<1x16x16x4xf32>
    %cst = arith.constant 0.000000e+00 : f32
    %1 = vector.broadcast %cst : f32 to vector<1x16x16x4xf32>
    %2 = arith.maximumf %0, %1 : vector<1x16x16x4xf32>
    %cst_3 = arith.constant 0.000000e+00 : f32
    %3 = vector.broadcast %cst_3 : f32 to vector<1x18x18x4xf32>
    %c0_4 = arith.constant 0 : index
    %c0_5 = arith.constant 0 : index
    %c0_6 = arith.constant 0 : index
    %c0_7 = arith.constant 0 : index
    %4 = vector.load %arg7[%c0_4, %c0_5, %c0_6, %c0_7] : memref<1x18x18x4xf32, #tpu.memory_space<vmem>>, vector<1x18x18x4xf32>
    tpu.vector_store %arg7[%c0_4, %c0_5, %c0_6, %c0_7], %3 {strides = array<i32>} : memref<1x18x18x4xf32, #tpu.memory_space<vmem>>, vector<1x18x18x4xf32>,
    %c0_8 = arith.constant 0 : index
    %c1 = arith.constant 1 : index
    %c1_9 = arith.constant 1 : index
    %c0_10 = arith.constant 0 : index
    %5 = vector.load %arg7[%c0_8, %c1, %c1_9, %c0_10] : memref<1x18x18x4xf32, #tpu.memory_space<vmem>>, vector<1x16x16x4xf32>
    tpu.vector_store %arg7[%c0_8, %c1, %c1_9, %c0_10], %2 {strides = array<i32>} : memref<1x18x18x4xf32, #tpu.memory_space<vmem>>, vector<1x16x16x4xf32>,
    %c0_11 = arith.constant 0 : index
    %c0_12 = arith.constant 0 : index
    %c0_13 = arith.constant 0 : index
    %c0_14 = arith.constant 0 : index
    %6 = vector.load %arg7[%c0_11, %c0_12, %c0_13, %c0_14] : memref<1x18x18x4xf32, #tpu.memory_space<vmem>>, vector<1x16x16x4xf32>
    %c0_15 = arith.constant 0 : index
    %c0_16 = arith.constant 0 : index
    %c1_17 = arith.constant 1 : index
    %c0_18 = arith.constant 0 : index
    %7 = vector.load %arg7[%c0_15, %c0_16, %c1_17, %c0_18] : memref<1x18x18x4xf32, #tpu.memory_space<vmem>>, vector<1x16x16x4xf32>
    %c0_19 = arith.constant 0 : index
    %c0_20 = arith.constant 0 : index
    %c2 = arith.constant 2 : index
    %c0_21 = arith.constant 0 : index
    %8 = vector.load %arg7[%c0_19, %c0_20, %c2, %c0_21] : memref<1x18x18x4xf32, #tpu.memory_space<vmem>>, vector<1x16x16x4xf32>
    %c0_22 = arith.constant 0 : index
    %c1_23 = arith.constant 1 : index
    %c0_24 = arith.constant 0 : index
    %c0_25 = arith.constant 0 : index
    %9 = vector.load %arg7[%c0_22, %c1_23, %c0_24, %c0_25] : memref<1x18x18x4xf32, #tpu.memory_space<vmem>>, vector<1x16x16x4xf32>
    %c0_26 = arith.constant 0 : index
    %c1_27 = arith.constant 1 : index
    %c1_28 = arith.constant 1 : index
    %c0_29 = arith.constant 0 : index
    %10 = vector.load %arg7[%c0_26, %c1_27, %c1_28, %c0_29] : memref<1x18x18x4xf32, #tpu.memory_space<vmem>>, vector<1x16x16x4xf32>
    %c0_30 = arith.constant 0 : index
    %c1_31 = arith.constant 1 : index
    %c2_32 = arith.constant 2 : index
    %c0_33 = arith.constant 0 : index
    %11 = vector.load %arg7[%c0_30, %c1_31, %c2_32, %c0_33] : memref<1x18x18x4xf32, #tpu.memory_space<vmem>>, vector<1x16x16x4xf32>
    %c0_34 = arith.constant 0 : index
    %c2_35 = arith.constant 2 : index
    %c0_36 = arith.constant 0 : index
    %c0_37 = arith.constant 0 : index
    %12 = vector.load %arg7[%c0_34, %c2_35, %c0_36, %c0_37] : memref<1x18x18x4xf32, #tpu.memory_space<vmem>>, vector<1x16x16x4xf32>
    %c0_38 = arith.constant 0 : index
    %c2_39 = arith.constant 2 : index
    %c1_40 = arith.constant 1 : index
    %c0_41 = arith.constant 0 : index
    %13 = vector.load %arg7[%c0_38, %c2_39, %c1_40, %c0_41] : memref<1x18x18x4xf32, #tpu.memory_space<vmem>>, vector<1x16x16x4xf32>
    %c0_42 = arith.constant 0 : index
    %c2_43 = arith.constant 2 : index
    %c2_44 = arith.constant 2 : index
    %c0_45 = arith.constant 0 : index
    %14 = vector.load %arg7[%c0_42, %c2_43, %c2_44, %c0_45] : memref<1x18x18x4xf32, #tpu.memory_space<vmem>>, vector<1x16x16x4xf32>
    %15 = tpu.concatenate %6, %7, %8, %9, %10, %11, %12, %13, %14, %0 in 3 : vector<1x16x16x4xf32>, vector<1x16x16x4xf32>, vector<1x16x16x4xf32>, vector<1x16x16x4xf32>, vector<1x16x16x4xf32>, vector<1x16x16x4xf32>, vector<1x16x16x4xf32>, vector<1x16x16x4xf32>, vector<1x16x16x4xf32>, vector<1x16x16x4xf32> -> vector<1x16x16x40xf32>
    %16 = vector.shape_cast %15 : vector<1x16x16x40xf32> to vector<256x40xf32>
    %c0_46 = arith.constant 0 : index
    %c0_47 = arith.constant 0 : index
    %17 = vector.load %arg2[%c0_46, %c0_47] : memref<40x16xf32, #tpu.memory_space<vmem>>, vector<40x16xf32>
    %cst_48 = arith.constant dense<0.000000e+00> : vector<256x16xf32>
    %18 = tpu.matmul %16, %17, %cst_48 {dimension_numbers = #tpu.dot_dimension_numbers<[1], [0], [0], [1], [0, 0, 1, 1], [], []>} : vector<256x40xf32>, vector<40x16xf32>, vector<256x16xf32> -> vector<256x16xf32>
    %c0_49 = arith.constant 0 : index
    %c0_50 = arith.constant 0 : index
    %19 = vector.load %arg3[%c0_49, %c0_50] : memref<1x16xf32, #tpu.memory_space<vmem>>, vector<1x16xf32>
    %20 = vector.broadcast %19 : vector<1x16xf32> to vector<256x16xf32>
    %21 = arith.addf %18, %20 : vector<256x16xf32>
    %22 = vector.extract_strided_slice %21 {offsets = [0, 0], sizes = [256, 8], strides = [1, 1]} : vector<256x16xf32> to vector<256x8xf32>
    %23 = vector.extract_strided_slice %21 {offsets = [0, 8], sizes = [256, 8], strides = [1, 1]} : vector<256x16xf32> to vector<256x8xf32>
    %cst_51 = arith.constant 0.000000e+00 : f32
    %24 = vector.broadcast %cst_51 : f32 to vector<256x8xf32>
    %25 = arith.maximumf %22, %24 : vector<256x8xf32>
    %26 = vector.shape_cast %25 : vector<256x8xf32> to vector<1x16x16x8xf32>
    %cst_52 = arith.constant 0.000000e+00 : f32
    %27 = vector.broadcast %cst_52 : f32 to vector<1x18x18x8xf32>
    %c0_53 = arith.constant 0 : index
    %c0_54 = arith.constant 0 : index
    %c0_55 = arith.constant 0 : index
    %c0_56 = arith.constant 0 : index
    %28 = vector.load %arg8[%c0_53, %c0_54, %c0_55, %c0_56] : memref<1x18x18x8xf32, #tpu.memory_space<vmem>>, vector<1x18x18x8xf32>
    tpu.vector_store %arg8[%c0_53, %c0_54, %c0_55, %c0_56], %27 {strides = array<i32>} : memref<1x18x18x8xf32, #tpu.memory_space<vmem>>, vector<1x18x18x8xf32>,
    %c0_57 = arith.constant 0 : index
    %c1_58 = arith.constant 1 : index
    %c1_59 = arith.constant 1 : index
    %c0_60 = arith.constant 0 : index
    %29 = vector.load %arg8[%c0_57, %c1_58, %c1_59, %c0_60] : memref<1x18x18x8xf32, #tpu.memory_space<vmem>>, vector<1x16x16x8xf32>
    tpu.vector_store %arg8[%c0_57, %c1_58, %c1_59, %c0_60], %26 {strides = array<i32>} : memref<1x18x18x8xf32, #tpu.memory_space<vmem>>, vector<1x16x16x8xf32>,
    %c0_61 = arith.constant 0 : index
    %c0_62 = arith.constant 0 : index
    %c0_63 = arith.constant 0 : index
    %c0_64 = arith.constant 0 : index
    %30 = vector.load %arg8[%c0_61, %c0_62, %c0_63, %c0_64] : memref<1x18x18x8xf32, #tpu.memory_space<vmem>>, vector<1x16x16x8xf32>
    %c0_65 = arith.constant 0 : index
    %c0_66 = arith.constant 0 : index
    %c1_67 = arith.constant 1 : index
    %c0_68 = arith.constant 0 : index
    %31 = vector.load %arg8[%c0_65, %c0_66, %c1_67, %c0_68] : memref<1x18x18x8xf32, #tpu.memory_space<vmem>>, vector<1x16x16x8xf32>
    %c0_69 = arith.constant 0 : index
    %c0_70 = arith.constant 0 : index
    %c2_71 = arith.constant 2 : index
    %c0_72 = arith.constant 0 : index
    %32 = vector.load %arg8[%c0_69, %c0_70, %c2_71, %c0_72] : memref<1x18x18x8xf32, #tpu.memory_space<vmem>>, vector<1x16x16x8xf32>
    %c0_73 = arith.constant 0 : index
    %c1_74 = arith.constant 1 : index
    %c0_75 = arith.constant 0 : index
    %c0_76 = arith.constant 0 : index
    %33 = vector.load %arg8[%c0_73, %c1_74, %c0_75, %c0_76] : memref<1x18x18x8xf32, #tpu.memory_space<vmem>>, vector<1x16x16x8xf32>
    %c0_77 = arith.constant 0 : index
    %c1_78 = arith.constant 1 : index
    %c1_79 = arith.constant 1 : index
    %c0_80 = arith.constant 0 : index
    %34 = vector.load %arg8[%c0_77, %c1_78, %c1_79, %c0_80] : memref<1x18x18x8xf32, #tpu.memory_space<vmem>>, vector<1x16x16x8xf32>
    %c0_81 = arith.constant 0 : index
    %c1_82 = arith.constant 1 : index
    %c2_83 = arith.constant 2 : index
    %c0_84 = arith.constant 0 : index
    %35 = vector.load %arg8[%c0_81, %c1_82, %c2_83, %c0_84] : memref<1x18x18x8xf32, #tpu.memory_space<vmem>>, vector<1x16x16x8xf32>
    %c0_85 = arith.constant 0 : index
    %c2_86 = arith.constant 2 : index
    %c0_87 = arith.constant 0 : index
    %c0_88 = arith.constant 0 : index
    %36 = vector.load %arg8[%c0_85, %c2_86, %c0_87, %c0_88] : memref<1x18x18x8xf32, #tpu.memory_space<vmem>>, vector<1x16x16x8xf32>
    %c0_89 = arith.constant 0 : index
    %c2_90 = arith.constant 2 : index
    %c1_91 = arith.constant 1 : index
    %c0_92 = arith.constant 0 : index
    %37 = vector.load %arg8[%c0_89, %c2_90, %c1_91, %c0_92] : memref<1x18x18x8xf32, #tpu.memory_space<vmem>>, vector<1x16x16x8xf32>
    %c0_93 = arith.constant 0 : index
    %c2_94 = arith.constant 2 : index
    %c2_95 = arith.constant 2 : index
    %c0_96 = arith.constant 0 : index
    %38 = vector.load %arg8[%c0_93, %c2_94, %c2_95, %c0_96] : memref<1x18x18x8xf32, #tpu.memory_space<vmem>>, vector<1x16x16x8xf32>
    %39 = tpu.concatenate %30, %31, %32, %33, %34, %35, %36, %37, %38 in 3 : vector<1x16x16x8xf32>, vector<1x16x16x8xf32>, vector<1x16x16x8xf32>, vector<1x16x16x8xf32>, vector<1x16x16x8xf32>, vector<1x16x16x8xf32>, vector<1x16x16x8xf32>, vector<1x16x16x8xf32>, vector<1x16x16x8xf32> -> vector<1x16x16x72xf32>
    %40 = vector.shape_cast %39 : vector<1x16x16x72xf32> to vector<256x72xf32>
    %c0_97 = arith.constant 0 : index
    %c0_98 = arith.constant 0 : index
    %41 = vector.load %arg4[%c0_97, %c0_98] : memref<72x8xf32, #tpu.memory_space<vmem>>, vector<72x8xf32>
    %cst_99 = arith.constant dense<0.000000e+00> : vector<256x8xf32>
    %42 = tpu.matmul %40, %41, %cst_99 {dimension_numbers = #tpu.dot_dimension_numbers<[1], [0], [0], [1], [0, 0, 1, 1], [], []>} : vector<256x72xf32>, vector<72x8xf32>, vector<256x8xf32> -> vector<256x8xf32>
    %c0_100 = arith.constant 0 : index
    %c0_101 = arith.constant 0 : index
    %43 = vector.load %arg5[%c0_100, %c0_101] : memref<1x8xf32, #tpu.memory_space<vmem>>, vector<1x8xf32>
    %44 = vector.broadcast %43 : vector<1x8xf32> to vector<256x8xf32>
    %45 = arith.addf %42, %44 : vector<256x8xf32>
    %46 = arith.addf %45, %23 : vector<256x8xf32>
    %47 = vector.shape_cast %46 : vector<256x8xf32> to vector<1x256x8xf32>
    %c0_102 = arith.constant 0 : index
    %c0_103 = arith.constant 0 : index
    %c0_104 = arith.constant 0 : index
    %48 = vector.load %arg6[%c0_102, %c0_103, %c0_104] : memref<1x256x8xf32, #tpu.memory_space<vmem>>, vector<1x256x8xf32>
    tpu.vector_store %arg6[%c0_102, %c0_103, %c0_104], %47 {strides = array<i32>} : memref<1x256x8xf32, #tpu.memory_space<vmem>>, vector<1x256x8xf32>,
    return
  }
  func.func @transform_0(%arg0: i32) -> (i32, i32, i32, i32) {
    %c0_i32 = arith.constant 0 : i32
    %c0_i32_0 = arith.constant 0 : i32
    %c0_i32_1 = arith.constant 0 : i32
    %c0_i32_2 = arith.constant 0 : i32
    return %arg0, %c0_i32, %c0_i32_0, %c0_i32_1 : i32, i32, i32, i32
  }
  func.func @transform_1(%arg0: i32) -> (i32, i32) {
    %c0_i32 = arith.constant 0 : i32
    %c0_i32_0 = arith.constant 0 : i32
    %c0_i32_1 = arith.constant 0 : i32
    return %c0_i32, %c0_i32_0 : i32, i32
  }
  func.func @transform_2(%arg0: i32) -> (i32, i32) {
    %c0_i32 = arith.constant 0 : i32
    %c0_i32_0 = arith.constant 0 : i32
    %c0_i32_1 = arith.constant 0 : i32
    return %c0_i32, %c0_i32_0 : i32, i32
  }
  func.func @transform_3(%arg0: i32) -> (i32, i32) {
    %c0_i32 = arith.constant 0 : i32
    %c0_i32_0 = arith.constant 0 : i32
    %c0_i32_1 = arith.constant 0 : i32
    return %c0_i32, %c0_i32_0 : i32, i32
  }
  func.func @transform_4(%arg0: i32) -> (i32, i32) {
    %c0_i32 = arith.constant 0 : i32
    %c0_i32_0 = arith.constant 0 : i32
    %c0_i32_1 = arith.constant 0 : i32
    return %c0_i32, %c0_i32_0 : i32, i32
  }
  func.func @transform_5(%arg0: i32) -> (i32, i32, i32) {
    %c0_i32 = arith.constant 0 : i32
    %c0_i32_0 = arith.constant 0 : i32
    %c0_i32_1 = arith.constant 0 : i32
    return %arg0, %c0_i32, %c0_i32_0 : i32, i32, i32
  }
}

</mosaic_0001>

<llo_original>
// kernel: tpu_custom_call.1
$region0: #{tpu_custom_call.1}
  #allocation0 [shape = 'u32[]', space=smem, size = 0x4, offset = 0x4, fixed_abs, tag = 'smem constant byte address 0x4 - core index']
  #allocation1 [shape = 'u32[144,128]{1,0:T(1,128)}', space=vmem, size = 0x12000, scoped, tag = 'internal scratch']
  #allocation2 [shape = 'f32[1,18,18,4]{3,2,1,0:T(8,128)}', space=vmem, size = 0x36000, scoped, tag = 'scratch operand']
  #allocation3 [shape = 'f32[1,18,18,8]{3,2,1,0:T(8,128)}', space=vmem, size = 0x36000, scoped, tag = 'scratch operand']
  %s0 = inlined_call_operand.vmem [shape: f32[2,16,16,4], index: 0, kind: input, shape index: {}]
  %s1 = inlined_call_operand.vmem [shape: f32[40,16], index: 1, kind: input, shape index: {}]
  %s2 = inlined_call_operand.vmem [shape: f32[1,16], index: 2, kind: input, shape index: {}]
  %s3 = inlined_call_operand.vmem [shape: f32[72,8], index: 3, kind: input, shape index: {}]
  %s4 = inlined_call_operand.vmem [shape: f32[1,8], index: 4, kind: input, shape index: {}]
  %s5 = inlined_call_operand.vmem [shape: f32[2,256,8], index: 5, kind: output, shape index: {}]
  %s6 = sld [smem:[#allocation0]]
  $region53: #{tpu_custom_call.1} parent=0
    _
  %s8 = ssub.s32 1, %s6
  %s9 = scalar_select 0, %s8, %s6
  loop: start=0, step=1, limit=4
  $region2: #{tpu_custom_call.1} parent=0 // loop_pre_header
    _
  $region3: #{tpu_custom_call.1} parent=0 // loop_header
    %s11 = sphi 0, %s15
    %p12 = scmp.ge.s32.totalorder %s11, 4
    %s21 = sphi 0, %s23
    %s24 = sphi 0, %s21
    %s25 = sphi 0, %s24
    %s41 = sphi 0, %s25
    %s45 = sphi 0, %s45
    %s47 = sphi 0, %s45
    %s48 = sphi 0, %s47
    %s62 = sphi 0, %s48
    %s66 = sphi 0, %s66
    %s68 = sphi 0, %s66
    %s69 = sphi 0, %s68
    %s83 = sphi 0, %s69
    %s87 = sphi 0, %s87
    %s89 = sphi 0, %s87
    %s90 = sphi 0, %s89
    %s104 = sphi 0, %s90
    %s108 = sphi 0, %s108
    %s110 = sphi 0, %s108
    %s111 = sphi 0, %s110
    %s125 = sphi 0, %s111
    %s131 = sphi 0, %s133
    %s134 = sphi 0, %s131
    %s135 = sphi 0, %s134
    %s151 = sphi 0, %s135
  $region4: #{tpu_custom_call.1} parent=0 // loop_header_branch
    %14 = sbr.rel (%p12) target = $region8
  $region5: #{tpu_custom_call.1} parent=0 // loop_body
    %s16 = ssub.s32 %s11, 1
    %s17 = ssub.s32 %s11, 2
    %s18 = sadd.s32 %s11, 1
    %s19 = ssub.s32 %s11, %s18
    %p20 = scmp.eq.s32.totalorder %s19, 0
    %s22 = sadd.s32 %s21, 1
    %s23 = scalar_select %p20, %s21, %s22
    %p26 = pneg %p20
    %p27 = scmp.eq.s32.totalorder %s11, 1
    %p28 = por %p26, %p27
    %p29 = scmp.ne.s32.totalorder %s21, %s24
    %p30 = scmp.eq.s32.totalorder %s11, 0
    %p31 = por %p29, %p30
    %p32 = scmp.ne.s32.totalorder %s21, %s24
    %p33 = scmp.eq.s32.totalorder %s16, 1
    %p34 = por %p32, %p33
    %p35 = scmp.ne.s32.totalorder %s24, %s25
    %p36 = scmp.eq.s32.totalorder %s16, 0
    %p37 = por %p35, %p36
    %p38 = scmp.ne.s32.totalorder %s24, %s25
    %p39 = scmp.eq.s32.totalorder %s17, 1
    %p40 = por %p38, %p39
    %p42 = scmp.ne.s32.totalorder %s25, %s41
    %p43 = scmp.eq.s32.totalorder %s17, 0
    %p44 = por %p42, %p43
    %s46 = sadd.s32 %s45, 1
    %p49 = scmp.eq.s32.totalorder %s11, 1
    %p50 = scmp.ne.s32.totalorder %s45, %s47
    %p51 = scmp.eq.s32.totalorder %s11, 0
    %p52 = por %p50, %p51
    %p53 = scmp.ne.s32.totalorder %s45, %s47
    %p54 = scmp.eq.s32.totalorder %s16, 1
    %p55 = por %p53, %p54
    %p56 = scmp.ne.s32.totalorder %s47, %s48
    %p57 = scmp.eq.s32.totalorder %s16, 0
    %p58 = por %p56, %p57
    %p59 = scmp.ne.s32.totalorder %s47, %s48
    %p60 = scmp.eq.s32.totalorder %s17, 1
    %p61 = por %p59, %p60
    %p63 = scmp.ne.s32.totalorder %s48, %s62
    %p64 = scmp.eq.s32.totalorder %s17, 0
    %p65 = por %p63, %p64
    %s67 = sadd.s32 %s66, 1
    %p70 = scmp.eq.s32.totalorder %s11, 1
    %p71 = scmp.ne.s32.totalorder %s66, %s68
    %p72 = scmp.eq.s32.totalorder %s11, 0
    %p73 = por %p71, %p72
    %p74 = scmp.ne.s32.totalorder %s66, %s68
    %p75 = scmp.eq.s32.totalorder %s16, 1
    %p76 = por %p74, %p75
    %p77 = scmp.ne.s32.totalorder %s68, %s69
    %p78 = scmp.eq.s32.totalorder %s16, 0
    %p79 = por %p77, %p78
    %p80 = scmp.ne.s32.totalorder %s68, %s69
    %p81 = scmp.eq.s32.totalorder %s17, 1
    %p82 = por %p80, %p81
    %p84 = scmp.ne.s32.totalorder %s69, %s83
    %p85 = scmp.eq.s32.totalorder %s17, 0
    %p86 = por %p84, %p85
    %s88 = sadd.s32 %s87, 1
    %p91 = scmp.eq.s32.totalorder %s11, 1
    %p92 = scmp.ne.s32.totalorder %s87, %s89
    %p93 = scmp.eq.s32.totalorder %s11, 0
    %p94 = por %p92, %p93
    %p95 = scmp.ne.s32.totalorder %s87, %s89
    %p96 = scmp.eq.s32.totalorder %s16, 1
    %p97 = por %p95, %p96
    %p98 = scmp.ne.s32.totalorder %s89, %s90
    %p99 = scmp.eq.s32.totalorder %s16, 0
    %p100 = por %p98, %p99
    %p101 = scmp.ne.s32.totalorder %s89, %s90
    %p102 = scmp.eq.s32.totalorder %s17, 1
    %p103 = por %p101, %p102
    %p105 = scmp.ne.s32.totalorder %s90, %s104
    %p106 = scmp.eq.s32.totalorder %s17, 0
    %p107 = por %p105, %p106
    %s109 = sadd.s32 %s108, 1
    %p112 = scmp.eq.s32.totalorder %s11, 1
    %p113 = scmp.ne.s32.totalorder %s108, %s110
    %p114 = scmp.eq.s32.totalorder %s11, 0
    %p115 = por %p113, %p114
    %p116 = scmp.ne.s32.totalorder %s108, %s110
    %p117 = scmp.eq.s32.totalorder %s16, 1
    %p118 = por %p116, %p117
    %p119 = scmp.ne.s32.totalorder %s110, %s111
    %p120 = scmp.eq.s32.totalorder %s16, 0
    %p121 = por %p119, %p120
    %p122 = scmp.ne.s32.totalorder %s110, %s111
    %p123 = scmp.eq.s32.totalorder %s17, 1
    %p124 = por %p122, %p123
    %p126 = scmp.ne.s32.totalorder %s111, %s125
    %p127 = scmp.eq.s32.totalorder %s17, 0
    %p128 = por %p126, %p127
    %s129 = ssub.s32 %s11, %s18
    %p130 = scmp.eq.s32.totalorder %s129, 0
    %s132 = sadd.s32 %s131, 1
    %s133 = scalar_select %p130, %s131, %s132
    %p136 = pneg %p130
    %p137 = scmp.eq.s32.totalorder %s11, 1
    %p138 = por %p136, %p137
    %p139 = scmp.ne.s32.totalorder %s131, %s134
    %p140 = scmp.eq.s32.totalorder %s11, 0
    %p141 = por %p139, %p140
    %p142 = scmp.ne.s32.totalorder %s131, %s134
    %p143 = scmp.eq.s32.totalorder %s16, 1
    %p144 = por %p142, %p143
    %p145 = scmp.ne.s32.totalorder %s134, %s135
    %p146 = scmp.eq.s32.totalorder %s16, 0
    %p147 = por %p145, %p146
    %p148 = scmp.ne.s32.totalorder %s134, %s135
    %p149 = scmp.eq.s32.totalorder %s17, 1
    %p150 = por %p148, %p149
    %p152 = scmp.ne.s32.totalorder %s135, %s151
    %p153 = scmp.eq.s32.totalorder %s17, 0
    %p154 = por %p152, %p153
    %p155 = scmp.le.s32.totalorder 1, %s11
    %p156 = scmp.lt.s32.totalorder %s11, 3
    %p157 = pnand %p155, %p156
    %p158 = pneg %p157
    // Predicated region
    $region9: #{tpu_custom_call.1} parent=5 // pred_check
      _
    $region10: #{tpu_custom_call.1} parent=5 // pred_check_branch
      %160 = sbr.rel (%p157) target = $region12
    $region11: #{tpu_custom_call.1} parent=5 // pred_region
      %s161 = ssub.s32 %s11, 1
      // Predicated region
      $region13: #{tpu_custom_call.1} parent=11 // pred_check
        %p162 = pneg %p58
      $region14: #{tpu_custom_call.1} parent=11 // pred_check_branch
        %164 = sbr.rel (%p162) target = $region16
      $region15: #{tpu_custom_call.1} parent=11 // pred_region
        _
      $region16: #{tpu_custom_call.1} parent=11 // pred_fallthru
        _
      // Predicated region
      $region17: #{tpu_custom_call.1} parent=11 // pred_check
        %p165 = pneg %p79
      $region18: #{tpu_custom_call.1} parent=11 // pred_check_branch
        %167 = sbr.rel (%p165) target = $region20
      $region19: #{tpu_custom_call.1} parent=11 // pred_region
        _
      $region20: #{tpu_custom_call.1} parent=11 // pred_fallthru
        _
      // Predicated region
      $region21: #{tpu_custom_call.1} parent=11 // pred_check
        %p168 = pneg %p100
      $region22: #{tpu_custom_call.1} parent=11 // pred_check_branch
        %170 = sbr.rel (%p168) target = $region24
      $region23: #{tpu_custom_call.1} parent=11 // pred_region
        _
      $region24: #{tpu_custom_call.1} parent=11 // pred_fallthru
        _
      // Predicated region
      $region25: #{tpu_custom_call.1} parent=11 // pred_check
        %p171 = pneg %p121
      $region26: #{tpu_custom_call.1} parent=11 // pred_check_branch
        %173 = sbr.rel (%p171) target = $region28
      $region27: #{tpu_custom_call.1} parent=11 // pred_region
        _
      $region28: #{tpu_custom_call.1} parent=11 // pred_fallthru
        _
    $region12: #{tpu_custom_call.1} parent=5 // pred_fallthru
      _
    %p174 = scmp.lt.s32.totalorder %s11, 2
    // Predicated region
    $region29: #{tpu_custom_call.1} parent=5 // pred_check
      %p175 = pneg %p174
    $region30: #{tpu_custom_call.1} parent=5 // pred_check_branch
      %177 = sbr.rel (%p175) target = $region32
    $region31: #{tpu_custom_call.1} parent=5 // pred_region
      // Predicated region
      $region33: #{tpu_custom_call.1} parent=31 // pred_check
        %p178 = pneg %p31
      $region34: #{tpu_custom_call.1} parent=31 // pred_check_branch
        %180 = sbr.rel (%p178) target = $region36
      $region35: #{tpu_custom_call.1} parent=31 // pred_region
        %p181 = scmp.lt.s32.totalorder %s11, 1
        %s182 = scalar_select %p181, %s11, 1
        %s183 = smul.addr %s182, 32
        %s184 = smul.addr %s183, 8
        %s185 = scalar_lea.vmem %s0, %s184
      $region36: #{tpu_custom_call.1} parent=31 // pred_fallthru
        _
    $region32: #{tpu_custom_call.1} parent=5 // pred_fallthru
      _
    %p186 = scmp.le.s32.totalorder 1, %s11
    %p187 = scmp.lt.s32.totalorder %s11, 3
    %p188 = pnand %p186, %p187
    %p189 = pneg %p188
    // Predicated region
    $region37: #{tpu_custom_call.1} parent=5 // pred_check
      _
    $region38: #{tpu_custom_call.1} parent=5 // pred_check_branch
      %191 = sbr.rel (%p188) target = $region40
    $region39: #{tpu_custom_call.1} parent=5 // pred_region
      %s192 = ssub.s32 %s11, 1
      %p193 = scmp.lt.s32.totalorder %s16, 1
      %s194 = scalar_select %p193, %s16, 1
      %s195 = smul.addr %s194, 32
      %s196 = smul.addr %s195, 8
      %s197 = scalar_lea.vmem %s0, %s196
      %p198 = pneg %p37
      %p199 = pneg %p34
      %p200 = pneg %p58
      %p201 = pneg %p55
      %p202 = pneg %p79
      %p203 = pneg %p76
      %p204 = pneg %p100
      %p205 = pneg %p97
      %p206 = pneg %p121
      %p207 = pneg %p118
      %p208 = pneg %p147
      %p209 = pneg %p144
      %p210 = scmp.lt.s32.totalorder %s16, 1
      %s211 = scalar_select %p210, %s16, 1
      %s212 = smul.addr %s211, 32
      %s213 = smul.addr %s212, 8
      %s214 = scalar_lea.vmem %s5, %s213
      %p215 = scmp.lt.s32.totalorder %s16, 1
      %s216 = scalar_select %p215, %s16, 1
      %s217 = smul.addr %s216, 32
      %s218 = smul.addr %s217, 8
      %s219 = scalar_lea.vmem %s0, %s218
      %p220 = scmp.lt.s32.totalorder %s16, 1
      %s221 = scalar_select %p220, %s16, 1
      %s222 = smul.addr %s221, 32
      %s223 = smul.addr %s222, 8
      %s224 = scalar_lea.vmem %s5, %s223
      %v225 = vld [vmem:[%s219] sm:$0xff]
      %v226 = vld [vmem:[%s219 + $0x8] sm:$0xff]
      %v227 = vld [vmem:[%s219 + $0x10] sm:$0xff]
      %v228 = vld [vmem:[%s219 + $0x18] sm:$0xff]
      %v229 = vld [vmem:[%s219 + $0x20] sm:$0xff]
      %v230 = vld [vmem:[%s219 + $0x28] sm:$0xff]
      %v231 = vld [vmem:[%s219 + $0x30] sm:$0xff]
      %v232 = vld [vmem:[%s219 + $0x38] sm:$0xff]
      %v233 = vld [vmem:[%s219 + $0x40] sm:$0xff]
      %v234 = vld [vmem:[%s219 + $0x48] sm:$0xff]
      %v235 = vld [vmem:[%s219 + $0x50] sm:$0xff]
      %v236 = vld [vmem:[%s219 + $0x58] sm:$0xff]
      %v237 = vld [vmem:[%s219 + $0x60] sm:$0xff]
      %v238 = vld [vmem:[%s219 + $0x68] sm:$0xff]
      %v239 = vld [vmem:[%s219 + $0x70] sm:$0xff]
      %v240 = vld [vmem:[%s219 + $0x78] sm:$0xff]
      %v241 = vld [vmem:[%s219 + $0x80] sm:$0xff]
      %v242 = vld [vmem:[%s219 + $0x88] sm:$0xff]
      %v243 = vld [vmem:[%s219 + $0x90] sm:$0xff]
      %v244 = vld [vmem:[%s219 + $0x98] sm:$0xff]
      %v245 = vld [vmem:[%s219 + $0xa0] sm:$0xff]
      %v246 = vld [vmem:[%s219 + $0xa8] sm:$0xff]
      %v247 = vld [vmem:[%s219 + $0xb0] sm:$0xff]
      %v248 = vld [vmem:[%s219 + $0xb8] sm:$0xff]
      %v249 = vld [vmem:[%s219 + $0xc0] sm:$0xff]
      %v250 = vld [vmem:[%s219 + $0xc8] sm:$0xff]
      %v251 = vld [vmem:[%s219 + $0xd0] sm:$0xff]
      %v252 = vld [vmem:[%s219 + $0xd8] sm:$0xff]
      %v253 = vld [vmem:[%s219 + $0xe0] sm:$0xff]
      %v254 = vld [vmem:[%s219 + $0xe8] sm:$0xff]
      %v255 = vld [vmem:[%s219 + $0xf0] sm:$0xff]
      %v256 = vld [vmem:[%s219 + $0xf8] sm:$0xff]
      %v257 = vmax.f32 %v225, 0.0
      %v258 = vmax.f32 %v226, 0.0
      %v259 = vmax.f32 %v227, 0.0
      %v260 = vmax.f32 %v228, 0.0
      %v261 = vmax.f32 %v229, 0.0
      %v262 = vmax.f32 %v230, 0.0
      %v263 = vmax.f32 %v231, 0.0
      %v264 = vmax.f32 %v232, 0.0
      %v265 = vmax.f32 %v233, 0.0
      %v266 = vmax.f32 %v234, 0.0
      %v267 = vmax.f32 %v235, 0.0
      %v268 = vmax.f32 %v236, 0.0
      %v269 = vmax.f32 %v237, 0.0
      %v270 = vmax.f32 %v238, 0.0
      %v271 = vmax.f32 %v239, 0.0
      %v272 = vmax.f32 %v240, 0.0
      %v273 = vmax.f32 %v241, 0.0
      %v274 = vmax.f32 %v242, 0.0
      %v275 = vmax.f32 %v243, 0.0
      %v276 = vmax.f32 %v244, 0.0
      %v277 = vmax.f32 %v245, 0.0
      %v278 = vmax.f32 %v246, 0.0
      %v279 = vmax.f32 %v247, 0.0
      %v280 = vmax.f32 %v248, 0.0
      %v281 = vmax.f32 %v249, 0.0
      %v282 = vmax.f32 %v250, 0.0
      %v283 = vmax.f32 %v251, 0.0
      %v284 = vmax.f32 %v252, 0.0
      %v285 = vmax.f32 %v253, 0.0
      %v286 = vmax.f32 %v254, 0.0
      %v287 = vmax.f32 %v255, 0.0
      %v288 = vmax.f32 %v256, 0.0
      %vm289 = vcmask 31744
      %290 = vst.msk [vmem:[#allocation2] sm:$0xff] %vm289, 0.0
      %291 = vst.msk [vmem:[#allocation2 + $0x8] sm:$0xff] %vm289, 0.0
      %vm292 = vcmask 25600
      %293 = vst.msk [vmem:[#allocation2 + $0x10] sm:$0x3] %vm292, 0.0
      %294 = vst.msk [vmem:[#allocation2 + $0x18] sm:$0xff] %vm289, 0.0
      %295 = vst.msk [vmem:[#allocation2 + $0x20] sm:$0xff] %vm289, 0.0
      %296 = vst.msk [vmem:[#allocation2 + $0x28] sm:$0x3] %vm292, 0.0
      %297 = vst.msk [vmem:[#allocation2 + $0x30] sm:$0xff] %vm289, 0.0
      %298 = vst.msk [vmem:[#allocation2 + $0x38] sm:$0xff] %vm289, 0.0
      %299 = vst.msk [vmem:[#allocation2 + $0x40] sm:$0x3] %vm292, 0.0
      %300 = vst.msk [vmem:[#allocation2 + $0x48] sm:$0xff] %vm289, 0.0
      %301 = vst.msk [vmem:[#allocation2 + $0x50] sm:$0xff] %vm289, 0.0
      %302 = vst.msk [vmem:[#allocation2 + $0x58] sm:$0x3] %vm292, 0.0
      %303 = vst.msk [vmem:[#allocation2 + $0x60] sm:$0xff] %vm289, 0.0
      %304 = vst.msk [vmem:[#allocation2 + $0x68] sm:$0xff] %vm289, 0.0
      %305 = vst.msk [vmem:[#allocation2 + $0x70] sm:$0x3] %vm292, 0.0
      %306 = vst.msk [vmem:[#allocation2 + $0x78] sm:$0xff] %vm289, 0.0
      %307 = vst.msk [vmem:[#allocation2 + $0x80] sm:$0xff] %vm289, 0.0
      %308 = vst.msk [vmem:[#allocation2 + $0x88] sm:$0x3] %vm292, 0.0
      %309 = vst.msk [vmem:[#allocation2 + $0x90] sm:$0xff] %vm289, 0.0
      %310 = vst.msk [vmem:[#allocation2 + $0x98] sm:$0xff] %vm289, 0.0
      %311 = vst.msk [vmem:[#allocation2 + $0xa0] sm:$0x3] %vm292, 0.0
      %312 = vst.msk [vmem:[#allocation2 + $0xa8] sm:$0xff] %vm289, 0.0
      %313 = vst.msk [vmem:[#allocation2 + $0xb0] sm:$0xff] %vm289, 0.0
      %314 = vst.msk [vmem:[#allocation2 + $0xb8] sm:$0x3] %vm292, 0.0
      %315 = vst.msk [vmem:[#allocation2 + $0xc0] sm:$0xff] %vm289, 0.0
      %316 = vst.msk [vmem:[#allocation2 + $0xc8] sm:$0xff] %vm289, 0.0
      %317 = vst.msk [vmem:[#allocation2 + $0xd0] sm:$0x3] %vm292, 0.0
      %318 = vst.msk [vmem:[#allocation2 + $0xd8] sm:$0xff] %vm289, 0.0
      %319 = vst.msk [vmem:[#allocation2 + $0xe0] sm:$0xff] %vm289, 0.0
      %320 = vst.msk [vmem:[#allocation2 + $0xe8] sm:$0x3] %vm292, 0.0
      %321 = vst.msk [vmem:[#allocation2 + $0xf0] sm:$0xff] %vm289, 0.0
      %322 = vst.msk [vmem:[#allocation2 + $0xf8] sm:$0xff] %vm289, 0.0
      %323 = vst.msk [vmem:[#allocation2 + $0x100] sm:$0x3] %vm292, 0.0
      %324 = vst.msk [vmem:[#allocation2 + $0x108] sm:$0xff] %vm289, 0.0
      %325 = vst.msk [vmem:[#allocation2 + $0x110] sm:$0xff] %vm289, 0.0
      %326 = vst.msk [vmem:[#allocation2 + $0x118] sm:$0x3] %vm292, 0.0
      %327 = vst.msk [vmem:[#allocation2 + $0x120] sm:$0xff] %vm289, 0.0
      %328 = vst.msk [vmem:[#allocation2 + $0x128] sm:$0xff] %vm289, 0.0
      %329 = vst.msk [vmem:[#allocation2 + $0x130] sm:$0x3] %vm292, 0.0
      %330 = vst.msk [vmem:[#allocation2 + $0x138] sm:$0xff] %vm289, 0.0
      %331 = vst.msk [vmem:[#allocation2 + $0x140] sm:$0xff] %vm289, 0.0
      %332 = vst.msk [vmem:[#allocation2 + $0x148] sm:$0x3] %vm292, 0.0
      %333 = vst.msk [vmem:[#allocation2 + $0x150] sm:$0xff] %vm289, 0.0
      %334 = vst.msk [vmem:[#allocation2 + $0x158] sm:$0xff] %vm289, 0.0
      %335 = vst.msk [vmem:[#allocation2 + $0x160] sm:$0x3] %vm292, 0.0
      %336 = vst.msk [vmem:[#allocation2 + $0x168] sm:$0xff] %vm289, 0.0
      %337 = vst.msk [vmem:[#allocation2 + $0x170] sm:$0xff] %vm289, 0.0
      %338 = vst.msk [vmem:[#allocation2 + $0x178] sm:$0x3] %vm292, 0.0
      %339 = vst.msk [vmem:[#allocation2 + $0x180] sm:$0xff] %vm289, 0.0
      %340 = vst.msk [vmem:[#allocation2 + $0x188] sm:$0xff] %vm289, 0.0
      %341 = vst.msk [vmem:[#allocation2 + $0x190] sm:$0x3] %vm292, 0.0
      %342 = vst.msk [vmem:[#allocation2 + $0x198] sm:$0xff] %vm289, 0.0
      %343 = vst.msk [vmem:[#allocation2 + $0x1a0] sm:$0xff] %vm289, 0.0
      %344 = vst.msk [vmem:[#allocation2 + $0x1a8] sm:$0x3] %vm292, 0.0
      %s345 = scalar_lea.vmem [#allocation2], 24
      %346 = vst.msk [vmem:[%s345 + $0x1] sm:$0xff] %vm289, %v257
      %347 = vst.msk [vmem:[%s345 + $0x9] sm:$0xff] %vm289, %v258
      %348 = vst.msk [vmem:[%s345 + $0x19] sm:$0xff] %vm289, %v259
      %349 = vst.msk [vmem:[%s345 + $0x21] sm:$0xff] %vm289, %v260
      %350 = vst.msk [vmem:[%s345 + $0x31] sm:$0xff] %vm289, %v261
      %351 = vst.msk [vmem:[%s345 + $0x39] sm:$0xff] %vm289, %v262
      %352 = vst.msk [vmem:[%s345 + $0x49] sm:$0xff] %vm289, %v263
      %353 = vst.msk [vmem:[%s345 + $0x51] sm:$0xff] %vm289, %v264
      %354 = vst.msk [vmem:[%s345 + $0x61] sm:$0xff] %vm289, %v265
      %355 = vst.msk [vmem:[%s345 + $0x69] sm:$0xff] %vm289, %v266
      %356 = vst.msk [vmem:[%s345 + $0x79] sm:$0xff] %vm289, %v267
      %357 = vst.msk [vmem:[%s345 + $0x81] sm:$0xff] %vm289, %v268
      %358 = vst.msk [vmem:[%s345 + $0x91] sm:$0xff] %vm289, %v269
      %359 = vst.msk [vmem:[%s345 + $0x99] sm:$0xff] %vm289, %v270
      %360 = vst.msk [vmem:[%s345 + $0xa9] sm:$0xff] %vm289, %v271
      %361 = vst.msk [vmem:[%s345 + $0xb1] sm:$0xff] %vm289, %v272
      %362 = vst.msk [vmem:[%s345 + $0xc1] sm:$0xff] %vm289, %v273
      %363 = vst.msk [vmem:[%s345 + $0xc9] sm:$0xff] %vm289, %v274
      %364 = vst.msk [vmem:[%s345 + $0xd9] sm:$0xff] %vm289, %v275
      %365 = vst.msk [vmem:[%s345 + $0xe1] sm:$0xff] %vm289, %v276
      %366 = vst.msk [vmem:[%s345 + $0xf1] sm:$0xff] %vm289, %v277
      %367 = vst.msk [vmem:[%s345 + $0xf9] sm:$0xff] %vm289, %v278
      %368 = vst.msk [vmem:[%s345 + $0x109] sm:$0xff] %vm289, %v279
      %369 = vst.msk [vmem:[%s345 + $0x111] sm:$0xff] %vm289, %v280
      %370 = vst.msk [vmem:[%s345 + $0x121] sm:$0xff] %vm289, %v281
      %371 = vst.msk [vmem:[%s345 + $0x129] sm:$0xff] %vm289, %v282
      %372 = vst.msk [vmem:[%s345 + $0x139] sm:$0xff] %vm289, %v283
      %373 = vst.msk [vmem:[%s345 + $0x141] sm:$0xff] %vm289, %v284
      %374 = vst.msk [vmem:[%s345 + $0x151] sm:$0xff] %vm289, %v285
      %375 = vst.msk [vmem:[%s345 + $0x159] sm:$0xff] %vm289, %v286
      %376 = vst.msk [vmem:[%s345 + $0x169] sm:$0xff] %vm289, %v287
      %377 = vst.msk [vmem:[%s345 + $0x171] sm:$0xff] %vm289, %v288
      %v378 = vld [vmem:[#allocation2] sm:$0xff]
      %v379 = vld [vmem:[#allocation2 + $0x8] sm:$0xff]
      %v380 = vld [vmem:[#allocation2 + $0x18] sm:$0xff]
      %v381 = vld [vmem:[#allocation2 + $0x20] sm:$0xff]
      %v382 = vld [vmem:[#allocation2 + $0x30] sm:$0xff]
      %v383 = vld [vmem:[#allocation2 + $0x38] sm:$0xff]
      %v384 = vld [vmem:[#allocation2 + $0x48] sm:$0xff]
      %v385 = vld [vmem:[#allocation2 + $0x50] sm:$0xff]
      %v386 = vld [vmem:[#allocation2 + $0x60] sm:$0xff]
      %v387 = vld [vmem:[#allocation2 + $0x68] sm:$0xff]
      %v388 = vld [vmem:[#allocation2 + $0x78] sm:$0xff]
      %v389 = vld [vmem:[#allocation2 + $0x80] sm:$0xff]
      %v390 = vld [vmem:[#allocation2 + $0x90] sm:$0xff]
      %v391 = vld [vmem:[#allocation2 + $0x98] sm:$0xff]
      %v392 = vld [vmem:[#allocation2 + $0xa8] sm:$0xff]
      %v393 = vld [vmem:[#allocation2 + $0xb0] sm:$0xff]
      %v394 = vld [vmem:[#allocation2 + $0xc0] sm:$0xff]
      %v395 = vld [vmem:[#allocation2 + $0xc8] sm:$0xff]
      %v396 = vld [vmem:[#allocation2 + $0xd8] sm:$0xff]
      %v397 = vld [vmem:[#allocation2 + $0xe0] sm:$0xff]
      %v398 = vld [vmem:[#allocation2 + $0xf0] sm:$0xff]
      %v399 = vld [vmem:[#allocation2 + $0xf8] sm:$0xff]
      %v400 = vld [vmem:[#allocation2 + $0x108] sm:$0xff]
      %v401 = vld [vmem:[#allocation2 + $0x110] sm:$0xff]
      %v402 = vld [vmem:[#allocation2 + $0x120] sm:$0xff]
      %v403 = vld [vmem:[#allocation2 + $0x128] sm:$0xff]
      %v404 = vld [vmem:[#allocation2 + $0x138] sm:$0xff]
      %v405 = vld [vmem:[#allocation2 + $0x140] sm:$0xff]
      %v406 = vld [vmem:[#allocation2 + $0x150] sm:$0xff]
      %v407 = vld [vmem:[#allocation2 + $0x158] sm:$0xff]
      %v408 = vld [vmem:[#allocation2 + $0x168] sm:$0xff]
      %v409 = vld [vmem:[#allocation2 + $0x170] sm:$0xff]
      %v410 = vld [vmem:[#allocation2 + $0x1] sm:$0xff]
      %v411 = vld [vmem:[#allocation2 + $0x9] sm:$0xff]
      %v412 = vld [vmem:[#allocation2 + $0x19] sm:$0xff]
      %v413 = vld [vmem:[#allocation2 + $0x21] sm:$0xff]
      %v414 = vld [vmem:[#allocation2 + $0x31] sm:$0xff]
      %v415 = vld [vmem:[#allocation2 + $0x39] sm:$0xff]
      %v416 = vld [vmem:[#allocation2 + $0x49] sm:$0xff]
      %v417 = vld [vmem:[#allocation2 + $0x51] sm:$0xff]
      %v418 = vld [vmem:[#allocation2 + $0x61] sm:$0xff]
      %v419 = vld [vmem:[#allocation2 + $0x69] sm:$0xff]
      %v420 = vld [vmem:[#allocation2 + $0x79] sm:$0xff]
      %v421 = vld [vmem:[#allocation2 + $0x81] sm:$0xff]
      %v422 = vld [vmem:[#allocation2 + $0x91] sm:$0xff]
      %v423 = vld [vmem:[#allocation2 + $0x99] sm:$0xff]
      %v424 = vld [vmem:[#allocation2 + $0xa9] sm:$0xff]
      %v425 = vld [vmem:[#allocation2 + $0xb1] sm:$0xff]
      %v426 = vld [vmem:[#allocation2 + $0xc1] sm:$0xff]
      %v427 = vld [vmem:[#allocation2 + $0xc9] sm:$0xff]
      %v428 = vld [vmem:[#allocation2 + $0xd9] sm:$0xff]
      %v429 = vld [vmem:[#allocation2 + $0xe1] sm:$0xff]
      %v430 = vld [vmem:[#allocation2 + $0xf1] sm:$0xff]
      %v431 = vld [vmem:[#allocation2 + $0xf9] sm:$0xff]
      %v432 = vld [vmem:[#allocation2 + $0x109] sm:$0xff]
      %v433 = vld [vmem:[#allocation2 + $0x111] sm:$0xff]
      %v434 = vld [vmem:[#allocation2 + $0x121] sm:$0xff]
      %v435 = vld [vmem:[#allocation2 + $0x129] sm:$0xff]
      %v436 = vld [vmem:[#allocation2 + $0x139] sm:$0xff]
      %v437 = vld [vmem:[#allocation2 + $0x141] sm:$0xff]
      %v438 = vld [vmem:[#allocation2 + $0x151] sm:$0xff]
      %v439 = vld [vmem:[#allocation2 + $0x159] sm:$0xff]
      %v440 = vld [vmem:[#allocation2 + $0x169] sm:$0xff]
      %v441 = vld [vmem:[#allocation2 + $0x171] sm:$0xff]
      %v442 = vld [vmem:[#allocation2 + $0x2] sm:$0xff]
      %v443 = vld [vmem:[#allocation2 + $0xa] sm:$0xff]
      %v444 = vld [vmem:[#allocation2 + $0x1a] sm:$0xff]
      %v445 = vld [vmem:[#allocation2 + $0x22] sm:$0xff]
      %v446 = vld [vmem:[#allocation2 + $0x32] sm:$0xff]
      %v447 = vld [vmem:[#allocation2 + $0x3a] sm:$0xff]
      %v448 = vld [vmem:[#allocation2 + $0x4a] sm:$0xff]
      %v449 = vld [vmem:[#allocation2 + $0x52] sm:$0xff]
      %v450 = vld [vmem:[#allocation2 + $0x62] sm:$0xff]
      %v451 = vld [vmem:[#allocation2 + $0x6a] sm:$0xff]
      %v452 = vld [vmem:[#allocation2 + $0x7a] sm:$0xff]
      %v453 = vld [vmem:[#allocation2 + $0x82] sm:$0xff]
      %v454 = vld [vmem:[#allocation2 + $0x92] sm:$0xff]
      %v455 = vld [vmem:[#allocation2 + $0x9a] sm:$0xff]
      %v456 = vld [vmem:[#allocation2 + $0xaa] sm:$0xff]
      %v457 = vld [vmem:[#allocation2 + $0xb2] sm:$0xff]
      %v458 = vld [vmem:[#allocation2 + $0xc2] sm:$0xff]
      %v459 = vld [vmem:[#allocation2 + $0xca] sm:$0xff]
      %v460 = vld [vmem:[#allocation2 + $0xda] sm:$0xff]
      %v461 = vld [vmem:[#allocation2 + $0xe2] sm:$0xff]
      %v462 = vld [vmem:[#allocation2 + $0xf2] sm:$0xff]
      %v463 = vld [vmem:[#allocation2 + $0xfa] sm:$0xff]
      %v464 = vld [vmem:[#allocation2 + $0x10a] sm:$0xff]
      %v465 = vld [vmem:[#allocation2 + $0x112] sm:$0xff]
      %v466 = vld [vmem:[#allocation2 + $0x122] sm:$0xff]
      %v467 = vld [vmem:[#allocation2 + $0x12a] sm:$0xff]
      %v468 = vld [vmem:[#allocation2 + $0x13a] sm:$0xff]
      %v469 = vld [vmem:[#allocation2 + $0x142] sm:$0xff]
      %v470 = vld [vmem:[#allocation2 + $0x152] sm:$0xff]
      %v471 = vld [vmem:[#allocation2 + $0x15a] sm:$0xff]
      %v472 = vld [vmem:[#allocation2 + $0x16a] sm:$0xff]
      %v473 = vld [vmem:[#allocation2 + $0x172] sm:$0xff]
      %v474 = vld [vmem:[%s345] sm:$0xff]
      %v475 = vld [vmem:[%s345 + $0x8] sm:$0xff]
      %v476 = vld [vmem:[%s345 + $0x18] sm:$0xff]
      %v477 = vld [vmem:[%s345 + $0x20] sm:$0xff]
      %v478 = vld [vmem:[%s345 + $0x30] sm:$0xff]
      %v479 = vld [vmem:[%s345 + $0x38] sm:$0xff]
      %v480 = vld [vmem:[%s345 + $0x48] sm:$0xff]
      %v481 = vld [vmem:[%s345 + $0x50] sm:$0xff]
      %v482 = vld [vmem:[%s345 + $0x60] sm:$0xff]
      %v483 = vld [vmem:[%s345 + $0x68] sm:$0xff]
      %v484 = vld [vmem:[%s345 + $0x78] sm:$0xff]
      %v485 = vld [vmem:[%s345 + $0x80] sm:$0xff]
      %v486 = vld [vmem:[%s345 + $0x90] sm:$0xff]
      %v487 = vld [vmem:[%s345 + $0x98] sm:$0xff]
      %v488 = vld [vmem:[%s345 + $0xa8] sm:$0xff]
      %v489 = vld [vmem:[%s345 + $0xb0] sm:$0xff]
      %v490 = vld [vmem:[%s345 + $0xc0] sm:$0xff]
      %v491 = vld [vmem:[%s345 + $0xc8] sm:$0xff]
      %v492 = vld [vmem:[%s345 + $0xd8] sm:$0xff]
      %v493 = vld [vmem:[%s345 + $0xe0] sm:$0xff]
      %v494 = vld [vmem:[%s345 + $0xf0] sm:$0xff]
      %v495 = vld [vmem:[%s345 + $0xf8] sm:$0xff]
      %v496 = vld [vmem:[%s345 + $0x108] sm:$0xff]
      %v497 = vld [vmem:[%s345 + $0x110] sm:$0xff]
      %v498 = vld [vmem:[%s345 + $0x120] sm:$0xff]
      %v499 = vld [vmem:[%s345 + $0x128] sm:$0xff]
      %v500 = vld [vmem:[%s345 + $0x138] sm:$0xff]
      %v501 = vld [vmem:[%s345 + $0x140] sm:$0xff]
      %v502 = vld [vmem:[%s345 + $0x150] sm:$0xff]
      %v503 = vld [vmem:[%s345 + $0x158] sm:$0xff]
      %v504 = vld [vmem:[%s345 + $0x168] sm:$0xff]
      %v505 = vld [vmem:[%s345 + $0x170] sm:$0xff]
      %v506 = vld [vmem:[%s345 + $0x1] sm:$0xff]
      %v507 = vld [vmem:[%s345 + $0x9] sm:$0xff]
      %v508 = vld [vmem:[%s345 + $0x19] sm:$0xff]
      %v509 = vld [vmem:[%s345 + $0x21] sm:$0xff]
      %v510 = vld [vmem:[%s345 + $0x31] sm:$0xff]
      %v511 = vld [vmem:[%s345 + $0x39] sm:$0xff]
      %v512 = vld [vmem:[%s345 + $0x49] sm:$0xff]
      %v513 = vld [vmem:[%s345 + $0x51] sm:$0xff]
      %v514 = vld [vmem:[%s345 + $0x61] sm:$0xff]
      %v515 = vld [vmem:[%s345 + $0x69] sm:$0xff]
      %v516 = vld [vmem:[%s345 + $0x79] sm:$0xff]
      %v517 = vld [vmem:[%s345 + $0x81] sm:$0xff]
      %v518 = vld [vmem:[%s345 + $0x91] sm:$0xff]
      %v519 = vld [vmem:[%s345 + $0x99] sm:$0xff]
      %v520 = vld [vmem:[%s345 + $0xa9] sm:$0xff]
      %v521 = vld [vmem:[%s345 + $0xb1] sm:$0xff]
      %v522 = vld [vmem:[%s345 + $0xc1] sm:$0xff]
      %v523 = vld [vmem:[%s345 + $0xc9] sm:$0xff]
      %v524 = vld [vmem:[%s345 + $0xd9] sm:$0xff]
      %v525 = vld [vmem:[%s345 + $0xe1] sm:$0xff]
      %v526 = vld [vmem:[%s345 + $0xf1] sm:$0xff]
      %v527 = vld [vmem:[%s345 + $0xf9] sm:$0xff]
      %v528 = vld [vmem:[%s345 + $0x109] sm:$0xff]
      %v529 = vld [vmem:[%s345 + $0x111] sm:$0xff]
      %v530 = vld [vmem:[%s345 + $0x121] sm:$0xff]
      %v531 = vld [vmem:[%s345 + $0x129] sm:$0xff]
      %v532 = vld [vmem:[%s345 + $0x139] sm:$0xff]
      %v533 = vld [vmem:[%s345 + $0x141] sm:$0xff]
      %v534 = vld [vmem:[%s345 + $0x151] sm:$0xff]
      %v535 = vld [vmem:[%s345 + $0x159] sm:$0xff]
      %v536 = vld [vmem:[%s345 + $0x169] sm:$0xff]
      %v537 = vld [vmem:[%s345 + $0x171] sm:$0xff]
      %v538 = vld [vmem:[%s345 + $0x2] sm:$0xff]
      %v539 = vld [vmem:[%s345 + $0xa] sm:$0xff]
      %v540 = vld [vmem:[%s345 + $0x1a] sm:$0xff]
      %v541 = vld [vmem:[%s345 + $0x22] sm:$0xff]
      %v542 = vld [vmem:[%s345 + $0x32] sm:$0xff]
      %v543 = vld [vmem:[%s345 + $0x3a] sm:$0xff]
      %v544 = vld [vmem:[%s345 + $0x4a] sm:$0xff]
      %v545 = vld [vmem:[%s345 + $0x52] sm:$0xff]
      %v546 = vld [vmem:[%s345 + $0x62] sm:$0xff]
      %v547 = vld [vmem:[%s345 + $0x6a] sm:$0xff]
      %v548 = vld [vmem:[%s345 + $0x7a] sm:$0xff]
      %v549 = vld [vmem:[%s345 + $0x82] sm:$0xff]
      %v550 = vld [vmem:[%s345 + $0x92] sm:$0xff]
      %v551 = vld [vmem:[%s345 + $0x9a] sm:$0xff]
      %v552 = vld [vmem:[%s345 + $0xaa] sm:$0xff]
      %v553 = vld [vmem:[%s345 + $0xb2] sm:$0xff]
      %v554 = vld [vmem:[%s345 + $0xc2] sm:$0xff]
      %v555 = vld [vmem:[%s345 + $0xca] sm:$0xff]
      %v556 = vld [vmem:[%s345 + $0xda] sm:$0xff]
      %v557 = vld [vmem:[%s345 + $0xe2] sm:$0xff]
      %v558 = vld [vmem:[%s345 + $0xf2] sm:$0xff]
      %v559 = vld [vmem:[%s345 + $0xfa] sm:$0xff]
      %v560 = vld [vmem:[%s345 + $0x10a] sm:$0xff]
      %v561 = vld [vmem:[%s345 + $0x112] sm:$0xff]
      %v562 = vld [vmem:[%s345 + $0x122] sm:$0xff]
      %v563 = vld [vmem:[%s345 + $0x12a] sm:$0xff]
      %v564 = vld [vmem:[%s345 + $0x13a] sm:$0xff]
      %v565 = vld [vmem:[%s345 + $0x142] sm:$0xff]
      %v566 = vld [vmem:[%s345 + $0x152] sm:$0xff]
      %v567 = vld [vmem:[%s345 + $0x15a] sm:$0xff]
      %v568 = vld [vmem:[%s345 + $0x16a] sm:$0xff]
      %v569 = vld [vmem:[%s345 + $0x172] sm:$0xff]
      %s570 = scalar_lea.vmem [#allocation2], 48
      %v571 = vld [vmem:[%s570] sm:$0xff]
      %v572 = vld [vmem:[%s570 + $0x8] sm:$0xff]
      %v573 = vld [vmem:[%s570 + $0x18] sm:$0xff]
      %v574 = vld [vmem:[%s570 + $0x20] sm:$0xff]
      %v575 = vld [vmem:[%s570 + $0x30] sm:$0xff]
      %v576 = vld [vmem:[%s570 + $0x38] sm:$0xff]
      %v577 = vld [vmem:[%s570 + $0x48] sm:$0xff]
      %v578 = vld [vmem:[%s570 + $0x50] sm:$0xff]
      %v579 = vld [vmem:[%s570 + $0x60] sm:$0xff]
      %v580 = vld [vmem:[%s570 + $0x68] sm:$0xff]
      %v581 = vld [vmem:[%s570 + $0x78] sm:$0xff]
      %v582 = vld [vmem:[%s570 + $0x80] sm:$0xff]
      %v583 = vld [vmem:[%s570 + $0x90] sm:$0xff]
      %v584 = vld [vmem:[%s570 + $0x98] sm:$0xff]
      %v585 = vld [vmem:[%s570 + $0xa8] sm:$0xff]
      %v586 = vld [vmem:[%s570 + $0xb0] sm:$0xff]
      %v587 = vld [vmem:[%s570 + $0xc0] sm:$0xff]
      %v588 = vld [vmem:[%s570 + $0xc8] sm:$0xff]
      %v589 = vld [vmem:[%s570 + $0xd8] sm:$0xff]
      %v590 = vld [vmem:[%s570 + $0xe0] sm:$0xff]
      %v591 = vld [vmem:[%s570 + $0xf0] sm:$0xff]
      %v592 = vld [vmem:[%s570 + $0xf8] sm:$0xff]
      %v593 = vld [vmem:[%s570 + $0x108] sm:$0xff]
      %v594 = vld [vmem:[%s570 + $0x110] sm:$0xff]
      %v595 = vld [vmem:[%s570 + $0x120] sm:$0xff]
      %v596 = vld [vmem:[%s570 + $0x128] sm:$0xff]
      %v597 = vld [vmem:[%s570 + $0x138] sm:$0xff]
      %v598 = vld [vmem:[%s570 + $0x140] sm:$0xff]
      %v599 = vld [vmem:[%s570 + $0x150] sm:$0xff]
      %v600 = vld [vmem:[%s570 + $0x158] sm:$0xff]
      %v601 = vld [vmem:[%s570 + $0x168] sm:$0xff]
      %v602 = vld [vmem:[%s570 + $0x170] sm:$0xff]
      %v603 = vld [vmem:[%s570 + $0x1] sm:$0xff]
      %v604 = vld [vmem:[%s570 + $0x9] sm:$0xff]
      %v605 = vld [vmem:[%s570 + $0x19] sm:$0xff]
      %v606 = vld [vmem:[%s570 + $0x21] sm:$0xff]
      %v607 = vld [vmem:[%s570 + $0x31] sm:$0xff]
      %v608 = vld [vmem:[%s570 + $0x39] sm:$0xff]
      %v609 = vld [vmem:[%s570 + $0x49] sm:$0xff]
      %v610 = vld [vmem:[%s570 + $0x51] sm:$0xff]
      %v611 = vld [vmem:[%s570 + $0x61] sm:$0xff]
      %v612 = vld [vmem:[%s570 + $0x69] sm:$0xff]
      %v613 = vld [vmem:[%s570 + $0x79] sm:$0xff]
      %v614 = vld [vmem:[%s570 + $0x81] sm:$0xff]
      %v615 = vld [vmem:[%s570 + $0x91] sm:$0xff]
      %v616 = vld [vmem:[%s570 + $0x99] sm:$0xff]
      %v617 = vld [vmem:[%s570 + $0xa9] sm:$0xff]
      %v618 = vld [vmem:[%s570 + $0xb1] sm:$0xff]
      %v619 = vld [vmem:[%s570 + $0xc1] sm:$0xff]
      %v620 = vld [vmem:[%s570 + $0xc9] sm:$0xff]
      %v621 = vld [vmem:[%s570 + $0xd9] sm:$0xff]
      %v622 = vld [vmem:[%s570 + $0xe1] sm:$0xff]
      %v623 = vld [vmem:[%s570 + $0xf1] sm:$0xff]
      %v624 = vld [vmem:[%s570 + $0xf9] sm:$0xff]
      %v625 = vld [vmem:[%s570 + $0x109] sm:$0xff]
      %v626 = vld [vmem:[%s570 + $0x111] sm:$0xff]
      %v627 = vld [vmem:[%s570 + $0x121] sm:$0xff]
      %v628 = vld [vmem:[%s570 + $0x129] sm:$0xff]
      %v629 = vld [vmem:[%s570 + $0x139] sm:$0xff]
      %v630 = vld [vmem:[%s570 + $0x141] sm:$0xff]
      %v631 = vld [vmem:[%s570 + $0x151] sm:$0xff]
      %v632 = vld [vmem:[%s570 + $0x159] sm:$0xff]
      %v633 = vld [vmem:[%s570 + $0x169] sm:$0xff]
      %v634 = vld [vmem:[%s570 + $0x171] sm:$0xff]
      %v635 = vld [vmem:[%s570 + $0x2] sm:$0xff]
      %v636 = vld [vmem:[%s570 + $0xa] sm:$0xff]
      %v637 = vld [vmem:[%s570 + $0x1a] sm:$0xff]
      %v638 = vld [vmem:[%s570 + $0x22] sm:$0xff]
      %v639 = vld [vmem:[%s570 + $0x32] sm:$0xff]
      %v640 = vld [vmem:[%s570 + $0x3a] sm:$0xff]
      %v641 = vld [vmem:[%s570 + $0x4a] sm:$0xff]
      %v642 = vld [vmem:[%s570 + $0x52] sm:$0xff]
      %v643 = vld [vmem:[%s570 + $0x62] sm:$0xff]
      %v644 = vld [vmem:[%s570 + $0x6a] sm:$0xff]
      %v645 = vld [vmem:[%s570 + $0x7a] sm:$0xff]
      %v646 = vld [vmem:[%s570 + $0x82] sm:$0xff]
      %v647 = vld [vmem:[%s570 + $0x92] sm:$0xff]
      %v648 = vld [vmem:[%s570 + $0x9a] sm:$0xff]
      %v649 = vld [vmem:[%s570 + $0xaa] sm:$0xff]
      %v650 = vld [vmem:[%s570 + $0xb2] sm:$0xff]
      %v651 = vld [vmem:[%s570 + $0xc2] sm:$0xff]
      %v652 = vld [vmem:[%s570 + $0xca] sm:$0xff]
      %v653 = vld [vmem:[%s570 + $0xda] sm:$0xff]
      %v654 = vld [vmem:[%s570 + $0xe2] sm:$0xff]
      %v655 = vld [vmem:[%s570 + $0xf2] sm:$0xff]
      %v656 = vld [vmem:[%s570 + $0xfa] sm:$0xff]
      %v657 = vld [vmem:[%s570 + $0x10a] sm:$0xff]
      %v658 = vld [vmem:[%s570 + $0x112] sm:$0xff]
      %v659 = vld [vmem:[%s570 + $0x122] sm:$0xff]
      %v660 = vld [vmem:[%s570 + $0x12a] sm:$0xff]
      %v661 = vld [vmem:[%s570 + $0x13a] sm:$0xff]
      %v662 = vld [vmem:[%s570 + $0x142] sm:$0xff]
      %v663 = vld [vmem:[%s570 + $0x152] sm:$0xff]
      %v664 = vld [vmem:[%s570 + $0x15a] sm:$0xff]
      %v665 = vld [vmem:[%s570 + $0x16a] sm:$0xff]
      %v666 = vld [vmem:[%s570 + $0x172] sm:$0xff]
      %699 = vrot.lane.b32.xlu0 %v410, 4
      %v700 = vpop.permute.xlu0 %699
      %701 = vrot.lane.b32.xlu0 %v411, 4
      %v702 = vpop.permute.xlu0 %701
      %703 = vrot.lane.b32.xlu0 %v412, 4
      %v704 = vpop.permute.xlu0 %703
      %705 = vrot.lane.b32.xlu0 %v413, 4
      %v706 = vpop.permute.xlu0 %705
      %707 = vrot.lane.b32.xlu0 %v414, 4
      %v708 = vpop.permute.xlu0 %707
      %709 = vrot.lane.b32.xlu0 %v415, 4
      %v710 = vpop.permute.xlu0 %709
      %711 = vrot.lane.b32.xlu0 %v416, 4
      %v712 = vpop.permute.xlu0 %711
      %713 = vrot.lane.b32.xlu0 %v417, 4
      %v714 = vpop.permute.xlu0 %713
      %715 = vrot.lane.b32.xlu0 %v418, 4
      %v716 = vpop.permute.xlu0 %715
      %717 = vrot.lane.b32.xlu0 %v419, 4
      %v718 = vpop.permute.xlu0 %717
      %719 = vrot.lane.b32.xlu0 %v420, 4
      %v720 = vpop.permute.xlu0 %719
      %721 = vrot.lane.b32.xlu0 %v421, 4
      %v722 = vpop.permute.xlu0 %721
      %723 = vrot.lane.b32.xlu0 %v422, 4
      %v724 = vpop.permute.xlu0 %723
      %725 = vrot.lane.b32.xlu0 %v423, 4
      %v726 = vpop.permute.xlu0 %725
      %727 = vrot.lane.b32.xlu0 %v424, 4
      %v728 = vpop.permute.xlu0 %727
      %729 = vrot.lane.b32.xlu0 %v425, 4
      %v730 = vpop.permute.xlu0 %729
      %731 = vrot.lane.b32.xlu0 %v426, 4
      %v732 = vpop.permute.xlu0 %731
      %733 = vrot.lane.b32.xlu0 %v427, 4
      %v734 = vpop.permute.xlu0 %733
      %735 = vrot.lane.b32.xlu0 %v428, 4
      %v736 = vpop.permute.xlu0 %735
      %737 = vrot.lane.b32.xlu0 %v429, 4
      %v738 = vpop.permute.xlu0 %737
      %739 = vrot.lane.b32.xlu0 %v430, 4
      %v740 = vpop.permute.xlu0 %739
      %741 = vrot.lane.b32.xlu0 %v431, 4
      %v742 = vpop.permute.xlu0 %741
      %743 = vrot.lane.b32.xlu0 %v432, 4
      %v744 = vpop.permute.xlu0 %743
      %745 = vrot.lane.b32.xlu0 %v433, 4
      %v746 = vpop.permute.xlu0 %745
      %747 = vrot.lane.b32.xlu0 %v434, 4
      %v748 = vpop.permute.xlu0 %747
      %749 = vrot.lane.b32.xlu0 %v435, 4
      %v750 = vpop.permute.xlu0 %749
      %751 = vrot.lane.b32.xlu0 %v436, 4
      %v752 = vpop.permute.xlu0 %751
      %753 = vrot.lane.b32.xlu0 %v437, 4
      %v754 = vpop.permute.xlu0 %753
      %755 = vrot.lane.b32.xlu0 %v438, 4
      %v756 = vpop.permute.xlu0 %755
      %757 = vrot.lane.b32.xlu0 %v439, 4
      %v758 = vpop.permute.xlu0 %757
      %759 = vrot.lane.b32.xlu0 %v440, 4
      %v760 = vpop.permute.xlu0 %759
      %761 = vrot.lane.b32.xlu0 %v441, 4
      %v762 = vpop.permute.xlu0 %761
      %827 = vrot.lane.b32.xlu0 %v442, 8
      %v828 = vpop.permute.xlu0 %827
      %829 = vrot.lane.b32.xlu0 %v443, 8
      %v830 = vpop.permute.xlu0 %829
      %831 = vrot.lane.b32.xlu0 %v444, 8
      %v832 = vpop.permute.xlu0 %831
      %833 = vrot.lane.b32.xlu0 %v445, 8
      %v834 = vpop.permute.xlu0 %833
      %835 = vrot.lane.b32.xlu0 %v446, 8
      %v836 = vpop.permute.xlu0 %835
      %837 = vrot.lane.b32.xlu0 %v447, 8
      %v838 = vpop.permute.xlu0 %837
      %839 = vrot.lane.b32.xlu0 %v448, 8
      %v840 = vpop.permute.xlu0 %839
      %841 = vrot.lane.b32.xlu0 %v449, 8
      %v842 = vpop.permute.xlu0 %841
      %843 = vrot.lane.b32.xlu0 %v450, 8
      %v844 = vpop.permute.xlu0 %843
      %845 = vrot.lane.b32.xlu0 %v451, 8
      %v846 = vpop.permute.xlu0 %845
      %847 = vrot.lane.b32.xlu0 %v452, 8
      %v848 = vpop.permute.xlu0 %847
      %849 = vrot.lane.b32.xlu0 %v453, 8
      %v850 = vpop.permute.xlu0 %849
      %851 = vrot.lane.b32.xlu0 %v454, 8
      %v852 = vpop.permute.xlu0 %851
      %853 = vrot.lane.b32.xlu0 %v455, 8
      %v854 = vpop.permute.xlu0 %853
      %855 = vrot.lane.b32.xlu0 %v456, 8
      %v856 = vpop.permute.xlu0 %855
      %857 = vrot.lane.b32.xlu0 %v457, 8
      %v858 = vpop.permute.xlu0 %857
      %859 = vrot.lane.b32.xlu0 %v458, 8
      %v860 = vpop.permute.xlu0 %859
      %861 = vrot.lane.b32.xlu0 %v459, 8
      %v862 = vpop.permute.xlu0 %861
      %863 = vrot.lane.b32.xlu0 %v460, 8
      %v864 = vpop.permute.xlu0 %863
      %865 = vrot.lane.b32.xlu0 %v461, 8
      %v866 = vpop.permute.xlu0 %865
      %867 = vrot.lane.b32.xlu0 %v462, 8
      %v868 = vpop.permute.xlu0 %867
      %869 = vrot.lane.b32.xlu0 %v463, 8
      %v870 = vpop.permute.xlu0 %869
      %871 = vrot.lane.b32.xlu0 %v464, 8
      %v872 = vpop.permute.xlu0 %871
      %873 = vrot.lane.b32.xlu0 %v465, 8
      %v874 = vpop.permute.xlu0 %873
      %875 = vrot.lane.b32.xlu0 %v466, 8
      %v876 = vpop.permute.xlu0 %875
      %877 = vrot.lane.b32.xlu0 %v467, 8
      %v878 = vpop.permute.xlu0 %877
      %879 = vrot.lane.b32.xlu0 %v468, 8
      %v880 = vpop.permute.xlu0 %879
      %881 = vrot.lane.b32.xlu0 %v469, 8
      %v882 = vpop.permute.xlu0 %881
      %883 = vrot.lane.b32.xlu0 %v470, 8
      %v884 = vpop.permute.xlu0 %883
      %885 = vrot.lane.b32.xlu0 %v471, 8
      %v886 = vpop.permute.xlu0 %885
      %887 = vrot.lane.b32.xlu0 %v472, 8
      %v888 = vpop.permute.xlu0 %887
      %889 = vrot.lane.b32.xlu0 %v473, 8
      %v890 = vpop.permute.xlu0 %889
      %955 = vrot.lane.b32.xlu0 %v474, 12
      %v956 = vpop.permute.xlu0 %955
      %957 = vrot.lane.b32.xlu0 %v475, 12
      %v958 = vpop.permute.xlu0 %957
      %959 = vrot.lane.b32.xlu0 %v476, 12
      %v960 = vpop.permute.xlu0 %959
      %961 = vrot.lane.b32.xlu0 %v477, 12
      %v962 = vpop.permute.xlu0 %961
      %963 = vrot.lane.b32.xlu0 %v478, 12
      %v964 = vpop.permute.xlu0 %963
      %965 = vrot.lane.b32.xlu0 %v479, 12
      %v966 = vpop.permute.xlu0 %965
      %967 = vrot.lane.b32.xlu0 %v480, 12
      %v968 = vpop.permute.xlu0 %967
      %969 = vrot.lane.b32.xlu0 %v481, 12
      %v970 = vpop.permute.xlu0 %969
      %971 = vrot.lane.b32.xlu0 %v482, 12
      %v972 = vpop.permute.xlu0 %971
      %973 = vrot.lane.b32.xlu0 %v483, 12
      %v974 = vpop.permute.xlu0 %973
      %975 = vrot.lane.b32.xlu0 %v484, 12
      %v976 = vpop.permute.xlu0 %975
      %977 = vrot.lane.b32.xlu0 %v485, 12
      %v978 = vpop.permute.xlu0 %977
      %979 = vrot.lane.b32.xlu0 %v486, 12
      %v980 = vpop.permute.xlu0 %979
      %981 = vrot.lane.b32.xlu0 %v487, 12
      %v982 = vpop.permute.xlu0 %981
      %983 = vrot.lane.b32.xlu0 %v488, 12
      %v984 = vpop.permute.xlu0 %983
      %985 = vrot.lane.b32.xlu0 %v489, 12
      %v986 = vpop.permute.xlu0 %985
      %987 = vrot.lane.b32.xlu0 %v490, 12
      %v988 = vpop.permute.xlu0 %987
      %989 = vrot.lane.b32.xlu0 %v491, 12
      %v990 = vpop.permute.xlu0 %989
      %991 = vrot.lane.b32.xlu0 %v492, 12
      %v992 = vpop.permute.xlu0 %991
      %993 = vrot.lane.b32.xlu0 %v493, 12
      %v994 = vpop.permute.xlu0 %993
      %995 = vrot.lane.b32.xlu0 %v494, 12
      %v996 = vpop.permute.xlu0 %995
      %997 = vrot.lane.b32.xlu0 %v495, 12
      %v998 = vpop.permute.xlu0 %997
      %999 = vrot.lane.b32.xlu0 %v496, 12
      %v1000 = vpop.permute.xlu0 %999
      %1001 = vrot.lane.b32.xlu0 %v497, 12
      %v1002 = vpop.permute.xlu0 %1001
      %1003 = vrot.lane.b32.xlu0 %v498, 12
      %v1004 = vpop.permute.xlu0 %1003
      %1005 = vrot.lane.b32.xlu0 %v499, 12
      %v1006 = vpop.permute.xlu0 %1005
      %1007 = vrot.lane.b32.xlu0 %v500, 12
      %v1008 = vpop.permute.xlu0 %1007
      %1009 = vrot.lane.b32.xlu0 %v501, 12
      %v1010 = vpop.permute.xlu0 %1009
      %1011 = vrot.lane.b32.xlu0 %v502, 12
      %v1012 = vpop.permute.xlu0 %1011
      %1013 = vrot.lane.b32.xlu0 %v503, 12
      %v1014 = vpop.permute.xlu0 %1013
      %1015 = vrot.lane.b32.xlu0 %v504, 12
      %v1016 = vpop.permute.xlu0 %1015
      %1017 = vrot.lane.b32.xlu0 %v505, 12
      %v1018 = vpop.permute.xlu0 %1017
      %1083 = vrot.lane.b32.xlu0 %v506, 16
      %v1084 = vpop.permute.xlu0 %1083
      %1085 = vrot.lane.b32.xlu0 %v507, 16
      %v1086 = vpop.permute.xlu0 %1085
      %1087 = vrot.lane.b32.xlu0 %v508, 16
      %v1088 = vpop.permute.xlu0 %1087
      %1089 = vrot.lane.b32.xlu0 %v509, 16
      %v1090 = vpop.permute.xlu0 %1089
      %1091 = vrot.lane.b32.xlu0 %v510, 16
      %v1092 = vpop.permute.xlu0 %1091
      %1093 = vrot.lane.b32.xlu0 %v511, 16
      %v1094 = vpop.permute.xlu0 %1093
      %1095 = vrot.lane.b32.xlu0 %v512, 16
      %v1096 = vpop.permute.xlu0 %1095
      %1097 = vrot.lane.b32.xlu0 %v513, 16
      %v1098 = vpop.permute.xlu0 %1097
      %1099 = vrot.lane.b32.xlu0 %v514, 16
      %v1100 = vpop.permute.xlu0 %1099
      %1101 = vrot.lane.b32.xlu0 %v515, 16
      %v1102 = vpop.permute.xlu0 %1101
      %1103 = vrot.lane.b32.xlu0 %v516, 16
      %v1104 = vpop.permute.xlu0 %1103
      %1105 = vrot.lane.b32.xlu0 %v517, 16
      %v1106 = vpop.permute.xlu0 %1105
      %1107 = vrot.lane.b32.xlu0 %v518, 16
      %v1108 = vpop.permute.xlu0 %1107
      %1109 = vrot.lane.b32.xlu0 %v519, 16
      %v1110 = vpop.permute.xlu0 %1109
      %1111 = vrot.lane.b32.xlu0 %v520, 16
      %v1112 = vpop.permute.xlu0 %1111
      %1113 = vrot.lane.b32.xlu0 %v521, 16
      %v1114 = vpop.permute.xlu0 %1113
      %1115 = vrot.lane.b32.xlu0 %v522, 16
      %v1116 = vpop.permute.xlu0 %1115
      %1117 = vrot.lane.b32.xlu0 %v523, 16
      %v1118 = vpop.permute.xlu0 %1117
      %1119 = vrot.lane.b32.xlu0 %v524, 16
      %v1120 = vpop.permute.xlu0 %1119
      %1121 = vrot.lane.b32.xlu0 %v525, 16
      %v1122 = vpop.permute.xlu0 %1121
      %1123 = vrot.lane.b32.xlu0 %v526, 16
      %v1124 = vpop.permute.xlu0 %1123
      %1125 = vrot.lane.b32.xlu0 %v527, 16
      %v1126 = vpop.permute.xlu0 %1125
      %1127 = vrot.lane.b32.xlu0 %v528, 16
      %v1128 = vpop.permute.xlu0 %1127
      %1129 = vrot.lane.b32.xlu0 %v529, 16
      %v1130 = vpop.permute.xlu0 %1129
      %1131 = vrot.lane.b32.xlu0 %v530, 16
      %v1132 = vpop.permute.xlu0 %1131
      %1133 = vrot.lane.b32.xlu0 %v531, 16
      %v1134 = vpop.permute.xlu0 %1133
      %1135 = vrot.lane.b32.xlu0 %v532, 16
      %v1136 = vpop.permute.xlu0 %1135
      %1137 = vrot.lane.b32.xlu0 %v533, 16
      %v1138 = vpop.permute.xlu0 %1137
      %1139 = vrot.lane.b32.xlu0 %v534, 16
      %v1140 = vpop.permute.xlu0 %1139
      %1141 = vrot.lane.b32.xlu0 %v535, 16
      %v1142 = vpop.permute.xlu0 %1141
      %1143 = vrot.lane.b32.xlu0 %v536, 16
      %v1144 = vpop.permute.xlu0 %1143
      %1145 = vrot.lane.b32.xlu0 %v537, 16
      %v1146 = vpop.permute.xlu0 %1145
      %1211 = vrot.lane.b32.xlu0 %v538, 20
      %v1212 = vpop.permute.xlu0 %1211
      %1213 = vrot.lane.b32.xlu0 %v539, 20
      %v1214 = vpop.permute.xlu0 %1213
      %1215 = vrot.lane.b32.xlu0 %v540, 20
      %v1216 = vpop.permute.xlu0 %1215
      %1217 = vrot.lane.b32.xlu0 %v541, 20
      %v1218 = vpop.permute.xlu0 %1217
      %1219 = vrot.lane.b32.xlu0 %v542, 20
      %v1220 = vpop.permute.xlu0 %1219
      %1221 = vrot.lane.b32.xlu0 %v543, 20
      %v1222 = vpop.permute.xlu0 %1221
      %1223 = vrot.lane.b32.xlu0 %v544, 20
      %v1224 = vpop.permute.xlu0 %1223
      %1225 = vrot.lane.b32.xlu0 %v545, 20
      %v1226 = vpop.permute.xlu0 %1225
      %1227 = vrot.lane.b32.xlu0 %v546, 20
      %v1228 = vpop.permute.xlu0 %1227
      %1229 = vrot.lane.b32.xlu0 %v547, 20
      %v1230 = vpop.permute.xlu0 %1229
      %1231 = vrot.lane.b32.xlu0 %v548, 20
      %v1232 = vpop.permute.xlu0 %1231
      %1233 = vrot.lane.b32.xlu0 %v549, 20
      %v1234 = vpop.permute.xlu0 %1233
      %1235 = vrot.lane.b32.xlu0 %v550, 20
      %v1236 = vpop.permute.xlu0 %1235
      %1237 = vrot.lane.b32.xlu0 %v551, 20
      %v1238 = vpop.permute.xlu0 %1237
      %1239 = vrot.lane.b32.xlu0 %v552, 20
      %v1240 = vpop.permute.xlu0 %1239
      %1241 = vrot.lane.b32.xlu0 %v553, 20
      %v1242 = vpop.permute.xlu0 %1241
      %1243 = vrot.lane.b32.xlu0 %v554, 20
      %v1244 = vpop.permute.xlu0 %1243
      %1245 = vrot.lane.b32.xlu0 %v555, 20
      %v1246 = vpop.permute.xlu0 %1245
      %1247 = vrot.lane.b32.xlu0 %v556, 20
      %v1248 = vpop.permute.xlu0 %1247
      %1249 = vrot.lane.b32.xlu0 %v557, 20
      %v1250 = vpop.permute.xlu0 %1249
      %1251 = vrot.lane.b32.xlu0 %v558, 20
      %v1252 = vpop.permute.xlu0 %1251
      %1253 = vrot.lane.b32.xlu0 %v559, 20
      %v1254 = vpop.permute.xlu0 %1253
      %1255 = vrot.lane.b32.xlu0 %v560, 20
      %v1256 = vpop.permute.xlu0 %1255
      %1257 = vrot.lane.b32.xlu0 %v561, 20
      %v1258 = vpop.permute.xlu0 %1257
      %1259 = vrot.lane.b32.xlu0 %v562, 20
      %v1260 = vpop.permute.xlu0 %1259
      %1261 = vrot.lane.b32.xlu0 %v563, 20
      %v1262 = vpop.permute.xlu0 %1261
      %1263 = vrot.lane.b32.xlu0 %v564, 20
      %v1264 = vpop.permute.xlu0 %1263
      %1265 = vrot.lane.b32.xlu0 %v565, 20
      %v1266 = vpop.permute.xlu0 %1265
      %1267 = vrot.lane.b32.xlu0 %v566, 20
      %v1268 = vpop.permute.xlu0 %1267
      %1269 = vrot.lane.b32.xlu0 %v567, 20
      %v1270 = vpop.permute.xlu0 %1269
      %1271 = vrot.lane.b32.xlu0 %v568, 20
      %v1272 = vpop.permute.xlu0 %1271
      %1273 = vrot.lane.b32.xlu0 %v569, 20
      %v1274 = vpop.permute.xlu0 %1273
      %1339 = vrot.lane.b32.xlu0 %v571, 24
      %v1340 = vpop.permute.xlu0 %1339
      %1341 = vrot.lane.b32.xlu0 %v572, 24
      %v1342 = vpop.permute.xlu0 %1341
      %1343 = vrot.lane.b32.xlu0 %v573, 24
      %v1344 = vpop.permute.xlu0 %1343
      %1345 = vrot.lane.b32.xlu0 %v574, 24
      %v1346 = vpop.permute.xlu0 %1345
      %1347 = vrot.lane.b32.xlu0 %v575, 24
      %v1348 = vpop.permute.xlu0 %1347
      %1349 = vrot.lane.b32.xlu0 %v576, 24
      %v1350 = vpop.permute.xlu0 %1349
      %1351 = vrot.lane.b32.xlu0 %v577, 24
      %v1352 = vpop.permute.xlu0 %1351
      %1353 = vrot.lane.b32.xlu0 %v578, 24
      %v1354 = vpop.permute.xlu0 %1353
      %1355 = vrot.lane.b32.xlu0 %v579, 24
      %v1356 = vpop.permute.xlu0 %1355
      %1357 = vrot.lane.b32.xlu0 %v580, 24
      %v1358 = vpop.permute.xlu0 %1357
      %1359 = vrot.lane.b32.xlu0 %v581, 24
      %v1360 = vpop.permute.xlu0 %1359
      %1361 = vrot.lane.b32.xlu0 %v582, 24
      %v1362 = vpop.permute.xlu0 %1361
      %1363 = vrot.lane.b32.xlu0 %v583, 24
      %v1364 = vpop.permute.xlu0 %1363
      %1365 = vrot.lane.b32.xlu0 %v584, 24
      %v1366 = vpop.permute.xlu0 %1365
      %1367 = vrot.lane.b32.xlu0 %v585, 24
      %v1368 = vpop.permute.xlu0 %1367
      %1369 = vrot.lane.b32.xlu0 %v586, 24
      %v1370 = vpop.permute.xlu0 %1369
      %1371 = vrot.lane.b32.xlu0 %v587, 24
      %v1372 = vpop.permute.xlu0 %1371
      %1373 = vrot.lane.b32.xlu0 %v588, 24
      %v1374 = vpop.permute.xlu0 %1373
      %1375 = vrot.lane.b32.xlu0 %v589, 24
      %v1376 = vpop.permute.xlu0 %1375
      %1377 = vrot.lane.b32.xlu0 %v590, 24
      %v1378 = vpop.permute.xlu0 %1377
      %1379 = vrot.lane.b32.xlu0 %v591, 24
      %v1380 = vpop.permute.xlu0 %1379
      %1381 = vrot.lane.b32.xlu0 %v592, 24
      %v1382 = vpop.permute.xlu0 %1381
      %1383 = vrot.lane.b32.xlu0 %v593, 24
      %v1384 = vpop.permute.xlu0 %1383
      %1385 = vrot.lane.b32.xlu0 %v594, 24
      %v1386 = vpop.permute.xlu0 %1385
      %1387 = vrot.lane.b32.xlu0 %v595, 24
      %v1388 = vpop.permute.xlu0 %1387
      %1389 = vrot.lane.b32.xlu0 %v596, 24
      %v1390 = vpop.permute.xlu0 %1389
      %1391 = vrot.lane.b32.xlu0 %v597, 24
      %v1392 = vpop.permute.xlu0 %1391
      %1393 = vrot.lane.b32.xlu0 %v598, 24
      %v1394 = vpop.permute.xlu0 %1393
      %1395 = vrot.lane.b32.xlu0 %v599, 24
      %v1396 = vpop.permute.xlu0 %1395
      %1397 = vrot.lane.b32.xlu0 %v600, 24
      %v1398 = vpop.permute.xlu0 %1397
      %1399 = vrot.lane.b32.xlu0 %v601, 24
      %v1400 = vpop.permute.xlu0 %1399
      %1401 = vrot.lane.b32.xlu0 %v602, 24
      %v1402 = vpop.permute.xlu0 %1401
      %1467 = vrot.lane.b32.xlu0 %v603, 28
      %v1468 = vpop.permute.xlu0 %1467
      %1469 = vrot.lane.b32.xlu0 %v604, 28
      %v1470 = vpop.permute.xlu0 %1469
      %1471 = vrot.lane.b32.xlu0 %v605, 28
      %v1472 = vpop.permute.xlu0 %1471
      %1473 = vrot.lane.b32.xlu0 %v606, 28
      %v1474 = vpop.permute.xlu0 %1473
      %1475 = vrot.lane.b32.xlu0 %v607, 28
      %v1476 = vpop.permute.xlu0 %1475
      %1477 = vrot.lane.b32.xlu0 %v608, 28
      %v1478 = vpop.permute.xlu0 %1477
      %1479 = vrot.lane.b32.xlu0 %v609, 28
      %v1480 = vpop.permute.xlu0 %1479
      %1481 = vrot.lane.b32.xlu0 %v610, 28
      %v1482 = vpop.permute.xlu0 %1481
      %1483 = vrot.lane.b32.xlu0 %v611, 28
      %v1484 = vpop.permute.xlu0 %1483
      %1485 = vrot.lane.b32.xlu0 %v612, 28
      %v1486 = vpop.permute.xlu0 %1485
      %1487 = vrot.lane.b32.xlu0 %v613, 28
      %v1488 = vpop.permute.xlu0 %1487
      %1489 = vrot.lane.b32.xlu0 %v614, 28
      %v1490 = vpop.permute.xlu0 %1489
      %1491 = vrot.lane.b32.xlu0 %v615, 28
      %v1492 = vpop.permute.xlu0 %1491
      %1493 = vrot.lane.b32.xlu0 %v616, 28
      %v1494 = vpop.permute.xlu0 %1493
      %1495 = vrot.lane.b32.xlu0 %v617, 28
      %v1496 = vpop.permute.xlu0 %1495
      %1497 = vrot.lane.b32.xlu0 %v618, 28
      %v1498 = vpop.permute.xlu0 %1497
      %1499 = vrot.lane.b32.xlu0 %v619, 28
      %v1500 = vpop.permute.xlu0 %1499
      %1501 = vrot.lane.b32.xlu0 %v620, 28
      %v1502 = vpop.permute.xlu0 %1501
      %1503 = vrot.lane.b32.xlu0 %v621, 28
      %v1504 = vpop.permute.xlu0 %1503
      %1505 = vrot.lane.b32.xlu0 %v622, 28
      %v1506 = vpop.permute.xlu0 %1505
      %1507 = vrot.lane.b32.xlu0 %v623, 28
      %v1508 = vpop.permute.xlu0 %1507
      %1509 = vrot.lane.b32.xlu0 %v624, 28
      %v1510 = vpop.permute.xlu0 %1509
      %1511 = vrot.lane.b32.xlu0 %v625, 28
      %v1512 = vpop.permute.xlu0 %1511
      %1513 = vrot.lane.b32.xlu0 %v626, 28
      %v1514 = vpop.permute.xlu0 %1513
      %1515 = vrot.lane.b32.xlu0 %v627, 28
      %v1516 = vpop.permute.xlu0 %1515
      %1517 = vrot.lane.b32.xlu0 %v628, 28
      %v1518 = vpop.permute.xlu0 %1517
      %1519 = vrot.lane.b32.xlu0 %v629, 28
      %v1520 = vpop.permute.xlu0 %1519
      %1521 = vrot.lane.b32.xlu0 %v630, 28
      %v1522 = vpop.permute.xlu0 %1521
      %1523 = vrot.lane.b32.xlu0 %v631, 28
      %v1524 = vpop.permute.xlu0 %1523
      %1525 = vrot.lane.b32.xlu0 %v632, 28
      %v1526 = vpop.permute.xlu0 %1525
      %1527 = vrot.lane.b32.xlu0 %v633, 28
      %v1528 = vpop.permute.xlu0 %1527
      %1529 = vrot.lane.b32.xlu0 %v634, 28
      %v1530 = vpop.permute.xlu0 %1529
      %1595 = vrot.lane.b32.xlu0 %v635, 32
      %v1596 = vpop.permute.xlu0 %1595
      %1597 = vrot.lane.b32.xlu0 %v636, 32
      %v1598 = vpop.permute.xlu0 %1597
      %1599 = vrot.lane.b32.xlu0 %v637, 32
      %v1600 = vpop.permute.xlu0 %1599
      %1601 = vrot.lane.b32.xlu0 %v638, 32
      %v1602 = vpop.permute.xlu0 %1601
      %1603 = vrot.lane.b32.xlu0 %v639, 32
      %v1604 = vpop.permute.xlu0 %1603
      %1605 = vrot.lane.b32.xlu0 %v640, 32
      %v1606 = vpop.permute.xlu0 %1605
      %1607 = vrot.lane.b32.xlu0 %v641, 32
      %v1608 = vpop.permute.xlu0 %1607
      %1609 = vrot.lane.b32.xlu0 %v642, 32
      %v1610 = vpop.permute.xlu0 %1609
      %1611 = vrot.lane.b32.xlu0 %v643, 32
      %v1612 = vpop.permute.xlu0 %1611
      %1613 = vrot.lane.b32.xlu0 %v644, 32
      %v1614 = vpop.permute.xlu0 %1613
      %1615 = vrot.lane.b32.xlu0 %v645, 32
      %v1616 = vpop.permute.xlu0 %1615
      %1617 = vrot.lane.b32.xlu0 %v646, 32
      %v1618 = vpop.permute.xlu0 %1617
      %1619 = vrot.lane.b32.xlu0 %v647, 32
      %v1620 = vpop.permute.xlu0 %1619
      %1621 = vrot.lane.b32.xlu0 %v648, 32
      %v1622 = vpop.permute.xlu0 %1621
      %1623 = vrot.lane.b32.xlu0 %v649, 32
      %v1624 = vpop.permute.xlu0 %1623
      %1625 = vrot.lane.b32.xlu0 %v650, 32
      %v1626 = vpop.permute.xlu0 %1625
      %1627 = vrot.lane.b32.xlu0 %v651, 32
      %v1628 = vpop.permute.xlu0 %1627
      %1629 = vrot.lane.b32.xlu0 %v652, 32
      %v1630 = vpop.permute.xlu0 %1629
      %1631 = vrot.lane.b32.xlu0 %v653, 32
      %v1632 = vpop.permute.xlu0 %1631
      %1633 = vrot.lane.b32.xlu0 %v654, 32
      %v1634 = vpop.permute.xlu0 %1633
      %1635 = vrot.lane.b32.xlu0 %v655, 32
      %v1636 = vpop.permute.xlu0 %1635
      %1637 = vrot.lane.b32.xlu0 %v656, 32
      %v1638 = vpop.permute.xlu0 %1637
      %1639 = vrot.lane.b32.xlu0 %v657, 32
      %v1640 = vpop.permute.xlu0 %1639
      %1641 = vrot.lane.b32.xlu0 %v658, 32
      %v1642 = vpop.permute.xlu0 %1641
      %1643 = vrot.lane.b32.xlu0 %v659, 32
      %v1644 = vpop.permute.xlu0 %1643
      %1645 = vrot.lane.b32.xlu0 %v660, 32
      %v1646 = vpop.permute.xlu0 %1645
      %1647 = vrot.lane.b32.xlu0 %v661, 32
      %v1648 = vpop.permute.xlu0 %1647
      %1649 = vrot.lane.b32.xlu0 %v662, 32
      %v1650 = vpop.permute.xlu0 %1649
      %1651 = vrot.lane.b32.xlu0 %v663, 32
      %v1652 = vpop.permute.xlu0 %1651
      %1653 = vrot.lane.b32.xlu0 %v664, 32
      %v1654 = vpop.permute.xlu0 %1653
      %1655 = vrot.lane.b32.xlu0 %v665, 32
      %v1656 = vpop.permute.xlu0 %1655
      %1657 = vrot.lane.b32.xlu0 %v666, 32
      %v1658 = vpop.permute.xlu0 %1657
      %1723 = vrot.lane.b32.xlu0 %v225, 36
      %v1724 = vpop.permute.xlu0 %1723
      %1725 = vrot.lane.b32.xlu0 %v226, 36
      %v1726 = vpop.permute.xlu0 %1725
      %1727 = vrot.lane.b32.xlu0 %v227, 36
      %v1728 = vpop.permute.xlu0 %1727
      %1729 = vrot.lane.b32.xlu0 %v228, 36
      %v1730 = vpop.permute.xlu0 %1729
      %1731 = vrot.lane.b32.xlu0 %v229, 36
      %v1732 = vpop.permute.xlu0 %1731
      %1733 = vrot.lane.b32.xlu0 %v230, 36
      %v1734 = vpop.permute.xlu0 %1733
      %1735 = vrot.lane.b32.xlu0 %v231, 36
      %v1736 = vpop.permute.xlu0 %1735
      %1737 = vrot.lane.b32.xlu0 %v232, 36
      %v1738 = vpop.permute.xlu0 %1737
      %1739 = vrot.lane.b32.xlu0 %v233, 36
      %v1740 = vpop.permute.xlu0 %1739
      %1741 = vrot.lane.b32.xlu0 %v234, 36
      %v1742 = vpop.permute.xlu0 %1741
      %1743 = vrot.lane.b32.xlu0 %v235, 36
      %v1744 = vpop.permute.xlu0 %1743
      %1745 = vrot.lane.b32.xlu0 %v236, 36
      %v1746 = vpop.permute.xlu0 %1745
      %1747 = vrot.lane.b32.xlu0 %v237, 36
      %v1748 = vpop.permute.xlu0 %1747
      %1749 = vrot.lane.b32.xlu0 %v238, 36
      %v1750 = vpop.permute.xlu0 %1749
      %1751 = vrot.lane.b32.xlu0 %v239, 36
      %v1752 = vpop.permute.xlu0 %1751
      %1753 = vrot.lane.b32.xlu0 %v240, 36
      %v1754 = vpop.permute.xlu0 %1753
      %1755 = vrot.lane.b32.xlu0 %v241, 36
      %v1756 = vpop.permute.xlu0 %1755
      %1757 = vrot.lane.b32.xlu0 %v242, 36
      %v1758 = vpop.permute.xlu0 %1757
      %1759 = vrot.lane.b32.xlu0 %v243, 36
      %v1760 = vpop.permute.xlu0 %1759
      %1761 = vrot.lane.b32.xlu0 %v244, 36
      %v1762 = vpop.permute.xlu0 %1761
      %1763 = vrot.lane.b32.xlu0 %v245, 36
      %v1764 = vpop.permute.xlu0 %1763
      %1765 = vrot.lane.b32.xlu0 %v246, 36
      %v1766 = vpop.permute.xlu0 %1765
      %1767 = vrot.lane.b32.xlu0 %v247, 36
      %v1768 = vpop.permute.xlu0 %1767
      %1769 = vrot.lane.b32.xlu0 %v248, 36
      %v1770 = vpop.permute.xlu0 %1769
      %1771 = vrot.lane.b32.xlu0 %v249, 36
      %v1772 = vpop.permute.xlu0 %1771
      %1773 = vrot.lane.b32.xlu0 %v250, 36
      %v1774 = vpop.permute.xlu0 %1773
      %1775 = vrot.lane.b32.xlu0 %v251, 36
      %v1776 = vpop.permute.xlu0 %1775
      %1777 = vrot.lane.b32.xlu0 %v252, 36
      %v1778 = vpop.permute.xlu0 %1777
      %1779 = vrot.lane.b32.xlu0 %v253, 36
      %v1780 = vpop.permute.xlu0 %1779
      %1781 = vrot.lane.b32.xlu0 %v254, 36
      %v1782 = vpop.permute.xlu0 %1781
      %1783 = vrot.lane.b32.xlu0 %v255, 36
      %v1784 = vpop.permute.xlu0 %1783
      %1785 = vrot.lane.b32.xlu0 %v256, 36
      %v1786 = vpop.permute.xlu0 %1785
      %v1819 = vsel %vm289, %v378, %v700
      %v1820 = vsel %vm289, %v379, %v702
      %v1821 = vsel %vm289, %v380, %v704
      %v1822 = vsel %vm289, %v381, %v706
      %v1823 = vsel %vm289, %v382, %v708
      %v1824 = vsel %vm289, %v383, %v710
      %v1825 = vsel %vm289, %v384, %v712
      %v1826 = vsel %vm289, %v385, %v714
      %v1827 = vsel %vm289, %v386, %v716
      %v1828 = vsel %vm289, %v387, %v718
      %v1829 = vsel %vm289, %v388, %v720
      %v1830 = vsel %vm289, %v389, %v722
      %v1831 = vsel %vm289, %v390, %v724
      %v1832 = vsel %vm289, %v391, %v726
      %v1833 = vsel %vm289, %v392, %v728
      %v1834 = vsel %vm289, %v393, %v730
      %v1835 = vsel %vm289, %v394, %v732
      %v1836 = vsel %vm289, %v395, %v734
      %v1837 = vsel %vm289, %v396, %v736
      %v1838 = vsel %vm289, %v397, %v738
      %v1839 = vsel %vm289, %v398, %v740
      %v1840 = vsel %vm289, %v399, %v742
      %v1841 = vsel %vm289, %v400, %v744
      %v1842 = vsel %vm289, %v401, %v746
      %v1843 = vsel %vm289, %v402, %v748
      %v1844 = vsel %vm289, %v403, %v750
      %v1845 = vsel %vm289, %v404, %v752
      %v1846 = vsel %vm289, %v405, %v754
      %v1847 = vsel %vm289, %v406, %v756
      %v1848 = vsel %vm289, %v407, %v758
      %v1849 = vsel %vm289, %v408, %v760
      %v1850 = vsel %vm289, %v409, %v762
      %vm1851 = vcmask 64512
      %v1852 = vsel %vm1851, %v1819, %v828
      %v1853 = vsel %vm1851, %v1820, %v830
      %v1854 = vsel %vm1851, %v1821, %v832
      %v1855 = vsel %vm1851, %v1822, %v834
      %v1856 = vsel %vm1851, %v1823, %v836
      %v1857 = vsel %vm1851, %v1824, %v838
      %v1858 = vsel %vm1851, %v1825, %v840
      %v1859 = vsel %vm1851, %v1826, %v842
      %v1860 = vsel %vm1851, %v1827, %v844
      %v1861 = vsel %vm1851, %v1828, %v846
      %v1862 = vsel %vm1851, %v1829, %v848
      %v1863 = vsel %vm1851, %v1830, %v850
      %v1864 = vsel %vm1851, %v1831, %v852
      %v1865 = vsel %vm1851, %v1832, %v854
      %v1866 = vsel %vm1851, %v1833, %v856
      %v1867 = vsel %vm1851, %v1834, %v858
      %v1868 = vsel %vm1851, %v1835, %v860
      %v1869 = vsel %vm1851, %v1836, %v862
      %v1870 = vsel %vm1851, %v1837, %v864
      %v1871 = vsel %vm1851, %v1838, %v866
      %v1872 = vsel %vm1851, %v1839, %v868
      %v1873 = vsel %vm1851, %v1840, %v870
      %v1874 = vsel %vm1851, %v1841, %v872
      %v1875 = vsel %vm1851, %v1842, %v874
      %v1876 = vsel %vm1851, %v1843, %v876
      %v1877 = vsel %vm1851, %v1844, %v878
      %v1878 = vsel %vm1851, %v1845, %v880
      %v1879 = vsel %vm1851, %v1846, %v882
      %v1880 = vsel %vm1851, %v1847, %v884
      %v1881 = vsel %vm1851, %v1848, %v886
      %v1882 = vsel %vm1851, %v1849, %v888
      %v1883 = vsel %vm1851, %v1850, %v890
      %vm1884 = vcmask 97280
      %v1885 = vsel %vm1884, %v1852, %v956
      %v1886 = vsel %vm1884, %v1853, %v958
      %v1887 = vsel %vm1884, %v1854, %v960
      %v1888 = vsel %vm1884, %v1855, %v962
      %v1889 = vsel %vm1884, %v1856, %v964
      %v1890 = vsel %vm1884, %v1857, %v966
      %v1891 = vsel %vm1884, %v1858, %v968
      %v1892 = vsel %vm1884, %v1859, %v970
      %v1893 = vsel %vm1884, %v1860, %v972
      %v1894 = vsel %vm1884, %v1861, %v974
      %v1895 = vsel %vm1884, %v1862, %v976
      %v1896 = vsel %vm1884, %v1863, %v978
      %v1897 = vsel %vm1884, %v1864, %v980
      %v1898 = vsel %vm1884, %v1865, %v982
      %v1899 = vsel %vm1884, %v1866, %v984
      %v1900 = vsel %vm1884, %v1867, %v986
      %v1901 = vsel %vm1884, %v1868, %v988
      %v1902 = vsel %vm1884, %v1869, %v990
      %v1903 = vsel %vm1884, %v1870, %v992
      %v1904 = vsel %vm1884, %v1871, %v994
      %v1905 = vsel %vm1884, %v1872, %v996
      %v1906 = vsel %vm1884, %v1873, %v998
      %v1907 = vsel %vm1884, %v1874, %v1000
      %v1908 = vsel %vm1884, %v1875, %v1002
      %v1909 = vsel %vm1884, %v1876, %v1004
      %v1910 = vsel %vm1884, %v1877, %v1006
      %v1911 = vsel %vm1884, %v1878, %v1008
      %v1912 = vsel %vm1884, %v1879, %v1010
      %v1913 = vsel %vm1884, %v1880, %v1012
      %v1914 = vsel %vm1884, %v1881, %v1014
      %v1915 = vsel %vm1884, %v1882, %v1016
      %v1916 = vsel %vm1884, %v1883, %v1018
      %vm1917 = vcmask 130048
      %v1918 = vsel %vm1917, %v1885, %v1084
      %v1919 = vsel %vm1917, %v1886, %v1086
      %v1920 = vsel %vm1917, %v1887, %v1088
      %v1921 = vsel %vm1917, %v1888, %v1090
      %v1922 = vsel %vm1917, %v1889, %v1092
      %v1923 = vsel %vm1917, %v1890, %v1094
      %v1924 = vsel %vm1917, %v1891, %v1096
      %v1925 = vsel %vm1917, %v1892, %v1098
      %v1926 = vsel %vm1917, %v1893, %v1100
      %v1927 = vsel %vm1917, %v1894, %v1102
      %v1928 = vsel %vm1917, %v1895, %v1104
      %v1929 = vsel %vm1917, %v1896, %v1106
      %v1930 = vsel %vm1917, %v1897, %v1108
      %v1931 = vsel %vm1917, %v1898, %v1110
      %v1932 = vsel %vm1917, %v1899, %v1112
      %v1933 = vsel %vm1917, %v1900, %v1114
      %v1934 = vsel %vm1917, %v1901, %v1116
      %v1935 = vsel %vm1917, %v1902, %v1118
      %v1936 = vsel %vm1917, %v1903, %v1120
      %v1937 = vsel %vm1917, %v1904, %v1122
      %v1938 = vsel %vm1917, %v1905, %v1124
      %v1939 = vsel %vm1917, %v1906, %v1126
      %v1940 = vsel %vm1917, %v1907, %v1128
      %v1941 = vsel %vm1917, %v1908, %v1130
      %v1942 = vsel %vm1917, %v1909, %v1132
      %v1943 = vsel %vm1917, %v1910, %v1134
      %v1944 = vsel %vm1917, %v1911, %v1136
      %v1945 = vsel %vm1917, %v1912, %v1138
      %v1946 = vsel %vm1917, %v1913, %v1140
      %v1947 = vsel %vm1917, %v1914, %v1142
      %v1948 = vsel %vm1917, %v1915, %v1144
      %v1949 = vsel %vm1917, %v1916, %v1146
      %vm1950 = vcmask 162816
      %v1951 = vsel %vm1950, %v1918, %v1212
      %v1952 = vsel %vm1950, %v1919, %v1214
      %v1953 = vsel %vm1950, %v1920, %v1216
      %v1954 = vsel %vm1950, %v1921, %v1218
      %v1955 = vsel %vm1950, %v1922, %v1220
      %v1956 = vsel %vm1950, %v1923, %v1222
      %v1957 = vsel %vm1950, %v1924, %v1224
      %v1958 = vsel %vm1950, %v1925, %v1226
      %v1959 = vsel %vm1950, %v1926, %v1228
      %v1960 = vsel %vm1950, %v1927, %v1230
      %v1961 = vsel %vm1950, %v1928, %v1232
      %v1962 = vsel %vm1950, %v1929, %v1234
      %v1963 = vsel %vm1950, %v1930, %v1236
      %v1964 = vsel %vm1950, %v1931, %v1238
      %v1965 = vsel %vm1950, %v1932, %v1240
      %v1966 = vsel %vm1950, %v1933, %v1242
      %v1967 = vsel %vm1950, %v1934, %v1244
      %v1968 = vsel %vm1950, %v1935, %v1246
      %v1969 = vsel %vm1950, %v1936, %v1248
      %v1970 = vsel %vm1950, %v1937, %v1250
      %v1971 = vsel %vm1950, %v1938, %v1252
      %v1972 = vsel %vm1950, %v1939, %v1254
      %v1973 = vsel %vm1950, %v1940, %v1256
      %v1974 = vsel %vm1950, %v1941, %v1258
      %v1975 = vsel %vm1950, %v1942, %v1260
      %v1976 = vsel %vm1950, %v1943, %v1262
      %v1977 = vsel %vm1950, %v1944, %v1264
      %v1978 = vsel %vm1950, %v1945, %v1266
      %v1979 = vsel %vm1950, %v1946, %v1268
      %v1980 = vsel %vm1950, %v1947, %v1270
      %v1981 = vsel %vm1950, %v1948, %v1272
      %v1982 = vsel %vm1950, %v1949, %v1274
      %vm1983 = vcmask 195584
      %v1984 = vsel %vm1983, %v1951, %v1340
      %v1985 = vsel %vm1983, %v1952, %v1342
      %v1986 = vsel %vm1983, %v1953, %v1344
      %v1987 = vsel %vm1983, %v1954, %v1346
      %v1988 = vsel %vm1983, %v1955, %v1348
      %v1989 = vsel %vm1983, %v1956, %v1350
      %v1990 = vsel %vm1983, %v1957, %v1352
      %v1991 = vsel %vm1983, %v1958, %v1354
      %v1992 = vsel %vm1983, %v1959, %v1356
      %v1993 = vsel %vm1983, %v1960, %v1358
      %v1994 = vsel %vm1983, %v1961, %v1360
      %v1995 = vsel %vm1983, %v1962, %v1362
      %v1996 = vsel %vm1983, %v1963, %v1364
      %v1997 = vsel %vm1983, %v1964, %v1366
      %v1998 = vsel %vm1983, %v1965, %v1368
      %v1999 = vsel %vm1983, %v1966, %v1370
      %v2000 = vsel %vm1983, %v1967, %v1372
      %v2001 = vsel %vm1983, %v1968, %v1374
      %v2002 = vsel %vm1983, %v1969, %v1376
      %v2003 = vsel %vm1983, %v1970, %v1378
      %v2004 = vsel %vm1983, %v1971, %v1380
      %v2005 = vsel %vm1983, %v1972, %v1382
      %v2006 = vsel %vm1983, %v1973, %v1384
      %v2007 = vsel %vm1983, %v1974, %v1386
      %v2008 = vsel %vm1983, %v1975, %v1388
      %v2009 = vsel %vm1983, %v1976, %v1390
      %v2010 = vsel %vm1983, %v1977, %v1392
      %v2011 = vsel %vm1983, %v1978, %v1394
      %v2012 = vsel %vm1983, %v1979, %v1396
      %v2013 = vsel %vm1983, %v1980, %v1398
      %v2014 = vsel %vm1983, %v1981, %v1400
      %v2015 = vsel %vm1983, %v1982, %v1402
      %vm2016 = vcmask 228352
      %v2017 = vsel %vm2016, %v1984, %v1468
      %v2018 = vsel %vm2016, %v1985, %v1470
      %v2019 = vsel %vm2016, %v1986, %v1472
      %v2020 = vsel %vm2016, %v1987, %v1474
      %v2021 = vsel %vm2016, %v1988, %v1476
      %v2022 = vsel %vm2016, %v1989, %v1478
      %v2023 = vsel %vm2016, %v1990, %v1480
      %v2024 = vsel %vm2016, %v1991, %v1482
      %v2025 = vsel %vm2016, %v1992, %v1484
      %v2026 = vsel %vm2016, %v1993, %v1486
      %v2027 = vsel %vm2016, %v1994, %v1488
      %v2028 = vsel %vm2016, %v1995, %v1490
      %v2029 = vsel %vm2016, %v1996, %v1492
      %v2030 = vsel %vm2016, %v1997, %v1494
      %v2031 = vsel %vm2016, %v1998, %v1496
      %v2032 = vsel %vm2016, %v1999, %v1498
      %v2033 = vsel %vm2016, %v2000, %v1500
      %v2034 = vsel %vm2016, %v2001, %v1502
      %v2035 = vsel %vm2016, %v2002, %v1504
      %v2036 = vsel %vm2016, %v2003, %v1506
      %v2037 = vsel %vm2016, %v2004, %v1508
      %v2038 = vsel %vm2016, %v2005, %v1510
      %v2039 = vsel %vm2016, %v2006, %v1512
      %v2040 = vsel %vm2016, %v2007, %v1514
      %v2041 = vsel %vm2016, %v2008, %v1516
      %v2042 = vsel %vm2016, %v2009, %v1518
      %v2043 = vsel %vm2016, %v2010, %v1520
      %v2044 = vsel %vm2016, %v2011, %v1522
      %v2045 = vsel %vm2016, %v2012, %v1524
      %v2046 = vsel %vm2016, %v2013, %v1526
      %v2047 = vsel %vm2016, %v2014, %v1528
      %v2048 = vsel %vm2016, %v2015, %v1530
      %vm2049 = vcmask 261120
      %v2050 = vsel %vm2049, %v2017, %v1596
      %v2051 = vsel %vm2049, %v2018, %v1598
      %v2052 = vsel %vm2049, %v2019, %v1600
      %v2053 = vsel %vm2049, %v2020, %v1602
      %v2054 = vsel %vm2049, %v2021, %v1604
      %v2055 = vsel %vm2049, %v2022, %v1606
      %v2056 = vsel %vm2049, %v2023, %v1608
      %v2057 = vsel %vm2049, %v2024, %v1610
      %v2058 = vsel %vm2049, %v2025, %v1612
      %v2059 = vsel %vm2049, %v2026, %v1614
      %v2060 = vsel %vm2049, %v2027, %v1616
      %v2061 = vsel %vm2049, %v2028, %v1618
      %v2062 = vsel %vm2049, %v2029, %v1620
      %v2063 = vsel %vm2049, %v2030, %v1622
      %v2064 = vsel %vm2049, %v2031, %v1624
      %v2065 = vsel %vm2049, %v2032, %v1626
      %v2066 = vsel %vm2049, %v2033, %v1628
      %v2067 = vsel %vm2049, %v2034, %v1630
      %v2068 = vsel %vm2049, %v2035, %v1632
      %v2069 = vsel %vm2049, %v2036, %v1634
      %v2070 = vsel %vm2049, %v2037, %v1636
      %v2071 = vsel %vm2049, %v2038, %v1638
      %v2072 = vsel %vm2049, %v2039, %v1640
      %v2073 = vsel %vm2049, %v2040, %v1642
      %v2074 = vsel %vm2049, %v2041, %v1644
      %v2075 = vsel %vm2049, %v2042, %v1646
      %v2076 = vsel %vm2049, %v2043, %v1648
      %v2077 = vsel %vm2049, %v2044, %v1650
      %v2078 = vsel %vm2049, %v2045, %v1652
      %v2079 = vsel %vm2049, %v2046, %v1654
      %v2080 = vsel %vm2049, %v2047, %v1656
      %v2081 = vsel %vm2049, %v2048, %v1658
      %vm2082 = vcmask 293888
      %v2083 = vsel %vm2082, %v2050, %v1724
      %v2084 = vsel %vm2082, %v2051, %v1726
      %v2085 = vsel %vm2082, %v2052, %v1728
      %v2086 = vsel %vm2082, %v2053, %v1730
      %v2087 = vsel %vm2082, %v2054, %v1732
      %v2088 = vsel %vm2082, %v2055, %v1734
      %v2089 = vsel %vm2082, %v2056, %v1736
      %v2090 = vsel %vm2082, %v2057, %v1738
      %v2091 = vsel %vm2082, %v2058, %v1740
      %v2092 = vsel %vm2082, %v2059, %v1742
      %v2093 = vsel %vm2082, %v2060, %v1744
      %v2094 = vsel %vm2082, %v2061, %v1746
      %v2095 = vsel %vm2082, %v2062, %v1748
      %v2096 = vsel %vm2082, %v2063, %v1750
      %v2097 = vsel %vm2082, %v2064, %v1752
      %v2098 = vsel %vm2082, %v2065, %v1754
      %v2099 = vsel %vm2082, %v2066, %v1756
      %v2100 = vsel %vm2082, %v2067, %v1758
      %v2101 = vsel %vm2082, %v2068, %v1760
      %v2102 = vsel %vm2082, %v2069, %v1762
      %v2103 = vsel %vm2082, %v2070, %v1764
      %v2104 = vsel %vm2082, %v2071, %v1766
      %v2105 = vsel %vm2082, %v2072, %v1768
      %v2106 = vsel %vm2082, %v2073, %v1770
      %v2107 = vsel %vm2082, %v2074, %v1772
      %v2108 = vsel %vm2082, %v2075, %v1774
      %v2109 = vsel %vm2082, %v2076, %v1776
      %v2110 = vsel %vm2082, %v2077, %v1778
      %v2111 = vsel %vm2082, %v2078, %v1780
      %v2112 = vsel %vm2082, %v2079, %v1782
      %v2113 = vsel %vm2082, %v2080, %v1784
      %v2114 = vsel %vm2082, %v2081, %v1786
      %v2115 = vld [vmem:[%s1] sm:$0xff]
      %v2116 = vld [vmem:[%s1 + $0x8] sm:$0xff]
      %v2117 = vld [vmem:[%s1 + $0x10] sm:$0xff]
      %v2118 = vld [vmem:[%s1 + $0x18] sm:$0xff]
      %v2119 = vld [vmem:[%s1 + $0x20] sm:$0xff]
      %v2120 = vld [vmem:[%s2] sm:$0x1]
      %v2122 = vlaneseq
      %v2123 = vshrl.u32 %v2122, 7
      %v2124 = vsub.s32 0, %v2123
      %v2125 = vrot.slane %v2120, %v2124
      %vm2127 = vcmask 326656
      %v2129 = vsel %vm2127, %v2083, 0
      %v2132 = vsel %vm2127, %v2084, 0
      %v2135 = vsel %vm2127, %v2085, 0
      %v2138 = vsel %vm2127, %v2086, 0
      %v2141 = vsel %vm2127, %v2087, 0
      %v2144 = vsel %vm2127, %v2088, 0
      %v2147 = vsel %vm2127, %v2089, 0
      %v2150 = vsel %vm2127, %v2090, 0
      %v2153 = vsel %vm2127, %v2091, 0
      %v2156 = vsel %vm2127, %v2092, 0
      %v2159 = vsel %vm2127, %v2093, 0
      %v2162 = vsel %vm2127, %v2094, 0
      %v2165 = vsel %vm2127, %v2095, 0
      %v2168 = vsel %vm2127, %v2096, 0
      %v2171 = vsel %vm2127, %v2097, 0
      %v2174 = vsel %vm2127, %v2098, 0
      %v2177 = vsel %vm2127, %v2099, 0
      %v2180 = vsel %vm2127, %v2100, 0
      %v2183 = vsel %vm2127, %v2101, 0
      %v2186 = vsel %vm2127, %v2102, 0
      %v2189 = vsel %vm2127, %v2103, 0
      %v2192 = vsel %vm2127, %v2104, 0
      %v2195 = vsel %vm2127, %v2105, 0
      %v2198 = vsel %vm2127, %v2106, 0
      %v2201 = vsel %vm2127, %v2107, 0
      %v2204 = vsel %vm2127, %v2108, 0
      %v2207 = vsel %vm2127, %v2109, 0
      %v2210 = vsel %vm2127, %v2110, 0
      %v2213 = vsel %vm2127, %v2111, 0
      %v2216 = vsel %vm2127, %v2112, 0
      %v2219 = vsel %vm2127, %v2113, 0
      %v2222 = vsel %vm2127, %v2114, 0
      %2224 = vmatprep.subr.mxu0 0.0
      %2225 = vmatpush1.msra.mxu0 0.0
      %2226 = vmatprep.subr.mxu0 0.0
      %2227 = vmatpush1.msra.mxu0 0.0
      %2228 = vmatprep.subr.mxu0 0.0
      %2229 = vmatpush1.msra.mxu0 0.0
      %2230 = vmatprep.subr.mxu0 0.0
      %2231 = vmatpush1.msra.mxu0 0.0
      %2232 = vmatprep.subr.mxu0 0.0
      %2233 = vmatpush1.msra.mxu0 0.0
      %2234 = vmatprep.subr.mxu0 0.0
      %2235 = vmatpush1.msra.mxu0 0.0
      %2236 = vmatprep.subr.mxu0 0.0
      %2237 = vmatpush1.msra.mxu0 0.0
      %2238 = vmatprep.subr.mxu0 0.0
      %2239 = vmatpush1.msra.mxu0 0.0
      %2240 = vmatprep.subr.mxu0 0.0
      %2241 = vmatpush1.msra.mxu0 0.0
      %2242 = vmatprep.subr.mxu0 0.0
      %2243 = vmatpush1.msra.mxu0 0.0
      %2244 = vmatprep.subr.mxu0 0.0
      %2245 = vmatpush1.msra.mxu0 0.0
      %2246 = vmatprep.subr.mxu0 0.0
      %2247 = vmatpush1.msra.mxu0 %v2119
      %2248 = vmatprep.subr.mxu0 0.0
      %2249 = vmatpush1.msra.mxu0 %v2118
      %2250 = vmatprep.subr.mxu0 0.0
      %2251 = vmatpush1.msra.mxu0 %v2117
      %2252 = vmatprep.subr.mxu0 0.0
      %2253 = vmatpush1.msra.mxu0 %v2116
      %2254 = vmatprep.subr.mxu0 0.0
      %2255 = vmatpush1.msra.mxu0 %v2115
      %2256 = vmatprep.subr.mxu0 0.0
      %2257 = vmatpush2.msra.mxu0 0.0
      %2258 = vmatprep.subr.mxu0 0.0
      %2259 = vmatpush2.msra.mxu0 0.0
      %2260 = vmatprep.subr.mxu0 0.0
      %2261 = vmatpush2.msra.mxu0 0.0
      %2262 = vmatprep.subr.mxu0 0.0
      %2263 = vmatpush2.msra.mxu0 0.0
      %2264 = vmatprep.subr.mxu0 0.0
      %2265 = vmatpush2.msra.mxu0 0.0
      %2266 = vmatprep.subr.mxu0 0.0
      %2267 = vmatpush2.msra.mxu0 0.0
      %2268 = vmatprep.subr.mxu0 0.0
      %2269 = vmatpush2.msra.mxu0 0.0
      %2270 = vmatprep.subr.mxu0 0.0
      %2271 = vmatpush2.msra.mxu0 0.0
      %2272 = vmatprep.subr.mxu0 0.0
      %2273 = vmatpush2.msra.mxu0 0.0
      %2274 = vmatprep.subr.mxu0 0.0
      %2275 = vmatpush2.msra.mxu0 0.0
      %2276 = vmatprep.subr.mxu0 0.0
      %2277 = vmatpush2.msra.mxu0 0.0
      %2278 = vmatprep.subr.mxu0 0.0
      %2279 = vmatpush2.msra.mxu0 0.0
      %2280 = vmatprep.subr.mxu0 0.0
      %2281 = vmatpush2.msra.mxu0 0.0
      %2282 = vmatprep.subr.mxu0 0.0
      %2283 = vmatpush2.msra.mxu0 0.0
      %2284 = vmatprep.subr.mxu0 0.0
      %2285 = vmatpush2.msra.mxu0 0.0
      %2286 = vmatprep.subr.mxu0 0.0
      %2287 = vmatpush2.msra.mxu0 0.0
      %2288 = vmatprep.mubr.f32.mxu0 0.0
      %2289 = vmatmul.mubr.f32.gmra.mxu0 %v2129
      %v2290 = vpop.f32.mrf.mxu0
      %v2291 = vadd.f32 %v2125, %v2290
      %v2292 = vpop.f32.mrf.mxu0
      %2293 = vmatprep.mubr.f32.mxu0 0.0
      %2294 = vmatmul.mubr.f32.gmra.mxu0 %v2132
      %v2295 = vpop.f32.mrf.mxu0
      %v2296 = vadd.f32 %v2125, %v2295
      %v2297 = vpop.f32.mrf.mxu0
      %2298 = vmatprep.mubr.f32.mxu0 0.0
      %2299 = vmatmul.mubr.f32.gmra.mxu0 %v2135
      %v2300 = vpop.f32.mrf.mxu0
      %v2301 = vadd.f32 %v2125, %v2300
      %v2302 = vpop.f32.mrf.mxu0
      %2303 = vmatprep.mubr.f32.mxu0 0.0
      %2304 = vmatmul.mubr.f32.gmra.mxu0 %v2138
      %v2305 = vpop.f32.mrf.mxu0
      %v2306 = vadd.f32 %v2125, %v2305
      %v2307 = vpop.f32.mrf.mxu0
      %2308 = vmatprep.mubr.f32.mxu0 0.0
      %2309 = vmatmul.mubr.f32.gmra.mxu0 %v2141
      %v2310 = vpop.f32.mrf.mxu0
      %v2311 = vadd.f32 %v2125, %v2310
      %v2312 = vpop.f32.mrf.mxu0
      %2313 = vmatprep.mubr.f32.mxu0 0.0
      %2314 = vmatmul.mubr.f32.gmra.mxu0 %v2144
      %v2315 = vpop.f32.mrf.mxu0
      %v2316 = vadd.f32 %v2125, %v2315
      %v2317 = vpop.f32.mrf.mxu0
      %2318 = vmatprep.mubr.f32.mxu0 0.0
      %2319 = vmatmul.mubr.f32.gmra.mxu0 %v2147
      %v2320 = vpop.f32.mrf.mxu0
      %v2321 = vadd.f32 %v2125, %v2320
      %v2322 = vpop.f32.mrf.mxu0
      %2323 = vmatprep.mubr.f32.mxu0 0.0
      %2324 = vmatmul.mubr.f32.gmra.mxu0 %v2150
      %v2325 = vpop.f32.mrf.mxu0
      %v2326 = vadd.f32 %v2125, %v2325
      %v2327 = vpop.f32.mrf.mxu0
      %2328 = vmatprep.mubr.f32.mxu0 0.0
      %2329 = vmatmul.mubr.f32.gmra.mxu0 %v2153
      %v2330 = vpop.f32.mrf.mxu0
      %v2331 = vadd.f32 %v2125, %v2330
      %v2332 = vpop.f32.mrf.mxu0
      %2333 = vmatprep.mubr.f32.mxu0 0.0
      %2334 = vmatmul.mubr.f32.gmra.mxu0 %v2156
      %v2335 = vpop.f32.mrf.mxu0
      %v2336 = vadd.f32 %v2125, %v2335
      %v2337 = vpop.f32.mrf.mxu0
      %2338 = vmatprep.mubr.f32.mxu0 0.0
      %2339 = vmatmul.mubr.f32.gmra.mxu0 %v2159
      %v2340 = vpop.f32.mrf.mxu0
      %v2341 = vadd.f32 %v2125, %v2340
      %v2342 = vpop.f32.mrf.mxu0
      %2343 = vmatprep.mubr.f32.mxu0 0.0
      %2344 = vmatmul.mubr.f32.gmra.mxu0 %v2162
      %v2345 = vpop.f32.mrf.mxu0
      %v2346 = vadd.f32 %v2125, %v2345
      %v2347 = vpop.f32.mrf.mxu0
      %2348 = vmatprep.mubr.f32.mxu0 0.0
      %2349 = vmatmul.mubr.f32.gmra.mxu0 %v2165
      %v2350 = vpop.f32.mrf.mxu0
      %v2351 = vadd.f32 %v2125, %v2350
      %v2352 = vpop.f32.mrf.mxu0
      %2353 = vmatprep.mubr.f32.mxu0 0.0
      %2354 = vmatmul.mubr.f32.gmra.mxu0 %v2168
      %v2355 = vpop.f32.mrf.mxu0
      %v2356 = vadd.f32 %v2125, %v2355
      %v2357 = vpop.f32.mrf.mxu0
      %2358 = vmatprep.mubr.f32.mxu0 0.0
      %2359 = vmatmul.mubr.f32.gmra.mxu0 %v2171
      %v2360 = vpop.f32.mrf.mxu0
      %v2361 = vadd.f32 %v2125, %v2360
      %v2362 = vpop.f32.mrf.mxu0
      %2363 = vmatprep.mubr.f32.mxu0 0.0
      %2364 = vmatmul.mubr.f32.gmra.mxu0 %v2174
      %v2365 = vpop.f32.mrf.mxu0
      %v2366 = vadd.f32 %v2125, %v2365
      %v2367 = vpop.f32.mrf.mxu0
      %2368 = vmatprep.mubr.f32.mxu0 0.0
      %2369 = vmatmul.mubr.f32.gmra.mxu0 %v2177
      %v2370 = vpop.f32.mrf.mxu0
      %v2371 = vadd.f32 %v2125, %v2370
      %v2372 = vpop.f32.mrf.mxu0
      %2373 = vmatprep.mubr.f32.mxu0 0.0
      %2374 = vmatmul.mubr.f32.gmra.mxu0 %v2180
      %v2375 = vpop.f32.mrf.mxu0
      %v2376 = vadd.f32 %v2125, %v2375
      %v2377 = vpop.f32.mrf.mxu0
      %2378 = vmatprep.mubr.f32.mxu0 0.0
      %2379 = vmatmul.mubr.f32.gmra.mxu0 %v2183
      %v2380 = vpop.f32.mrf.mxu0
      %v2381 = vadd.f32 %v2125, %v2380
      %v2382 = vpop.f32.mrf.mxu0
      %2383 = vmatprep.mubr.f32.mxu0 0.0
      %2384 = vmatmul.mubr.f32.gmra.mxu0 %v2186
      %v2385 = vpop.f32.mrf.mxu0
      %v2386 = vadd.f32 %v2125, %v2385
      %v2387 = vpop.f32.mrf.mxu0
      %2388 = vmatprep.mubr.f32.mxu0 0.0
      %2389 = vmatmul.mubr.f32.gmra.mxu0 %v2189
      %v2390 = vpop.f32.mrf.mxu0
      %v2391 = vadd.f32 %v2125, %v2390
      %v2392 = vpop.f32.mrf.mxu0
      %2393 = vmatprep.mubr.f32.mxu0 0.0
      %2394 = vmatmul.mubr.f32.gmra.mxu0 %v2192
      %v2395 = vpop.f32.mrf.mxu0
      %v2396 = vadd.f32 %v2125, %v2395
      %v2397 = vpop.f32.mrf.mxu0
      %2398 = vmatprep.mubr.f32.mxu0 0.0
      %2399 = vmatmul.mubr.f32.gmra.mxu0 %v2195
      %v2400 = vpop.f32.mrf.mxu0
      %v2401 = vadd.f32 %v2125, %v2400
      %v2402 = vpop.f32.mrf.mxu0
      %2403 = vmatprep.mubr.f32.mxu0 0.0
      %2404 = vmatmul.mubr.f32.gmra.mxu0 %v2198
      %v2405 = vpop.f32.mrf.mxu0
      %v2406 = vadd.f32 %v2125, %v2405
      %v2407 = vpop.f32.mrf.mxu0
      %2408 = vmatprep.mubr.f32.mxu0 0.0
      %2409 = vmatmul.mubr.f32.gmra.mxu0 %v2201
      %v2410 = vpop.f32.mrf.mxu0
      %v2411 = vadd.f32 %v2125, %v2410
      %v2412 = vpop.f32.mrf.mxu0
      %2413 = vmatprep.mubr.f32.mxu0 0.0
      %2414 = vmatmul.mubr.f32.gmra.mxu0 %v2204
      %v2415 = vpop.f32.mrf.mxu0
      %v2416 = vadd.f32 %v2125, %v2415
      %v2417 = vpop.f32.mrf.mxu0
      %2418 = vmatprep.mubr.f32.mxu0 0.0
      %2419 = vmatmul.mubr.f32.gmra.mxu0 %v2207
      %v2420 = vpop.f32.mrf.mxu0
      %v2421 = vadd.f32 %v2125, %v2420
      %v2422 = vpop.f32.mrf.mxu0
      %2423 = vmatprep.mubr.f32.mxu0 0.0
      %2424 = vmatmul.mubr.f32.gmra.mxu0 %v2210
      %v2425 = vpop.f32.mrf.mxu0
      %v2426 = vadd.f32 %v2125, %v2425
      %v2427 = vpop.f32.mrf.mxu0
      %2428 = vmatprep.mubr.f32.mxu0 0.0
      %2429 = vmatmul.mubr.f32.gmra.mxu0 %v2213
      %v2430 = vpop.f32.mrf.mxu0
      %v2431 = vadd.f32 %v2125, %v2430
      %v2432 = vpop.f32.mrf.mxu0
      %2433 = vmatprep.mubr.f32.mxu0 0.0
      %2434 = vmatmul.mubr.f32.gmra.mxu0 %v2216
      %v2435 = vpop.f32.mrf.mxu0
      %v2436 = vadd.f32 %v2125, %v2435
      %v2437 = vpop.f32.mrf.mxu0
      %2438 = vmatprep.mubr.f32.mxu0 0.0
      %2439 = vmatmul.mubr.f32.gmra.mxu0 %v2219
      %v2440 = vpop.f32.mrf.mxu0
      %v2441 = vadd.f32 %v2125, %v2440
      %v2442 = vpop.f32.mrf.mxu0
      %2443 = vmatprep.mubr.f32.mxu0 0.0
      %2444 = vmatmul.mubr.f32.gmra.mxu0 %v2222
      %v2445 = vpop.f32.mrf.mxu0
      %v2446 = vadd.f32 %v2125, %v2445
      %v2447 = vpop.f32.mrf.mxu0
      %2448 = vdwg.mxu0
      %v2449 = vmax.f32 %v2291, 0.0
      %v2450 = vmax.f32 %v2296, 0.0
      %v2451 = vmax.f32 %v2301, 0.0
      %v2452 = vmax.f32 %v2306, 0.0
      %v2453 = vmax.f32 %v2311, 0.0
      %v2454 = vmax.f32 %v2316, 0.0
      %v2455 = vmax.f32 %v2321, 0.0
      %v2456 = vmax.f32 %v2326, 0.0
      %v2457 = vmax.f32 %v2331, 0.0
      %v2458 = vmax.f32 %v2336, 0.0
      %v2459 = vmax.f32 %v2341, 0.0
      %v2460 = vmax.f32 %v2346, 0.0
      %v2461 = vmax.f32 %v2351, 0.0
      %v2462 = vmax.f32 %v2356, 0.0
      %v2463 = vmax.f32 %v2361, 0.0
      %v2464 = vmax.f32 %v2366, 0.0
      %v2465 = vmax.f32 %v2371, 0.0
      %v2466 = vmax.f32 %v2376, 0.0
      %v2467 = vmax.f32 %v2381, 0.0
      %v2468 = vmax.f32 %v2386, 0.0
      %v2469 = vmax.f32 %v2391, 0.0
      %v2470 = vmax.f32 %v2396, 0.0
      %v2471 = vmax.f32 %v2401, 0.0
      %v2472 = vmax.f32 %v2406, 0.0
      %v2473 = vmax.f32 %v2411, 0.0
      %v2474 = vmax.f32 %v2416, 0.0
      %v2475 = vmax.f32 %v2421, 0.0
      %v2476 = vmax.f32 %v2426, 0.0
      %v2477 = vmax.f32 %v2431, 0.0
      %v2478 = vmax.f32 %v2436, 0.0
      %v2479 = vmax.f32 %v2441, 0.0
      %v2480 = vmax.f32 %v2446, 0.0
      %2481 = vst.msk [vmem:[#allocation3] sm:$0xff] %vm1851, 0.0
      %2482 = vst.msk [vmem:[#allocation3 + $0x8] sm:$0xff] %vm1851, 0.0
      %vm2483 = vcmask 58368
      %2484 = vst.msk [vmem:[#allocation3 + $0x10] sm:$0x3] %vm2483, 0.0
      %2485 = vst.msk [vmem:[#allocation3 + $0x18] sm:$0xff] %vm1851, 0.0
      %2486 = vst.msk [vmem:[#allocation3 + $0x20] sm:$0xff] %vm1851, 0.0
      %2487 = vst.msk [vmem:[#allocation3 + $0x28] sm:$0x3] %vm2483, 0.0
      %2488 = vst.msk [vmem:[#allocation3 + $0x30] sm:$0xff] %vm1851, 0.0
      %2489 = vst.msk [vmem:[#allocation3 + $0x38] sm:$0xff] %vm1851, 0.0
      %2490 = vst.msk [vmem:[#allocation3 + $0x40] sm:$0x3] %vm2483, 0.0
      %2491 = vst.msk [vmem:[#allocation3 + $0x48] sm:$0xff] %vm1851, 0.0
      %2492 = vst.msk [vmem:[#allocation3 + $0x50] sm:$0xff] %vm1851, 0.0
      %2493 = vst.msk [vmem:[#allocation3 + $0x58] sm:$0x3] %vm2483, 0.0
      %2494 = vst.msk [vmem:[#allocation3 + $0x60] sm:$0xff] %vm1851, 0.0
      %2495 = vst.msk [vmem:[#allocation3 + $0x68] sm:$0xff] %vm1851, 0.0
      %2496 = vst.msk [vmem:[#allocation3 + $0x70] sm:$0x3] %vm2483, 0.0
      %2497 = vst.msk [vmem:[#allocation3 + $0x78] sm:$0xff] %vm1851, 0.0
      %2498 = vst.msk [vmem:[#allocation3 + $0x80] sm:$0xff] %vm1851, 0.0
      %2499 = vst.msk [vmem:[#allocation3 + $0x88] sm:$0x3] %vm2483, 0.0
      %2500 = vst.msk [vmem:[#allocation3 + $0x90] sm:$0xff] %vm1851, 0.0
      %2501 = vst.msk [vmem:[#allocation3 + $0x98] sm:$0xff] %vm1851, 0.0
      %2502 = vst.msk [vmem:[#allocation3 + $0xa0] sm:$0x3] %vm2483, 0.0
      %2503 = vst.msk [vmem:[#allocation3 + $0xa8] sm:$0xff] %vm1851, 0.0
      %2504 = vst.msk [vmem:[#allocation3 + $0xb0] sm:$0xff] %vm1851, 0.0
      %2505 = vst.msk [vmem:[#allocation3 + $0xb8] sm:$0x3] %vm2483, 0.0
      %2506 = vst.msk [vmem:[#allocation3 + $0xc0] sm:$0xff] %vm1851, 0.0
      %2507 = vst.msk [vmem:[#allocation3 + $0xc8] sm:$0xff] %vm1851, 0.0
      %2508 = vst.msk [vmem:[#allocation3 + $0xd0] sm:$0x3] %vm2483, 0.0
      %2509 = vst.msk [vmem:[#allocation3 + $0xd8] sm:$0xff] %vm1851, 0.0
      %2510 = vst.msk [vmem:[#allocation3 + $0xe0] sm:$0xff] %vm1851, 0.0
      %2511 = vst.msk [vmem:[#allocation3 + $0xe8] sm:$0x3] %vm2483, 0.0
      %2512 = vst.msk [vmem:[#allocation3 + $0xf0] sm:$0xff] %vm1851, 0.0
      %2513 = vst.msk [vmem:[#allocation3 + $0xf8] sm:$0xff] %vm1851, 0.0
      %2514 = vst.msk [vmem:[#allocation3 + $0x100] sm:$0x3] %vm2483, 0.0
      %2515 = vst.msk [vmem:[#allocation3 + $0x108] sm:$0xff] %vm1851, 0.0
      %2516 = vst.msk [vmem:[#allocation3 + $0x110] sm:$0xff] %vm1851, 0.0
      %2517 = vst.msk [vmem:[#allocation3 + $0x118] sm:$0x3] %vm2483, 0.0
      %2518 = vst.msk [vmem:[#allocation3 + $0x120] sm:$0xff] %vm1851, 0.0
      %2519 = vst.msk [vmem:[#allocation3 + $0x128] sm:$0xff] %vm1851, 0.0
      %2520 = vst.msk [vmem:[#allocation3 + $0x130] sm:$0x3] %vm2483, 0.0
      %2521 = vst.msk [vmem:[#allocation3 + $0x138] sm:$0xff] %vm1851, 0.0
      %2522 = vst.msk [vmem:[#allocation3 + $0x140] sm:$0xff] %vm1851, 0.0
      %2523 = vst.msk [vmem:[#allocation3 + $0x148] sm:$0x3] %vm2483, 0.0
      %2524 = vst.msk [vmem:[#allocation3 + $0x150] sm:$0xff] %vm1851, 0.0
      %2525 = vst.msk [vmem:[#allocation3 + $0x158] sm:$0xff] %vm1851, 0.0
      %2526 = vst.msk [vmem:[#allocation3 + $0x160] sm:$0x3] %vm2483, 0.0
      %2527 = vst.msk [vmem:[#allocation3 + $0x168] sm:$0xff] %vm1851, 0.0
      %2528 = vst.msk [vmem:[#allocation3 + $0x170] sm:$0xff] %vm1851, 0.0
      %2529 = vst.msk [vmem:[#allocation3 + $0x178] sm:$0x3] %vm2483, 0.0
      %2530 = vst.msk [vmem:[#allocation3 + $0x180] sm:$0xff] %vm1851, 0.0
      %2531 = vst.msk [vmem:[#allocation3 + $0x188] sm:$0xff] %vm1851, 0.0
      %2532 = vst.msk [vmem:[#allocation3 + $0x190] sm:$0x3] %vm2483, 0.0
      %2533 = vst.msk [vmem:[#allocation3 + $0x198] sm:$0xff] %vm1851, 0.0
      %2534 = vst.msk [vmem:[#allocation3 + $0x1a0] sm:$0xff] %vm1851, 0.0
      %2535 = vst.msk [vmem:[#allocation3 + $0x1a8] sm:$0x3] %vm2483, 0.0
      %s2536 = scalar_lea.vmem [#allocation3], 24
      %2537 = vst.msk [vmem:[%s2536 + $0x1] sm:$0xff] %vm1851, %v2449
      %2538 = vst.msk [vmem:[%s2536 + $0x9] sm:$0xff] %vm1851, %v2450
      %2539 = vst.msk [vmem:[%s2536 + $0x19] sm:$0xff] %vm1851, %v2451
      %2540 = vst.msk [vmem:[%s2536 + $0x21] sm:$0xff] %vm1851, %v2452
      %2541 = vst.msk [vmem:[%s2536 + $0x31] sm:$0xff] %vm1851, %v2453
      %2542 = vst.msk [vmem:[%s2536 + $0x39] sm:$0xff] %vm1851, %v2454
      %2543 = vst.msk [vmem:[%s2536 + $0x49] sm:$0xff] %vm1851, %v2455
      %2544 = vst.msk [vmem:[%s2536 + $0x51] sm:$0xff] %vm1851, %v2456
      %2545 = vst.msk [vmem:[%s2536 + $0x61] sm:$0xff] %vm1851, %v2457
      %2546 = vst.msk [vmem:[%s2536 + $0x69] sm:$0xff] %vm1851, %v2458
      %2547 = vst.msk [vmem:[%s2536 + $0x79] sm:$0xff] %vm1851, %v2459
      %2548 = vst.msk [vmem:[%s2536 + $0x81] sm:$0xff] %vm1851, %v2460
      %2549 = vst.msk [vmem:[%s2536 + $0x91] sm:$0xff] %vm1851, %v2461
      %2550 = vst.msk [vmem:[%s2536 + $0x99] sm:$0xff] %vm1851, %v2462
      %2551 = vst.msk [vmem:[%s2536 + $0xa9] sm:$0xff] %vm1851, %v2463
      %2552 = vst.msk [vmem:[%s2536 + $0xb1] sm:$0xff] %vm1851, %v2464
      %2553 = vst.msk [vmem:[%s2536 + $0xc1] sm:$0xff] %vm1851, %v2465
      %2554 = vst.msk [vmem:[%s2536 + $0xc9] sm:$0xff] %vm1851, %v2466
      %2555 = vst.msk [vmem:[%s2536 + $0xd9] sm:$0xff] %vm1851, %v2467
      %2556 = vst.msk [vmem:[%s2536 + $0xe1] sm:$0xff] %vm1851, %v2468
      %2557 = vst.msk [vmem:[%s2536 + $0xf1] sm:$0xff] %vm1851, %v2469
      %2558 = vst.msk [vmem:[%s2536 + $0xf9] sm:$0xff] %vm1851, %v2470
      %2559 = vst.msk [vmem:[%s2536 + $0x109] sm:$0xff] %vm1851, %v2471
      %2560 = vst.msk [vmem:[%s2536 + $0x111] sm:$0xff] %vm1851, %v2472
      %2561 = vst.msk [vmem:[%s2536 + $0x121] sm:$0xff] %vm1851, %v2473
      %2562 = vst.msk [vmem:[%s2536 + $0x129] sm:$0xff] %vm1851, %v2474
      %2563 = vst.msk [vmem:[%s2536 + $0x139] sm:$0xff] %vm1851, %v2475
      %2564 = vst.msk [vmem:[%s2536 + $0x141] sm:$0xff] %vm1851, %v2476
      %2565 = vst.msk [vmem:[%s2536 + $0x151] sm:$0xff] %vm1851, %v2477
      %2566 = vst.msk [vmem:[%s2536 + $0x159] sm:$0xff] %vm1851, %v2478
      %2567 = vst.msk [vmem:[%s2536 + $0x169] sm:$0xff] %vm1851, %v2479
      %2568 = vst.msk [vmem:[%s2536 + $0x171] sm:$0xff] %vm1851, %v2480
      %v2569 = vld [vmem:[#allocation3] sm:$0xff]
      %v2570 = vld [vmem:[#allocation3 + $0x8] sm:$0xff]
      %v2571 = vld [vmem:[#allocation3 + $0x18] sm:$0xff]
      %v2572 = vld [vmem:[#allocation3 + $0x20] sm:$0xff]
      %v2573 = vld [vmem:[#allocation3 + $0x30] sm:$0xff]
      %v2574 = vld [vmem:[#allocation3 + $0x38] sm:$0xff]
      %v2575 = vld [vmem:[#allocation3 + $0x48] sm:$0xff]
      %v2576 = vld [vmem:[#allocation3 + $0x50] sm:$0xff]
      %v2577 = vld [vmem:[#allocation3 + $0x60] sm:$0xff]
      %v2578 = vld [vmem:[#allocation3 + $0x68] sm:$0xff]
      %v2579 = vld [vmem:[#allocation3 + $0x78] sm:$0xff]
      %v2580 = vld [vmem:[#allocation3 + $0x80] sm:$0xff]
      %v2581 = vld [vmem:[#allocation3 + $0x90] sm:$0xff]
      %v2582 = vld [vmem:[#allocation3 + $0x98] sm:$0xff]
      %v2583 = vld [vmem:[#allocation3 + $0xa8] sm:$0xff]
      %v2584 = vld [vmem:[#allocation3 + $0xb0] sm:$0xff]
      %v2585 = vld [vmem:[#allocation3 + $0xc0] sm:$0xff]
      %v2586 = vld [vmem:[#allocation3 + $0xc8] sm:$0xff]
      %v2587 = vld [vmem:[#allocation3 + $0xd8] sm:$0xff]
      %v2588 = vld [vmem:[#allocation3 + $0xe0] sm:$0xff]
      %v2589 = vld [vmem:[#allocation3 + $0xf0] sm:$0xff]
      %v2590 = vld [vmem:[#allocation3 + $0xf8] sm:$0xff]
      %v2591 = vld [vmem:[#allocation3 + $0x108] sm:$0xff]
      %v2592 = vld [vmem:[#allocation3 + $0x110] sm:$0xff]
      %v2593 = vld [vmem:[#allocation3 + $0x120] sm:$0xff]
      %v2594 = vld [vmem:[#allocation3 + $0x128] sm:$0xff]
      %v2595 = vld [vmem:[#allocation3 + $0x138] sm:$0xff]
      %v2596 = vld [vmem:[#allocation3 + $0x140] sm:$0xff]
      %v2597 = vld [vmem:[#allocation3 + $0x150] sm:$0xff]
      %v2598 = vld [vmem:[#allocation3 + $0x158] sm:$0xff]
      %v2599 = vld [vmem:[#allocation3 + $0x168] sm:$0xff]
      %v2600 = vld [vmem:[#allocation3 + $0x170] sm:$0xff]
      %v2601 = vld [vmem:[#allocation3 + $0x1] sm:$0xff]
      %v2602 = vld [vmem:[#allocation3 + $0x9] sm:$0xff]
      %v2603 = vld [vmem:[#allocation3 + $0x19] sm:$0xff]
      %v2604 = vld [vmem:[#allocation3 + $0x21] sm:$0xff]
      %v2605 = vld [vmem:[#allocation3 + $0x31] sm:$0xff]
      %v2606 = vld [vmem:[#allocation3 + $0x39] sm:$0xff]
      %v2607 = vld [vmem:[#allocation3 + $0x49] sm:$0xff]
      %v2608 = vld [vmem:[#allocation3 + $0x51] sm:$0xff]
      %v2609 = vld [vmem:[#allocation3 + $0x61] sm:$0xff]
      %v2610 = vld [vmem:[#allocation3 + $0x69] sm:$0xff]
      %v2611 = vld [vmem:[#allocation3 + $0x79] sm:$0xff]
      %v2612 = vld [vmem:[#allocation3 + $0x81] sm:$0xff]
      %v2613 = vld [vmem:[#allocation3 + $0x91] sm:$0xff]
      %v2614 = vld [vmem:[#allocation3 + $0x99] sm:$0xff]
      %v2615 = vld [vmem:[#allocation3 + $0xa9] sm:$0xff]
      %v2616 = vld [vmem:[#allocation3 + $0xb1] sm:$0xff]
      %v2617 = vld [vmem:[#allocation3 + $0xc1] sm:$0xff]
      %v2618 = vld [vmem:[#allocation3 + $0xc9] sm:$0xff]
      %v2619 = vld [vmem:[#allocation3 + $0xd9] sm:$0xff]
      %v2620 = vld [vmem:[#allocation3 + $0xe1] sm:$0xff]
      %v2621 = vld [vmem:[#allocation3 + $0xf1] sm:$0xff]
      %v2622 = vld [vmem:[#allocation3 + $0xf9] sm:$0xff]
      %v2623 = vld [vmem:[#allocation3 + $0x109] sm:$0xff]
      %v2624 = vld [vmem:[#allocation3 + $0x111] sm:$0xff]
      %v2625 = vld [vmem:[#allocation3 + $0x121] sm:$0xff]
      %v2626 = vld [vmem:[#allocation3 + $0x129] sm:$0xff]
      %v2627 = vld [vmem:[#allocation3 + $0x139] sm:$0xff]
      %v2628 = vld [vmem:[#allocation3 + $0x141] sm:$0xff]
      %v2629 = vld [vmem:[#allocation3 + $0x151] sm:$0xff]
      %v2630 = vld [vmem:[#allocation3 + $0x159] sm:$0xff]
      %v2631 = vld [vmem:[#allocation3 + $0x169] sm:$0xff]
      %v2632 = vld [vmem:[#allocation3 + $0x171] sm:$0xff]
      %v2633 = vld [vmem:[#allocation3 + $0x2] sm:$0xff]
      %v2634 = vld [vmem:[#allocation3 + $0xa] sm:$0xff]
      %v2635 = vld [vmem:[#allocation3 + $0x1a] sm:$0xff]
      %v2636 = vld [vmem:[#allocation3 + $0x22] sm:$0xff]
      %v2637 = vld [vmem:[#allocation3 + $0x32] sm:$0xff]
      %v2638 = vld [vmem:[#allocation3 + $0x3a] sm:$0xff]
      %v2639 = vld [vmem:[#allocation3 + $0x4a] sm:$0xff]
      %v2640 = vld [vmem:[#allocation3 + $0x52] sm:$0xff]
      %v2641 = vld [vmem:[#allocation3 + $0x62] sm:$0xff]
      %v2642 = vld [vmem:[#allocation3 + $0x6a] sm:$0xff]
      %v2643 = vld [vmem:[#allocation3 + $0x7a] sm:$0xff]
      %v2644 = vld [vmem:[#allocation3 + $0x82] sm:$0xff]
      %v2645 = vld [vmem:[#allocation3 + $0x92] sm:$0xff]
      %v2646 = vld [vmem:[#allocation3 + $0x9a] sm:$0xff]
      %v2647 = vld [vmem:[#allocation3 + $0xaa] sm:$0xff]
      %v2648 = vld [vmem:[#allocation3 + $0xb2] sm:$0xff]
      %v2649 = vld [vmem:[#allocation3 + $0xc2] sm:$0xff]
      %v2650 = vld [vmem:[#allocation3 + $0xca] sm:$0xff]
      %v2651 = vld [vmem:[#allocation3 + $0xda] sm:$0xff]
      %v2652 = vld [vmem:[#allocation3 + $0xe2] sm:$0xff]
      %v2653 = vld [vmem:[#allocation3 + $0xf2] sm:$0xff]
      %v2654 = vld [vmem:[#allocation3 + $0xfa] sm:$0xff]
      %v2655 = vld [vmem:[#allocation3 + $0x10a] sm:$0xff]
      %v2656 = vld [vmem:[#allocation3 + $0x112] sm:$0xff]
      %v2657 = vld [vmem:[#allocation3 + $0x122] sm:$0xff]
      %v2658 = vld [vmem:[#allocation3 + $0x12a] sm:$0xff]
      %v2659 = vld [vmem:[#allocation3 + $0x13a] sm:$0xff]
      %v2660 = vld [vmem:[#allocation3 + $0x142] sm:$0xff]
      %v2661 = vld [vmem:[#allocation3 + $0x152] sm:$0xff]
      %v2662 = vld [vmem:[#allocation3 + $0x15a] sm:$0xff]
      %v2663 = vld [vmem:[#allocation3 + $0x16a] sm:$0xff]
      %v2664 = vld [vmem:[#allocation3 + $0x172] sm:$0xff]
      %v2665 = vld [vmem:[%s2536] sm:$0xff]
      %v2666 = vld [vmem:[%s2536 + $0x8] sm:$0xff]
      %v2667 = vld [vmem:[%s2536 + $0x18] sm:$0xff]
      %v2668 = vld [vmem:[%s2536 + $0x20] sm:$0xff]
      %v2669 = vld [vmem:[%s2536 + $0x30] sm:$0xff]
      %v2670 = vld [vmem:[%s2536 + $0x38] sm:$0xff]
      %v2671 = vld [vmem:[%s2536 + $0x48] sm:$0xff]
      %v2672 = vld [vmem:[%s2536 + $0x50] sm:$0xff]
      %v2673 = vld [vmem:[%s2536 + $0x60] sm:$0xff]
      %v2674 = vld [vmem:[%s2536 + $0x68] sm:$0xff]
      %v2675 = vld [vmem:[%s2536 + $0x78] sm:$0xff]
      %v2676 = vld [vmem:[%s2536 + $0x80] sm:$0xff]
      %v2677 = vld [vmem:[%s2536 + $0x90] sm:$0xff]
      %v2678 = vld [vmem:[%s2536 + $0x98] sm:$0xff]
      %v2679 = vld [vmem:[%s2536 + $0xa8] sm:$0xff]
      %v2680 = vld [vmem:[%s2536 + $0xb0] sm:$0xff]
      %v2681 = vld [vmem:[%s2536 + $0xc0] sm:$0xff]
      %v2682 = vld [vmem:[%s2536 + $0xc8] sm:$0xff]
      %v2683 = vld [vmem:[%s2536 + $0xd8] sm:$0xff]
      %v2684 = vld [vmem:[%s2536 + $0xe0] sm:$0xff]
      %v2685 = vld [vmem:[%s2536 + $0xf0] sm:$0xff]
      %v2686 = vld [vmem:[%s2536 + $0xf8] sm:$0xff]
      %v2687 = vld [vmem:[%s2536 + $0x108] sm:$0xff]
      %v2688 = vld [vmem:[%s2536 + $0x110] sm:$0xff]
      %v2689 = vld [vmem:[%s2536 + $0x120] sm:$0xff]
      %v2690 = vld [vmem:[%s2536 + $0x128] sm:$0xff]
      %v2691 = vld [vmem:[%s2536 + $0x138] sm:$0xff]
      %v2692 = vld [vmem:[%s2536 + $0x140] sm:$0xff]
      %v2693 = vld [vmem:[%s2536 + $0x150] sm:$0xff]
      %v2694 = vld [vmem:[%s2536 + $0x158] sm:$0xff]
      %v2695 = vld [vmem:[%s2536 + $0x168] sm:$0xff]
      %v2696 = vld [vmem:[%s2536 + $0x170] sm:$0xff]
      %v2697 = vld [vmem:[%s2536 + $0x1] sm:$0xff]
      %v2698 = vld [vmem:[%s2536 + $0x9] sm:$0xff]
      %v2699 = vld [vmem:[%s2536 + $0x19] sm:$0xff]
      %v2700 = vld [vmem:[%s2536 + $0x21] sm:$0xff]
      %v2701 = vld [vmem:[%s2536 + $0x31] sm:$0xff]
      %v2702 = vld [vmem:[%s2536 + $0x39] sm:$0xff]
      %v2703 = vld [vmem:[%s2536 + $0x49] sm:$0xff]
      %v2704 = vld [vmem:[%s2536 + $0x51] sm:$0xff]
      %v2705 = vld [vmem:[%s2536 + $0x61] sm:$0xff]
      %v2706 = vld [vmem:[%s2536 + $0x69] sm:$0xff]
      %v2707 = vld [vmem:[%s2536 + $0x79] sm:$0xff]
      %v2708 = vld [vmem:[%s2536 + $0x81] sm:$0xff]
      %v2709 = vld [vmem:[%s2536 + $0x91] sm:$0xff]
      %v2710 = vld [vmem:[%s2536 + $0x99] sm:$0xff]
      %v2711 = vld [vmem:[%s2536 + $0xa9] sm:$0xff]
      %v2712 = vld [vmem:[%s2536 + $0xb1] sm:$0xff]
      %v2713 = vld [vmem:[%s2536 + $0xc1] sm:$0xff]
      %v2714 = vld [vmem:[%s2536 + $0xc9] sm:$0xff]
      %v2715 = vld [vmem:[%s2536 + $0xd9] sm:$0xff]
      %v2716 = vld [vmem:[%s2536 + $0xe1] sm:$0xff]
      %v2717 = vld [vmem:[%s2536 + $0xf1] sm:$0xff]
      %v2718 = vld [vmem:[%s2536 + $0xf9] sm:$0xff]
      %v2719 = vld [vmem:[%s2536 + $0x109] sm:$0xff]
      %v2720 = vld [vmem:[%s2536 + $0x111] sm:$0xff]
      %v2721 = vld [vmem:[%s2536 + $0x121] sm:$0xff]
      %v2722 = vld [vmem:[%s2536 + $0x129] sm:$0xff]
      %v2723 = vld [vmem:[%s2536 + $0x139] sm:$0xff]
      %v2724 = vld [vmem:[%s2536 + $0x141] sm:$0xff]
      %v2725 = vld [vmem:[%s2536 + $0x151] sm:$0xff]
      %v2726 = vld [vmem:[%s2536 + $0x159] sm:$0xff]
      %v2727 = vld [vmem:[%s2536 + $0x169] sm:$0xff]
      %v2728 = vld [vmem:[%s2536 + $0x171] sm:$0xff]
      %v2729 = vld [vmem:[%s2536 + $0x2] sm:$0xff]
      %v2730 = vld [vmem:[%s2536 + $0xa] sm:$0xff]
      %v2731 = vld [vmem:[%s2536 + $0x1a] sm:$0xff]
      %v2732 = vld [vmem:[%s2536 + $0x22] sm:$0xff]
      %v2733 = vld [vmem:[%s2536 + $0x32] sm:$0xff]
      %v2734 = vld [vmem:[%s2536 + $0x3a] sm:$0xff]
      %v2735 = vld [vmem:[%s2536 + $0x4a] sm:$0xff]
      %v2736 = vld [vmem:[%s2536 + $0x52] sm:$0xff]
      %v2737 = vld [vmem:[%s2536 + $0x62] sm:$0xff]
      %v2738 = vld [vmem:[%s2536 + $0x6a] sm:$0xff]
      %v2739 = vld [vmem:[%s2536 + $0x7a] sm:$0xff]
      %v2740 = vld [vmem:[%s2536 + $0x82] sm:$0xff]
      %v2741 = vld [vmem:[%s2536 + $0x92] sm:$0xff]
      %v2742 = vld [vmem:[%s2536 + $0x9a] sm:$0xff]
      %v2743 = vld [vmem:[%s2536 + $0xaa] sm:$0xff]
      %v2744 = vld [vmem:[%s2536 + $0xb2] sm:$0xff]
      %v2745 = vld [vmem:[%s2536 + $0xc2] sm:$0xff]
      %v2746 = vld [vmem:[%s2536 + $0xca] sm:$0xff]
      %v2747 = vld [vmem:[%s2536 + $0xda] sm:$0xff]
      %v2748 = vld [vmem:[%s2536 + $0xe2] sm:$0xff]
      %v2749 = vld [vmem:[%s2536 + $0xf2] sm:$0xff]
      %v2750 = vld [vmem:[%s2536 + $0xfa] sm:$0xff]
      %v2751 = vld [vmem:[%s2536 + $0x10a] sm:$0xff]
      %v2752 = vld [vmem:[%s2536 + $0x112] sm:$0xff]
      %v2753 = vld [vmem:[%s2536 + $0x122] sm:$0xff]
      %v2754 = vld [vmem:[%s2536 + $0x12a] sm:$0xff]
      %v2755 = vld [vmem:[%s2536 + $0x13a] sm:$0xff]
      %v2756 = vld [vmem:[%s2536 + $0x142] sm:$0xff]
      %v2757 = vld [vmem:[%s2536 + $0x152] sm:$0xff]
      %v2758 = vld [vmem:[%s2536 + $0x15a] sm:$0xff]
      %v2759 = vld [vmem:[%s2536 + $0x16a] sm:$0xff]
      %v2760 = vld [vmem:[%s2536 + $0x172] sm:$0xff]
      %s2761 = scalar_lea.vmem [#allocation3], 48
      %v2762 = vld [vmem:[%s2761] sm:$0xff]
      %v2763 = vld [vmem:[%s2761 + $0x8] sm:$0xff]
      %v2764 = vld [vmem:[%s2761 + $0x18] sm:$0xff]
      %v2765 = vld [vmem:[%s2761 + $0x20] sm:$0xff]
      %v2766 = vld [vmem:[%s2761 + $0x30] sm:$0xff]
      %v2767 = vld [vmem:[%s2761 + $0x38] sm:$0xff]
      %v2768 = vld [vmem:[%s2761 + $0x48] sm:$0xff]
      %v2769 = vld [vmem:[%s2761 + $0x50] sm:$0xff]
      %v2770 = vld [vmem:[%s2761 + $0x60] sm:$0xff]
      %v2771 = vld [vmem:[%s2761 + $0x68] sm:$0xff]
      %v2772 = vld [vmem:[%s2761 + $0x78] sm:$0xff]
      %v2773 = vld [vmem:[%s2761 + $0x80] sm:$0xff]
      %v2774 = vld [vmem:[%s2761 + $0x90] sm:$0xff]
      %v2775 = vld [vmem:[%s2761 + $0x98] sm:$0xff]
      %v2776 = vld [vmem:[%s2761 + $0xa8] sm:$0xff]
      %v2777 = vld [vmem:[%s2761 + $0xb0] sm:$0xff]
      %v2778 = vld [vmem:[%s2761 + $0xc0] sm:$0xff]
      %v2779 = vld [vmem:[%s2761 + $0xc8] sm:$0xff]
      %v2780 = vld [vmem:[%s2761 + $0xd8] sm:$0xff]
      %v2781 = vld [vmem:[%s2761 + $0xe0] sm:$0xff]
      %v2782 = vld [vmem:[%s2761 + $0xf0] sm:$0xff]
      %v2783 = vld [vmem:[%s2761 + $0xf8] sm:$0xff]
      %v2784 = vld [vmem:[%s2761 + $0x108] sm:$0xff]
      %v2785 = vld [vmem:[%s2761 + $0x110] sm:$0xff]
      %v2786 = vld [vmem:[%s2761 + $0x120] sm:$0xff]
      %v2787 = vld [vmem:[%s2761 + $0x128] sm:$0xff]
      %v2788 = vld [vmem:[%s2761 + $0x138] sm:$0xff]
      %v2789 = vld [vmem:[%s2761 + $0x140] sm:$0xff]
      %v2790 = vld [vmem:[%s2761 + $0x150] sm:$0xff]
      %v2791 = vld [vmem:[%s2761 + $0x158] sm:$0xff]
      %v2792 = vld [vmem:[%s2761 + $0x168] sm:$0xff]
      %v2793 = vld [vmem:[%s2761 + $0x170] sm:$0xff]
      %v2794 = vld [vmem:[%s2761 + $0x1] sm:$0xff]
      %v2795 = vld [vmem:[%s2761 + $0x9] sm:$0xff]
      %v2796 = vld [vmem:[%s2761 + $0x19] sm:$0xff]
      %v2797 = vld [vmem:[%s2761 + $0x21] sm:$0xff]
      %v2798 = vld [vmem:[%s2761 + $0x31] sm:$0xff]
      %v2799 = vld [vmem:[%s2761 + $0x39] sm:$0xff]
      %v2800 = vld [vmem:[%s2761 + $0x49] sm:$0xff]
      %v2801 = vld [vmem:[%s2761 + $0x51] sm:$0xff]
      %v2802 = vld [vmem:[%s2761 + $0x61] sm:$0xff]
      %v2803 = vld [vmem:[%s2761 + $0x69] sm:$0xff]
      %v2804 = vld [vmem:[%s2761 + $0x79] sm:$0xff]
      %v2805 = vld [vmem:[%s2761 + $0x81] sm:$0xff]
      %v2806 = vld [vmem:[%s2761 + $0x91] sm:$0xff]
      %v2807 = vld [vmem:[%s2761 + $0x99] sm:$0xff]
      %v2808 = vld [vmem:[%s2761 + $0xa9] sm:$0xff]
      %v2809 = vld [vmem:[%s2761 + $0xb1] sm:$0xff]
      %v2810 = vld [vmem:[%s2761 + $0xc1] sm:$0xff]
      %v2811 = vld [vmem:[%s2761 + $0xc9] sm:$0xff]
      %v2812 = vld [vmem:[%s2761 + $0xd9] sm:$0xff]
      %v2813 = vld [vmem:[%s2761 + $0xe1] sm:$0xff]
      %v2814 = vld [vmem:[%s2761 + $0xf1] sm:$0xff]
      %v2815 = vld [vmem:[%s2761 + $0xf9] sm:$0xff]
      %v2816 = vld [vmem:[%s2761 + $0x109] sm:$0xff]
      %v2817 = vld [vmem:[%s2761 + $0x111] sm:$0xff]
      %v2818 = vld [vmem:[%s2761 + $0x121] sm:$0xff]
      %v2819 = vld [vmem:[%s2761 + $0x129] sm:$0xff]
      %v2820 = vld [vmem:[%s2761 + $0x139] sm:$0xff]
      %v2821 = vld [vmem:[%s2761 + $0x141] sm:$0xff]
      %v2822 = vld [vmem:[%s2761 + $0x151] sm:$0xff]
      %v2823 = vld [vmem:[%s2761 + $0x159] sm:$0xff]
      %v2824 = vld [vmem:[%s2761 + $0x169] sm:$0xff]
      %v2825 = vld [vmem:[%s2761 + $0x171] sm:$0xff]
      %v2826 = vld [vmem:[%s2761 + $0x2] sm:$0xff]
      %v2827 = vld [vmem:[%s2761 + $0xa] sm:$0xff]
      %v2828 = vld [vmem:[%s2761 + $0x1a] sm:$0xff]
      %v2829 = vld [vmem:[%s2761 + $0x22] sm:$0xff]
      %v2830 = vld [vmem:[%s2761 + $0x32] sm:$0xff]
      %v2831 = vld [vmem:[%s2761 + $0x3a] sm:$0xff]
      %v2832 = vld [vmem:[%s2761 + $0x4a] sm:$0xff]
      %v2833 = vld [vmem:[%s2761 + $0x52] sm:$0xff]
      %v2834 = vld [vmem:[%s2761 + $0x62] sm:$0xff]
      %v2835 = vld [vmem:[%s2761 + $0x6a] sm:$0xff]
      %v2836 = vld [vmem:[%s2761 + $0x7a] sm:$0xff]
      %v2837 = vld [vmem:[%s2761 + $0x82] sm:$0xff]
      %v2838 = vld [vmem:[%s2761 + $0x92] sm:$0xff]
      %v2839 = vld [vmem:[%s2761 + $0x9a] sm:$0xff]
      %v2840 = vld [vmem:[%s2761 + $0xaa] sm:$0xff]
      %v2841 = vld [vmem:[%s2761 + $0xb2] sm:$0xff]
      %v2842 = vld [vmem:[%s2761 + $0xc2] sm:$0xff]
      %v2843 = vld [vmem:[%s2761 + $0xca] sm:$0xff]
      %v2844 = vld [vmem:[%s2761 + $0xda] sm:$0xff]
      %v2845 = vld [vmem:[%s2761 + $0xe2] sm:$0xff]
      %v2846 = vld [vmem:[%s2761 + $0xf2] sm:$0xff]
      %v2847 = vld [vmem:[%s2761 + $0xfa] sm:$0xff]
      %v2848 = vld [vmem:[%s2761 + $0x10a] sm:$0xff]
      %v2849 = vld [vmem:[%s2761 + $0x112] sm:$0xff]
      %v2850 = vld [vmem:[%s2761 + $0x122] sm:$0xff]
      %v2851 = vld [vmem:[%s2761 + $0x12a] sm:$0xff]
      %v2852 = vld [vmem:[%s2761 + $0x13a] sm:$0xff]
      %v2853 = vld [vmem:[%s2761 + $0x142] sm:$0xff]
      %v2854 = vld [vmem:[%s2761 + $0x152] sm:$0xff]
      %v2855 = vld [vmem:[%s2761 + $0x15a] sm:$0xff]
      %v2856 = vld [vmem:[%s2761 + $0x16a] sm:$0xff]
      %v2857 = vld [vmem:[%s2761 + $0x172] sm:$0xff]
      %2890 = vrot.lane.b32.xlu0 %v2601, 8
      %v2891 = vpop.permute.xlu0 %2890
      %2892 = vrot.lane.b32.xlu0 %v2602, 8
      %v2893 = vpop.permute.xlu0 %2892
      %2894 = vrot.lane.b32.xlu0 %v2603, 8
      %v2895 = vpop.permute.xlu0 %2894
      %2896 = vrot.lane.b32.xlu0 %v2604, 8
      %v2897 = vpop.permute.xlu0 %2896
      %2898 = vrot.lane.b32.xlu0 %v2605, 8
      %v2899 = vpop.permute.xlu0 %2898
      %2900 = vrot.lane.b32.xlu0 %v2606, 8
      %v2901 = vpop.permute.xlu0 %2900
      %2902 = vrot.lane.b32.xlu0 %v2607, 8
      %v2903 = vpop.permute.xlu0 %2902
      %2904 = vrot.lane.b32.xlu0 %v2608, 8
      %v2905 = vpop.permute.xlu0 %2904
      %2906 = vrot.lane.b32.xlu0 %v2609, 8
      %v2907 = vpop.permute.xlu0 %2906
      %2908 = vrot.lane.b32.xlu0 %v2610, 8
      %v2909 = vpop.permute.xlu0 %2908
      %2910 = vrot.lane.b32.xlu0 %v2611, 8
      %v2911 = vpop.permute.xlu0 %2910
      %2912 = vrot.lane.b32.xlu0 %v2612, 8
      %v2913 = vpop.permute.xlu0 %2912
      %2914 = vrot.lane.b32.xlu0 %v2613, 8
      %v2915 = vpop.permute.xlu0 %2914
      %2916 = vrot.lane.b32.xlu0 %v2614, 8
      %v2917 = vpop.permute.xlu0 %2916
      %2918 = vrot.lane.b32.xlu0 %v2615, 8
      %v2919 = vpop.permute.xlu0 %2918
      %2920 = vrot.lane.b32.xlu0 %v2616, 8
      %v2921 = vpop.permute.xlu0 %2920
      %2922 = vrot.lane.b32.xlu0 %v2617, 8
      %v2923 = vpop.permute.xlu0 %2922
      %2924 = vrot.lane.b32.xlu0 %v2618, 8
      %v2925 = vpop.permute.xlu0 %2924
      %2926 = vrot.lane.b32.xlu0 %v2619, 8
      %v2927 = vpop.permute.xlu0 %2926
      %2928 = vrot.lane.b32.xlu0 %v2620, 8
      %v2929 = vpop.permute.xlu0 %2928
      %2930 = vrot.lane.b32.xlu0 %v2621, 8
      %v2931 = vpop.permute.xlu0 %2930
      %2932 = vrot.lane.b32.xlu0 %v2622, 8
      %v2933 = vpop.permute.xlu0 %2932
      %2934 = vrot.lane.b32.xlu0 %v2623, 8
      %v2935 = vpop.permute.xlu0 %2934
      %2936 = vrot.lane.b32.xlu0 %v2624, 8
      %v2937 = vpop.permute.xlu0 %2936
      %2938 = vrot.lane.b32.xlu0 %v2625, 8
      %v2939 = vpop.permute.xlu0 %2938
      %2940 = vrot.lane.b32.xlu0 %v2626, 8
      %v2941 = vpop.permute.xlu0 %2940
      %2942 = vrot.lane.b32.xlu0 %v2627, 8
      %v2943 = vpop.permute.xlu0 %2942
      %2944 = vrot.lane.b32.xlu0 %v2628, 8
      %v2945 = vpop.permute.xlu0 %2944
      %2946 = vrot.lane.b32.xlu0 %v2629, 8
      %v2947 = vpop.permute.xlu0 %2946
      %2948 = vrot.lane.b32.xlu0 %v2630, 8
      %v2949 = vpop.permute.xlu0 %2948
      %2950 = vrot.lane.b32.xlu0 %v2631, 8
      %v2951 = vpop.permute.xlu0 %2950
      %2952 = vrot.lane.b32.xlu0 %v2632, 8
      %v2953 = vpop.permute.xlu0 %2952
      %3018 = vrot.lane.b32.xlu0 %v2633, 16
      %v3019 = vpop.permute.xlu0 %3018
      %3020 = vrot.lane.b32.xlu0 %v2634, 16
      %v3021 = vpop.permute.xlu0 %3020
      %3022 = vrot.lane.b32.xlu0 %v2635, 16
      %v3023 = vpop.permute.xlu0 %3022
      %3024 = vrot.lane.b32.xlu0 %v2636, 16
      %v3025 = vpop.permute.xlu0 %3024
      %3026 = vrot.lane.b32.xlu0 %v2637, 16
      %v3027 = vpop.permute.xlu0 %3026
      %3028 = vrot.lane.b32.xlu0 %v2638, 16
      %v3029 = vpop.permute.xlu0 %3028
      %3030 = vrot.lane.b32.xlu0 %v2639, 16
      %v3031 = vpop.permute.xlu0 %3030
      %3032 = vrot.lane.b32.xlu0 %v2640, 16
      %v3033 = vpop.permute.xlu0 %3032
      %3034 = vrot.lane.b32.xlu0 %v2641, 16
      %v3035 = vpop.permute.xlu0 %3034
      %3036 = vrot.lane.b32.xlu0 %v2642, 16
      %v3037 = vpop.permute.xlu0 %3036
      %3038 = vrot.lane.b32.xlu0 %v2643, 16
      %v3039 = vpop.permute.xlu0 %3038
      %3040 = vrot.lane.b32.xlu0 %v2644, 16
      %v3041 = vpop.permute.xlu0 %3040
      %3042 = vrot.lane.b32.xlu0 %v2645, 16
      %v3043 = vpop.permute.xlu0 %3042
      %3044 = vrot.lane.b32.xlu0 %v2646, 16
      %v3045 = vpop.permute.xlu0 %3044
      %3046 = vrot.lane.b32.xlu0 %v2647, 16
      %v3047 = vpop.permute.xlu0 %3046
      %3048 = vrot.lane.b32.xlu0 %v2648, 16
      %v3049 = vpop.permute.xlu0 %3048
      %3050 = vrot.lane.b32.xlu0 %v2649, 16
      %v3051 = vpop.permute.xlu0 %3050
      %3052 = vrot.lane.b32.xlu0 %v2650, 16
      %v3053 = vpop.permute.xlu0 %3052
      %3054 = vrot.lane.b32.xlu0 %v2651, 16
      %v3055 = vpop.permute.xlu0 %3054
      %3056 = vrot.lane.b32.xlu0 %v2652, 16
      %v3057 = vpop.permute.xlu0 %3056
      %3058 = vrot.lane.b32.xlu0 %v2653, 16
      %v3059 = vpop.permute.xlu0 %3058
      %3060 = vrot.lane.b32.xlu0 %v2654, 16
      %v3061 = vpop.permute.xlu0 %3060
      %3062 = vrot.lane.b32.xlu0 %v2655, 16
      %v3063 = vpop.permute.xlu0 %3062
      %3064 = vrot.lane.b32.xlu0 %v2656, 16
      %v3065 = vpop.permute.xlu0 %3064
      %3066 = vrot.lane.b32.xlu0 %v2657, 16
      %v3067 = vpop.permute.xlu0 %3066
      %3068 = vrot.lane.b32.xlu0 %v2658, 16
      %v3069 = vpop.permute.xlu0 %3068
      %3070 = vrot.lane.b32.xlu0 %v2659, 16
      %v3071 = vpop.permute.xlu0 %3070
      %3072 = vrot.lane.b32.xlu0 %v2660, 16
      %v3073 = vpop.permute.xlu0 %3072
      %3074 = vrot.lane.b32.xlu0 %v2661, 16
      %v3075 = vpop.permute.xlu0 %3074
      %3076 = vrot.lane.b32.xlu0 %v2662, 16
      %v3077 = vpop.permute.xlu0 %3076
      %3078 = vrot.lane.b32.xlu0 %v2663, 16
      %v3079 = vpop.permute.xlu0 %3078
      %3080 = vrot.lane.b32.xlu0 %v2664, 16
      %v3081 = vpop.permute.xlu0 %3080
      %3146 = vrot.lane.b32.xlu0 %v2665, 24
      %v3147 = vpop.permute.xlu0 %3146
      %3148 = vrot.lane.b32.xlu0 %v2666, 24
      %v3149 = vpop.permute.xlu0 %3148
      %3150 = vrot.lane.b32.xlu0 %v2667, 24
      %v3151 = vpop.permute.xlu0 %3150
      %3152 = vrot.lane.b32.xlu0 %v2668, 24
      %v3153 = vpop.permute.xlu0 %3152
      %3154 = vrot.lane.b32.xlu0 %v2669, 24
      %v3155 = vpop.permute.xlu0 %3154
      %3156 = vrot.lane.b32.xlu0 %v2670, 24
      %v3157 = vpop.permute.xlu0 %3156
      %3158 = vrot.lane.b32.xlu0 %v2671, 24
      %v3159 = vpop.permute.xlu0 %3158
      %3160 = vrot.lane.b32.xlu0 %v2672, 24
      %v3161 = vpop.permute.xlu0 %3160
      %3162 = vrot.lane.b32.xlu0 %v2673, 24
      %v3163 = vpop.permute.xlu0 %3162
      %3164 = vrot.lane.b32.xlu0 %v2674, 24
      %v3165 = vpop.permute.xlu0 %3164
      %3166 = vrot.lane.b32.xlu0 %v2675, 24
      %v3167 = vpop.permute.xlu0 %3166
      %3168 = vrot.lane.b32.xlu0 %v2676, 24
      %v3169 = vpop.permute.xlu0 %3168
      %3170 = vrot.lane.b32.xlu0 %v2677, 24
      %v3171 = vpop.permute.xlu0 %3170
      %3172 = vrot.lane.b32.xlu0 %v2678, 24
      %v3173 = vpop.permute.xlu0 %3172
      %3174 = vrot.lane.b32.xlu0 %v2679, 24
      %v3175 = vpop.permute.xlu0 %3174
      %3176 = vrot.lane.b32.xlu0 %v2680, 24
      %v3177 = vpop.permute.xlu0 %3176
      %3178 = vrot.lane.b32.xlu0 %v2681, 24
      %v3179 = vpop.permute.xlu0 %3178
      %3180 = vrot.lane.b32.xlu0 %v2682, 24
      %v3181 = vpop.permute.xlu0 %3180
      %3182 = vrot.lane.b32.xlu0 %v2683, 24
      %v3183 = vpop.permute.xlu0 %3182
      %3184 = vrot.lane.b32.xlu0 %v2684, 24
      %v3185 = vpop.permute.xlu0 %3184
      %3186 = vrot.lane.b32.xlu0 %v2685, 24
      %v3187 = vpop.permute.xlu0 %3186
      %3188 = vrot.lane.b32.xlu0 %v2686, 24
      %v3189 = vpop.permute.xlu0 %3188
      %3190 = vrot.lane.b32.xlu0 %v2687, 24
      %v3191 = vpop.permute.xlu0 %3190
      %3192 = vrot.lane.b32.xlu0 %v2688, 24
      %v3193 = vpop.permute.xlu0 %3192
      %3194 = vrot.lane.b32.xlu0 %v2689, 24
      %v3195 = vpop.permute.xlu0 %3194
      %3196 = vrot.lane.b32.xlu0 %v2690, 24
      %v3197 = vpop.permute.xlu0 %3196
      %3198 = vrot.lane.b32.xlu0 %v2691, 24
      %v3199 = vpop.permute.xlu0 %3198
      %3200 = vrot.lane.b32.xlu0 %v2692, 24
      %v3201 = vpop.permute.xlu0 %3200
      %3202 = vrot.lane.b32.xlu0 %v2693, 24
      %v3203 = vpop.permute.xlu0 %3202
      %3204 = vrot.lane.b32.xlu0 %v2694, 24
      %v3205 = vpop.permute.xlu0 %3204
      %3206 = vrot.lane.b32.xlu0 %v2695, 24
      %v3207 = vpop.permute.xlu0 %3206
      %3208 = vrot.lane.b32.xlu0 %v2696, 24
      %v3209 = vpop.permute.xlu0 %3208
      %3274 = vrot.lane.b32.xlu0 %v2697, 32
      %v3275 = vpop.permute.xlu0 %3274
      %3276 = vrot.lane.b32.xlu0 %v2698, 32
      %v3277 = vpop.permute.xlu0 %3276
      %3278 = vrot.lane.b32.xlu0 %v2699, 32
      %v3279 = vpop.permute.xlu0 %3278
      %3280 = vrot.lane.b32.xlu0 %v2700, 32
      %v3281 = vpop.permute.xlu0 %3280
      %3282 = vrot.lane.b32.xlu0 %v2701, 32
      %v3283 = vpop.permute.xlu0 %3282
      %3284 = vrot.lane.b32.xlu0 %v2702, 32
      %v3285 = vpop.permute.xlu0 %3284
      %3286 = vrot.lane.b32.xlu0 %v2703, 32
      %v3287 = vpop.permute.xlu0 %3286
      %3288 = vrot.lane.b32.xlu0 %v2704, 32
      %v3289 = vpop.permute.xlu0 %3288
      %3290 = vrot.lane.b32.xlu0 %v2705, 32
      %v3291 = vpop.permute.xlu0 %3290
      %3292 = vrot.lane.b32.xlu0 %v2706, 32
      %v3293 = vpop.permute.xlu0 %3292
      %3294 = vrot.lane.b32.xlu0 %v2707, 32
      %v3295 = vpop.permute.xlu0 %3294
      %3296 = vrot.lane.b32.xlu0 %v2708, 32
      %v3297 = vpop.permute.xlu0 %3296
      %3298 = vrot.lane.b32.xlu0 %v2709, 32
      %v3299 = vpop.permute.xlu0 %3298
      %3300 = vrot.lane.b32.xlu0 %v2710, 32
      %v3301 = vpop.permute.xlu0 %3300
      %3302 = vrot.lane.b32.xlu0 %v2711, 32
      %v3303 = vpop.permute.xlu0 %3302
      %3304 = vrot.lane.b32.xlu0 %v2712, 32
      %v3305 = vpop.permute.xlu0 %3304
      %3306 = vrot.lane.b32.xlu0 %v2713, 32
      %v3307 = vpop.permute.xlu0 %3306
      %3308 = vrot.lane.b32.xlu0 %v2714, 32
      %v3309 = vpop.permute.xlu0 %3308
      %3310 = vrot.lane.b32.xlu0 %v2715, 32
      %v3311 = vpop.permute.xlu0 %3310
      %3312 = vrot.lane.b32.xlu0 %v2716, 32
      %v3313 = vpop.permute.xlu0 %3312
      %3314 = vrot.lane.b32.xlu0 %v2717, 32
      %v3315 = vpop.permute.xlu0 %3314
      %3316 = vrot.lane.b32.xlu0 %v2718, 32
      %v3317 = vpop.permute.xlu0 %3316
      %3318 = vrot.lane.b32.xlu0 %v2719, 32
      %v3319 = vpop.permute.xlu0 %3318
      %3320 = vrot.lane.b32.xlu0 %v2720, 32
      %v3321 = vpop.permute.xlu0 %3320
      %3322 = vrot.lane.b32.xlu0 %v2721, 32
      %v3323 = vpop.permute.xlu0 %3322
      %3324 = vrot.lane.b32.xlu0 %v2722, 32
      %v3325 = vpop.permute.xlu0 %3324
      %3326 = vrot.lane.b32.xlu0 %v2723, 32
      %v3327 = vpop.permute.xlu0 %3326
      %3328 = vrot.lane.b32.xlu0 %v2724, 32
      %v3329 = vpop.permute.xlu0 %3328
      %3330 = vrot.lane.b32.xlu0 %v2725, 32
      %v3331 = vpop.permute.xlu0 %3330
      %3332 = vrot.lane.b32.xlu0 %v2726, 32
      %v3333 = vpop.permute.xlu0 %3332
      %3334 = vrot.lane.b32.xlu0 %v2727, 32
      %v3335 = vpop.permute.xlu0 %3334
      %3336 = vrot.lane.b32.xlu0 %v2728, 32
      %v3337 = vpop.permute.xlu0 %3336
      %3402 = vrot.lane.b32.xlu0 %v2729, 40
      %v3403 = vpop.permute.xlu0 %3402
      %3404 = vrot.lane.b32.xlu0 %v2730, 40
      %v3405 = vpop.permute.xlu0 %3404
      %3406 = vrot.lane.b32.xlu0 %v2731, 40
      %v3407 = vpop.permute.xlu0 %3406
      %3408 = vrot.lane.b32.xlu0 %v2732, 40
      %v3409 = vpop.permute.xlu0 %3408
      %3410 = vrot.lane.b32.xlu0 %v2733, 40
      %v3411 = vpop.permute.xlu0 %3410
      %3412 = vrot.lane.b32.xlu0 %v2734, 40
      %v3413 = vpop.permute.xlu0 %3412
      %3414 = vrot.lane.b32.xlu0 %v2735, 40
      %v3415 = vpop.permute.xlu0 %3414
      %3416 = vrot.lane.b32.xlu0 %v2736, 40
      %v3417 = vpop.permute.xlu0 %3416
      %3418 = vrot.lane.b32.xlu0 %v2737, 40
      %v3419 = vpop.permute.xlu0 %3418
      %3420 = vrot.lane.b32.xlu0 %v2738, 40
      %v3421 = vpop.permute.xlu0 %3420
      %3422 = vrot.lane.b32.xlu0 %v2739, 40
      %v3423 = vpop.permute.xlu0 %3422
      %3424 = vrot.lane.b32.xlu0 %v2740, 40
      %v3425 = vpop.permute.xlu0 %3424
      %3426 = vrot.lane.b32.xlu0 %v2741, 40
      %v3427 = vpop.permute.xlu0 %3426
      %3428 = vrot.lane.b32.xlu0 %v2742, 40
      %v3429 = vpop.permute.xlu0 %3428
      %3430 = vrot.lane.b32.xlu0 %v2743, 40
      %v3431 = vpop.permute.xlu0 %3430
      %3432 = vrot.lane.b32.xlu0 %v2744, 40
      %v3433 = vpop.permute.xlu0 %3432
      %3434 = vrot.lane.b32.xlu0 %v2745, 40
      %v3435 = vpop.permute.xlu0 %3434
      %3436 = vrot.lane.b32.xlu0 %v2746, 40
      %v3437 = vpop.permute.xlu0 %3436
      %3438 = vrot.lane.b32.xlu0 %v2747, 40
      %v3439 = vpop.permute.xlu0 %3438
      %3440 = vrot.lane.b32.xlu0 %v2748, 40
      %v3441 = vpop.permute.xlu0 %3440
      %3442 = vrot.lane.b32.xlu0 %v2749, 40
      %v3443 = vpop.permute.xlu0 %3442
      %3444 = vrot.lane.b32.xlu0 %v2750, 40
      %v3445 = vpop.permute.xlu0 %3444
      %3446 = vrot.lane.b32.xlu0 %v2751, 40
      %v3447 = vpop.permute.xlu0 %3446
      %3448 = vrot.lane.b32.xlu0 %v2752, 40
      %v3449 = vpop.permute.xlu0 %3448
      %3450 = vrot.lane.b32.xlu0 %v2753, 40
      %v3451 = vpop.permute.xlu0 %3450
      %3452 = vrot.lane.b32.xlu0 %v2754, 40
      %v3453 = vpop.permute.xlu0 %3452
      %3454 = vrot.lane.b32.xlu0 %v2755, 40
      %v3455 = vpop.permute.xlu0 %3454
      %3456 = vrot.lane.b32.xlu0 %v2756, 40
      %v3457 = vpop.permute.xlu0 %3456
      %3458 = vrot.lane.b32.xlu0 %v2757, 40
      %v3459 = vpop.permute.xlu0 %3458
      %3460 = vrot.lane.b32.xlu0 %v2758, 40
      %v3461 = vpop.permute.xlu0 %3460
      %3462 = vrot.lane.b32.xlu0 %v2759, 40
      %v3463 = vpop.permute.xlu0 %3462
      %3464 = vrot.lane.b32.xlu0 %v2760, 40
      %v3465 = vpop.permute.xlu0 %3464
      %3530 = vrot.lane.b32.xlu0 %v2762, 48
      %v3531 = vpop.permute.xlu0 %3530
      %3532 = vrot.lane.b32.xlu0 %v2763, 48
      %v3533 = vpop.permute.xlu0 %3532
      %3534 = vrot.lane.b32.xlu0 %v2764, 48
      %v3535 = vpop.permute.xlu0 %3534
      %3536 = vrot.lane.b32.xlu0 %v2765, 48
      %v3537 = vpop.permute.xlu0 %3536
      %3538 = vrot.lane.b32.xlu0 %v2766, 48
      %v3539 = vpop.permute.xlu0 %3538
      %3540 = vrot.lane.b32.xlu0 %v2767, 48
      %v3541 = vpop.permute.xlu0 %3540
      %3542 = vrot.lane.b32.xlu0 %v2768, 48
      %v3543 = vpop.permute.xlu0 %3542
      %3544 = vrot.lane.b32.xlu0 %v2769, 48
      %v3545 = vpop.permute.xlu0 %3544
      %3546 = vrot.lane.b32.xlu0 %v2770, 48
      %v3547 = vpop.permute.xlu0 %3546
      %3548 = vrot.lane.b32.xlu0 %v2771, 48
      %v3549 = vpop.permute.xlu0 %3548
      %3550 = vrot.lane.b32.xlu0 %v2772, 48
      %v3551 = vpop.permute.xlu0 %3550
      %3552 = vrot.lane.b32.xlu0 %v2773, 48
      %v3553 = vpop.permute.xlu0 %3552
      %3554 = vrot.lane.b32.xlu0 %v2774, 48
      %v3555 = vpop.permute.xlu0 %3554
      %3556 = vrot.lane.b32.xlu0 %v2775, 48
      %v3557 = vpop.permute.xlu0 %3556
      %3558 = vrot.lane.b32.xlu0 %v2776, 48
      %v3559 = vpop.permute.xlu0 %3558
      %3560 = vrot.lane.b32.xlu0 %v2777, 48
      %v3561 = vpop.permute.xlu0 %3560
      %3562 = vrot.lane.b32.xlu0 %v2778, 48
      %v3563 = vpop.permute.xlu0 %3562
      %3564 = vrot.lane.b32.xlu0 %v2779, 48
      %v3565 = vpop.permute.xlu0 %3564
      %3566 = vrot.lane.b32.xlu0 %v2780, 48
      %v3567 = vpop.permute.xlu0 %3566
      %3568 = vrot.lane.b32.xlu0 %v2781, 48
      %v3569 = vpop.permute.xlu0 %3568
      %3570 = vrot.lane.b32.xlu0 %v2782, 48
      %v3571 = vpop.permute.xlu0 %3570
      %3572 = vrot.lane.b32.xlu0 %v2783, 48
      %v3573 = vpop.permute.xlu0 %3572
      %3574 = vrot.lane.b32.xlu0 %v2784, 48
      %v3575 = vpop.permute.xlu0 %3574
      %3576 = vrot.lane.b32.xlu0 %v2785, 48
      %v3577 = vpop.permute.xlu0 %3576
      %3578 = vrot.lane.b32.xlu0 %v2786, 48
      %v3579 = vpop.permute.xlu0 %3578
      %3580 = vrot.lane.b32.xlu0 %v2787, 48
      %v3581 = vpop.permute.xlu0 %3580
      %3582 = vrot.lane.b32.xlu0 %v2788, 48
      %v3583 = vpop.permute.xlu0 %3582
      %3584 = vrot.lane.b32.xlu0 %v2789, 48
      %v3585 = vpop.permute.xlu0 %3584
      %3586 = vrot.lane.b32.xlu0 %v2790, 48
      %v3587 = vpop.permute.xlu0 %3586
      %3588 = vrot.lane.b32.xlu0 %v2791, 48
      %v3589 = vpop.permute.xlu0 %3588
      %3590 = vrot.lane.b32.xlu0 %v2792, 48
      %v3591 = vpop.permute.xlu0 %3590
      %3592 = vrot.lane.b32.xlu0 %v2793, 48
      %v3593 = vpop.permute.xlu0 %3592
      %3658 = vrot.lane.b32.xlu0 %v2794, 56
      %v3659 = vpop.permute.xlu0 %3658
      %3660 = vrot.lane.b32.xlu0 %v2795, 56
      %v3661 = vpop.permute.xlu0 %3660
      %3662 = vrot.lane.b32.xlu0 %v2796, 56
      %v3663 = vpop.permute.xlu0 %3662
      %3664 = vrot.lane.b32.xlu0 %v2797, 56
      %v3665 = vpop.permute.xlu0 %3664
      %3666 = vrot.lane.b32.xlu0 %v2798, 56
      %v3667 = vpop.permute.xlu0 %3666
      %3668 = vrot.lane.b32.xlu0 %v2799, 56
      %v3669 = vpop.permute.xlu0 %3668
      %3670 = vrot.lane.b32.xlu0 %v2800, 56
      %v3671 = vpop.permute.xlu0 %3670
      %3672 = vrot.lane.b32.xlu0 %v2801, 56
      %v3673 = vpop.permute.xlu0 %3672
      %3674 = vrot.lane.b32.xlu0 %v2802, 56
      %v3675 = vpop.permute.xlu0 %3674
      %3676 = vrot.lane.b32.xlu0 %v2803, 56
      %v3677 = vpop.permute.xlu0 %3676
      %3678 = vrot.lane.b32.xlu0 %v2804, 56
      %v3679 = vpop.permute.xlu0 %3678
      %3680 = vrot.lane.b32.xlu0 %v2805, 56
      %v3681 = vpop.permute.xlu0 %3680
      %3682 = vrot.lane.b32.xlu0 %v2806, 56
      %v3683 = vpop.permute.xlu0 %3682
      %3684 = vrot.lane.b32.xlu0 %v2807, 56
      %v3685 = vpop.permute.xlu0 %3684
      %3686 = vrot.lane.b32.xlu0 %v2808, 56
      %v3687 = vpop.permute.xlu0 %3686
      %3688 = vrot.lane.b32.xlu0 %v2809, 56
      %v3689 = vpop.permute.xlu0 %3688
      %3690 = vrot.lane.b32.xlu0 %v2810, 56
      %v3691 = vpop.permute.xlu0 %3690
      %3692 = vrot.lane.b32.xlu0 %v2811, 56
      %v3693 = vpop.permute.xlu0 %3692
      %3694 = vrot.lane.b32.xlu0 %v2812, 56
      %v3695 = vpop.permute.xlu0 %3694
      %3696 = vrot.lane.b32.xlu0 %v2813, 56
      %v3697 = vpop.permute.xlu0 %3696
      %3698 = vrot.lane.b32.xlu0 %v2814, 56
      %v3699 = vpop.permute.xlu0 %3698
      %3700 = vrot.lane.b32.xlu0 %v2815, 56
      %v3701 = vpop.permute.xlu0 %3700
      %3702 = vrot.lane.b32.xlu0 %v2816, 56
      %v3703 = vpop.permute.xlu0 %3702
      %3704 = vrot.lane.b32.xlu0 %v2817, 56
      %v3705 = vpop.permute.xlu0 %3704
      %3706 = vrot.lane.b32.xlu0 %v2818, 56
      %v3707 = vpop.permute.xlu0 %3706
      %3708 = vrot.lane.b32.xlu0 %v2819, 56
      %v3709 = vpop.permute.xlu0 %3708
      %3710 = vrot.lane.b32.xlu0 %v2820, 56
      %v3711 = vpop.permute.xlu0 %3710
      %3712 = vrot.lane.b32.xlu0 %v2821, 56
      %v3713 = vpop.permute.xlu0 %3712
      %3714 = vrot.lane.b32.xlu0 %v2822, 56
      %v3715 = vpop.permute.xlu0 %3714
      %3716 = vrot.lane.b32.xlu0 %v2823, 56
      %v3717 = vpop.permute.xlu0 %3716
      %3718 = vrot.lane.b32.xlu0 %v2824, 56
      %v3719 = vpop.permute.xlu0 %3718
      %3720 = vrot.lane.b32.xlu0 %v2825, 56
      %v3721 = vpop.permute.xlu0 %3720
      %3786 = vrot.lane.b32.xlu0 %v2826, 64
      %v3787 = vpop.permute.xlu0 %3786
      %3788 = vrot.lane.b32.xlu0 %v2827, 64
      %v3789 = vpop.permute.xlu0 %3788
      %3790 = vrot.lane.b32.xlu0 %v2828, 64
      %v3791 = vpop.permute.xlu0 %3790
      %3792 = vrot.lane.b32.xlu0 %v2829, 64
      %v3793 = vpop.permute.xlu0 %3792
      %3794 = vrot.lane.b32.xlu0 %v2830, 64
      %v3795 = vpop.permute.xlu0 %3794
      %3796 = vrot.lane.b32.xlu0 %v2831, 64
      %v3797 = vpop.permute.xlu0 %3796
      %3798 = vrot.lane.b32.xlu0 %v2832, 64
      %v3799 = vpop.permute.xlu0 %3798
      %3800 = vrot.lane.b32.xlu0 %v2833, 64
      %v3801 = vpop.permute.xlu0 %3800
      %3802 = vrot.lane.b32.xlu0 %v2834, 64
      %v3803 = vpop.permute.xlu0 %3802
      %3804 = vrot.lane.b32.xlu0 %v2835, 64
      %v3805 = vpop.permute.xlu0 %3804
      %3806 = vrot.lane.b32.xlu0 %v2836, 64
      %v3807 = vpop.permute.xlu0 %3806
      %3808 = vrot.lane.b32.xlu0 %v2837, 64
      %v3809 = vpop.permute.xlu0 %3808
      %3810 = vrot.lane.b32.xlu0 %v2838, 64
      %v3811 = vpop.permute.xlu0 %3810
      %3812 = vrot.lane.b32.xlu0 %v2839, 64
      %v3813 = vpop.permute.xlu0 %3812
      %3814 = vrot.lane.b32.xlu0 %v2840, 64
      %v3815 = vpop.permute.xlu0 %3814
      %3816 = vrot.lane.b32.xlu0 %v2841, 64
      %v3817 = vpop.permute.xlu0 %3816
      %3818 = vrot.lane.b32.xlu0 %v2842, 64
      %v3819 = vpop.permute.xlu0 %3818
      %3820 = vrot.lane.b32.xlu0 %v2843, 64
      %v3821 = vpop.permute.xlu0 %3820
      %3822 = vrot.lane.b32.xlu0 %v2844, 64
      %v3823 = vpop.permute.xlu0 %3822
      %3824 = vrot.lane.b32.xlu0 %v2845, 64
      %v3825 = vpop.permute.xlu0 %3824
      %3826 = vrot.lane.b32.xlu0 %v2846, 64
      %v3827 = vpop.permute.xlu0 %3826
      %3828 = vrot.lane.b32.xlu0 %v2847, 64
      %v3829 = vpop.permute.xlu0 %3828
      %3830 = vrot.lane.b32.xlu0 %v2848, 64
      %v3831 = vpop.permute.xlu0 %3830
      %3832 = vrot.lane.b32.xlu0 %v2849, 64
      %v3833 = vpop.permute.xlu0 %3832
      %3834 = vrot.lane.b32.xlu0 %v2850, 64
      %v3835 = vpop.permute.xlu0 %3834
      %3836 = vrot.lane.b32.xlu0 %v2851, 64
      %v3837 = vpop.permute.xlu0 %3836
      %3838 = vrot.lane.b32.xlu0 %v2852, 64
      %v3839 = vpop.permute.xlu0 %3838
      %3840 = vrot.lane.b32.xlu0 %v2853, 64
      %v3841 = vpop.permute.xlu0 %3840
      %3842 = vrot.lane.b32.xlu0 %v2854, 64
      %v3843 = vpop.permute.xlu0 %3842
      %3844 = vrot.lane.b32.xlu0 %v2855, 64
      %v3845 = vpop.permute.xlu0 %3844
      %3846 = vrot.lane.b32.xlu0 %v2856, 64
      %v3847 = vpop.permute.xlu0 %3846
      %3848 = vrot.lane.b32.xlu0 %v2857, 64
      %v3849 = vpop.permute.xlu0 %3848
      %v3882 = vsel %vm1851, %v2569, %v2891
      %v3883 = vsel %vm1851, %v2570, %v2893
      %v3884 = vsel %vm1851, %v2571, %v2895
      %v3885 = vsel %vm1851, %v2572, %v2897
      %v3886 = vsel %vm1851, %v2573, %v2899
      %v3887 = vsel %vm1851, %v2574, %v2901
      %v3888 = vsel %vm1851, %v2575, %v2903
      %v3889 = vsel %vm1851, %v2576, %v2905
      %v3890 = vsel %vm1851, %v2577, %v2907
      %v3891 = vsel %vm1851, %v2578, %v2909
      %v3892 = vsel %vm1851, %v2579, %v2911
      %v3893 = vsel %vm1851, %v2580, %v2913
      %v3894 = vsel %vm1851, %v2581, %v2915
      %v3895 = vsel %vm1851, %v2582, %v2917
      %v3896 = vsel %vm1851, %v2583, %v2919
      %v3897 = vsel %vm1851, %v2584, %v2921
      %v3898 = vsel %vm1851, %v2585, %v2923
      %v3899 = vsel %vm1851, %v2586, %v2925
      %v3900 = vsel %vm1851, %v2587, %v2927
      %v3901 = vsel %vm1851, %v2588, %v2929
      %v3902 = vsel %vm1851, %v2589, %v2931
      %v3903 = vsel %vm1851, %v2590, %v2933
      %v3904 = vsel %vm1851, %v2591, %v2935
      %v3905 = vsel %vm1851, %v2592, %v2937
      %v3906 = vsel %vm1851, %v2593, %v2939
      %v3907 = vsel %vm1851, %v2594, %v2941
      %v3908 = vsel %vm1851, %v2595, %v2943
      %v3909 = vsel %vm1851, %v2596, %v2945
      %v3910 = vsel %vm1851, %v2597, %v2947
      %v3911 = vsel %vm1851, %v2598, %v2949
      %v3912 = vsel %vm1851, %v2599, %v2951
      %v3913 = vsel %vm1851, %v2600, %v2953
      %v3914 = vsel %vm1917, %v3882, %v3019
      %v3915 = vsel %vm1917, %v3883, %v3021
      %v3916 = vsel %vm1917, %v3884, %v3023
      %v3917 = vsel %vm1917, %v3885, %v3025
      %v3918 = vsel %vm1917, %v3886, %v3027
      %v3919 = vsel %vm1917, %v3887, %v3029
      %v3920 = vsel %vm1917, %v3888, %v3031
      %v3921 = vsel %vm1917, %v3889, %v3033
      %v3922 = vsel %vm1917, %v3890, %v3035
      %v3923 = vsel %vm1917, %v3891, %v3037
      %v3924 = vsel %vm1917, %v3892, %v3039
      %v3925 = vsel %vm1917, %v3893, %v3041
      %v3926 = vsel %vm1917, %v3894, %v3043
      %v3927 = vsel %vm1917, %v3895, %v3045
      %v3928 = vsel %vm1917, %v3896, %v3047
      %v3929 = vsel %vm1917, %v3897, %v3049
      %v3930 = vsel %vm1917, %v3898, %v3051
      %v3931 = vsel %vm1917, %v3899, %v3053
      %v3932 = vsel %vm1917, %v3900, %v3055
      %v3933 = vsel %vm1917, %v3901, %v3057
      %v3934 = vsel %vm1917, %v3902, %v3059
      %v3935 = vsel %vm1917, %v3903, %v3061
      %v3936 = vsel %vm1917, %v3904, %v3063
      %v3937 = vsel %vm1917, %v3905, %v3065
      %v3938 = vsel %vm1917, %v3906, %v3067
      %v3939 = vsel %vm1917, %v3907, %v3069
      %v3940 = vsel %vm1917, %v3908, %v3071
      %v3941 = vsel %vm1917, %v3909, %v3073
      %v3942 = vsel %vm1917, %v3910, %v3075
      %v3943 = vsel %vm1917, %v3911, %v3077
      %v3944 = vsel %vm1917, %v3912, %v3079
      %v3945 = vsel %vm1917, %v3913, %v3081
      %v3946 = vsel %vm1983, %v3914, %v3147
      %v3947 = vsel %vm1983, %v3915, %v3149
      %v3948 = vsel %vm1983, %v3916, %v3151
      %v3949 = vsel %vm1983, %v3917, %v3153
      %v3950 = vsel %vm1983, %v3918, %v3155
      %v3951 = vsel %vm1983, %v3919, %v3157
      %v3952 = vsel %vm1983, %v3920, %v3159
      %v3953 = vsel %vm1983, %v3921, %v3161
      %v3954 = vsel %vm1983, %v3922, %v3163
      %v3955 = vsel %vm1983, %v3923, %v3165
      %v3956 = vsel %vm1983, %v3924, %v3167
      %v3957 = vsel %vm1983, %v3925, %v3169
      %v3958 = vsel %vm1983, %v3926, %v3171
      %v3959 = vsel %vm1983, %v3927, %v3173
      %v3960 = vsel %vm1983, %v3928, %v3175
      %v3961 = vsel %vm1983, %v3929, %v3177
      %v3962 = vsel %vm1983, %v3930, %v3179
      %v3963 = vsel %vm1983, %v3931, %v3181
      %v3964 = vsel %vm1983, %v3932, %v3183
      %v3965 = vsel %vm1983, %v3933, %v3185
      %v3966 = vsel %vm1983, %v3934, %v3187
      %v3967 = vsel %vm1983, %v3935, %v3189
      %v3968 = vsel %vm1983, %v3936, %v3191
      %v3969 = vsel %vm1983, %v3937, %v3193
      %v3970 = vsel %vm1983, %v3938, %v3195
      %v3971 = vsel %vm1983, %v3939, %v3197
      %v3972 = vsel %vm1983, %v3940, %v3199
      %v3973 = vsel %vm1983, %v3941, %v3201
      %v3974 = vsel %vm1983, %v3942, %v3203
      %v3975 = vsel %vm1983, %v3943, %v3205
      %v3976 = vsel %vm1983, %v3944, %v3207
      %v3977 = vsel %vm1983, %v3945, %v3209
      %v3978 = vsel %vm2049, %v3946, %v3275
      %v3979 = vsel %vm2049, %v3947, %v3277
      %v3980 = vsel %vm2049, %v3948, %v3279
      %v3981 = vsel %vm2049, %v3949, %v3281
      %v3982 = vsel %vm2049, %v3950, %v3283
      %v3983 = vsel %vm2049, %v3951, %v3285
      %v3984 = vsel %vm2049, %v3952, %v3287
      %v3985 = vsel %vm2049, %v3953, %v3289
      %v3986 = vsel %vm2049, %v3954, %v3291
      %v3987 = vsel %vm2049, %v3955, %v3293
      %v3988 = vsel %vm2049, %v3956, %v3295
      %v3989 = vsel %vm2049, %v3957, %v3297
      %v3990 = vsel %vm2049, %v3958, %v3299
      %v3991 = vsel %vm2049, %v3959, %v3301
      %v3992 = vsel %vm2049, %v3960, %v3303
      %v3993 = vsel %vm2049, %v3961, %v3305
      %v3994 = vsel %vm2049, %v3962, %v3307
      %v3995 = vsel %vm2049, %v3963, %v3309
      %v3996 = vsel %vm2049, %v3964, %v3311
      %v3997 = vsel %vm2049, %v3965, %v3313
      %v3998 = vsel %vm2049, %v3966, %v3315
      %v3999 = vsel %vm2049, %v3967, %v3317
      %v4000 = vsel %vm2049, %v3968, %v3319
      %v4001 = vsel %vm2049, %v3969, %v3321
      %v4002 = vsel %vm2049, %v3970, %v3323
      %v4003 = vsel %vm2049, %v3971, %v3325
      %v4004 = vsel %vm2049, %v3972, %v3327
      %v4005 = vsel %vm2049, %v3973, %v3329
      %v4006 = vsel %vm2049, %v3974, %v3331
      %v4007 = vsel %vm2049, %v3975, %v3333
      %v4008 = vsel %vm2049, %v3976, %v3335
      %v4009 = vsel %vm2049, %v3977, %v3337
      %v4010 = vsel %vm2127, %v3978, %v3403
      %v4011 = vsel %vm2127, %v3979, %v3405
      %v4012 = vsel %vm2127, %v3980, %v3407
      %v4013 = vsel %vm2127, %v3981, %v3409
      %v4014 = vsel %vm2127, %v3982, %v3411
      %v4015 = vsel %vm2127, %v3983, %v3413
      %v4016 = vsel %vm2127, %v3984, %v3415
      %v4017 = vsel %vm2127, %v3985, %v3417
      %v4018 = vsel %vm2127, %v3986, %v3419
      %v4019 = vsel %vm2127, %v3987, %v3421
      %v4020 = vsel %vm2127, %v3988, %v3423
      %v4021 = vsel %vm2127, %v3989, %v3425
      %v4022 = vsel %vm2127, %v3990, %v3427
      %v4023 = vsel %vm2127, %v3991, %v3429
      %v4024 = vsel %vm2127, %v3992, %v3431
      %v4025 = vsel %vm2127, %v3993, %v3433
      %v4026 = vsel %vm2127, %v3994, %v3435
      %v4027 = vsel %vm2127, %v3995, %v3437
      %v4028 = vsel %vm2127, %v3996, %v3439
      %v4029 = vsel %vm2127, %v3997, %v3441
      %v4030 = vsel %vm2127, %v3998, %v3443
      %v4031 = vsel %vm2127, %v3999, %v3445
      %v4032 = vsel %vm2127, %v4000, %v3447
      %v4033 = vsel %vm2127, %v4001, %v3449
      %v4034 = vsel %vm2127, %v4002, %v3451
      %v4035 = vsel %vm2127, %v4003, %v3453
      %v4036 = vsel %vm2127, %v4004, %v3455
      %v4037 = vsel %vm2127, %v4005, %v3457
      %v4038 = vsel %vm2127, %v4006, %v3459
      %v4039 = vsel %vm2127, %v4007, %v3461
      %v4040 = vsel %vm2127, %v4008, %v3463
      %v4041 = vsel %vm2127, %v4009, %v3465
      %vm4042 = vcmask 392192
      %v4043 = vsel %vm4042, %v4010, %v3531
      %v4044 = vsel %vm4042, %v4011, %v3533
      %v4045 = vsel %vm4042, %v4012, %v3535
      %v4046 = vsel %vm4042, %v4013, %v3537
      %v4047 = vsel %vm4042, %v4014, %v3539
      %v4048 = vsel %vm4042, %v4015, %v3541
      %v4049 = vsel %vm4042, %v4016, %v3543
      %v4050 = vsel %vm4042, %v4017, %v3545
      %v4051 = vsel %vm4042, %v4018, %v3547
      %v4052 = vsel %vm4042, %v4019, %v3549
      %v4053 = vsel %vm4042, %v4020, %v3551
      %v4054 = vsel %vm4042, %v4021, %v3553
      %v4055 = vsel %vm4042, %v4022, %v3555
      %v4056 = vsel %vm4042, %v4023, %v3557
      %v4057 = vsel %vm4042, %v4024, %v3559
      %v4058 = vsel %vm4042, %v4025, %v3561
      %v4059 = vsel %vm4042, %v4026, %v3563
      %v4060 = vsel %vm4042, %v4027, %v3565
      %v4061 = vsel %vm4042, %v4028, %v3567
      %v4062 = vsel %vm4042, %v4029, %v3569
      %v4063 = vsel %vm4042, %v4030, %v3571
      %v4064 = vsel %vm4042, %v4031, %v3573
      %v4065 = vsel %vm4042, %v4032, %v3575
      %v4066 = vsel %vm4042, %v4033, %v3577
      %v4067 = vsel %vm4042, %v4034, %v3579
      %v4068 = vsel %vm4042, %v4035, %v3581
      %v4069 = vsel %vm4042, %v4036, %v3583
      %v4070 = vsel %vm4042, %v4037, %v3585
      %v4071 = vsel %vm4042, %v4038, %v3587
      %v4072 = vsel %vm4042, %v4039, %v3589
      %v4073 = vsel %vm4042, %v4040, %v3591
      %v4074 = vsel %vm4042, %v4041, %v3593
      %vm4075 = vcmask 457728
      %v4076 = vsel %vm4075, %v4043, %v3659
      %v4077 = vsel %vm4075, %v4044, %v3661
      %v4078 = vsel %vm4075, %v4045, %v3663
      %v4079 = vsel %vm4075, %v4046, %v3665
      %v4080 = vsel %vm4075, %v4047, %v3667
      %v4081 = vsel %vm4075, %v4048, %v3669
      %v4082 = vsel %vm4075, %v4049, %v3671
      %v4083 = vsel %vm4075, %v4050, %v3673
      %v4084 = vsel %vm4075, %v4051, %v3675
      %v4085 = vsel %vm4075, %v4052, %v3677
      %v4086 = vsel %vm4075, %v4053, %v3679
      %v4087 = vsel %vm4075, %v4054, %v3681
      %v4088 = vsel %vm4075, %v4055, %v3683
      %v4089 = vsel %vm4075, %v4056, %v3685
      %v4090 = vsel %vm4075, %v4057, %v3687
      %v4091 = vsel %vm4075, %v4058, %v3689
      %v4092 = vsel %vm4075, %v4059, %v3691
      %v4093 = vsel %vm4075, %v4060, %v3693
      %v4094 = vsel %vm4075, %v4061, %v3695
      %v4095 = vsel %vm4075, %v4062, %v3697
      %v4096 = vsel %vm4075, %v4063, %v3699
      %v4097 = vsel %vm4075, %v4064, %v3701
      %v4098 = vsel %vm4075, %v4065, %v3703
      %v4099 = vsel %vm4075, %v4066, %v3705
      %v4100 = vsel %vm4075, %v4067, %v3707
      %v4101 = vsel %vm4075, %v4068, %v3709
      %v4102 = vsel %vm4075, %v4069, %v3711
      %v4103 = vsel %vm4075, %v4070, %v3713
      %v4104 = vsel %vm4075, %v4071, %v3715
      %v4105 = vsel %vm4075, %v4072, %v3717
      %v4106 = vsel %vm4075, %v4073, %v3719
      %v4107 = vsel %vm4075, %v4074, %v3721
      %vm4108 = vcmask 523264
      %v4109 = vsel %vm4108, %v4076, %v3787
      %v4110 = vsel %vm4108, %v4077, %v3789
      %v4111 = vsel %vm4108, %v4078, %v3791
      %v4112 = vsel %vm4108, %v4079, %v3793
      %v4113 = vsel %vm4108, %v4080, %v3795
      %v4114 = vsel %vm4108, %v4081, %v3797
      %v4115 = vsel %vm4108, %v4082, %v3799
      %v4116 = vsel %vm4108, %v4083, %v3801
      %v4117 = vsel %vm4108, %v4084, %v3803
      %v4118 = vsel %vm4108, %v4085, %v3805
      %v4119 = vsel %vm4108, %v4086, %v3807
      %v4120 = vsel %vm4108, %v4087, %v3809
      %v4121 = vsel %vm4108, %v4088, %v3811
      %v4122 = vsel %vm4108, %v4089, %v3813
      %v4123 = vsel %vm4108, %v4090, %v3815
      %v4124 = vsel %vm4108, %v4091, %v3817
      %v4125 = vsel %vm4108, %v4092, %v3819
      %v4126 = vsel %vm4108, %v4093, %v3821
      %v4127 = vsel %vm4108, %v4094, %v3823
      %v4128 = vsel %vm4108, %v4095, %v3825
      %v4129 = vsel %vm4108, %v4096, %v3827
      %v4130 = vsel %vm4108, %v4097, %v3829
      %v4131 = vsel %vm4108, %v4098, %v3831
      %v4132 = vsel %vm4108, %v4099, %v3833
      %v4133 = vsel %vm4108, %v4100, %v3835
      %v4134 = vsel %vm4108, %v4101, %v3837
      %v4135 = vsel %vm4108, %v4102, %v3839
      %v4136 = vsel %vm4108, %v4103, %v3841
      %v4137 = vsel %vm4108, %v4104, %v3843
      %v4138 = vsel %vm4108, %v4105, %v3845
      %v4139 = vsel %vm4108, %v4106, %v3847
      %v4140 = vsel %vm4108, %v4107, %v3849
      %v4141 = vld [vmem:[%s3] sm:$0xff]
      %v4142 = vld [vmem:[%s3 + $0x8] sm:$0xff]
      %v4143 = vld [vmem:[%s3 + $0x10] sm:$0xff]
      %v4144 = vld [vmem:[%s3 + $0x18] sm:$0xff]
      %v4145 = vld [vmem:[%s3 + $0x20] sm:$0xff]
      %v4146 = vld [vmem:[%s3 + $0x28] sm:$0xff]
      %v4147 = vld [vmem:[%s3 + $0x30] sm:$0xff]
      %v4148 = vld [vmem:[%s3 + $0x38] sm:$0xff]
      %v4149 = vld [vmem:[%s3 + $0x40] sm:$0xff]
      %v4150 = vld [vmem:[%s4] sm:$0x1]
      %v4152 = vlaneseq
      %v4153 = vshrl.u32 %v4152, 7
      %v4154 = vsub.s32 0, %v4153
      %v4155 = vrot.slane %v4150, %v4154
      %vm4157 = vcmask 588800
      %v4159 = vsel %vm4157, %v4109, 0
      %v4162 = vsel %vm4157, %v4110, 0
      %v4165 = vsel %vm4157, %v4111, 0
      %v4168 = vsel %vm4157, %v4112, 0
      %v4171 = vsel %vm4157, %v4113, 0
      %v4174 = vsel %vm4157, %v4114, 0
      %v4177 = vsel %vm4157, %v4115, 0
      %v4180 = vsel %vm4157, %v4116, 0
      %v4183 = vsel %vm4157, %v4117, 0
      %v4186 = vsel %vm4157, %v4118, 0
      %v4189 = vsel %vm4157, %v4119, 0
      %v4192 = vsel %vm4157, %v4120, 0
      %v4195 = vsel %vm4157, %v4121, 0
      %v4198 = vsel %vm4157, %v4122, 0
      %v4201 = vsel %vm4157, %v4123, 0
      %v4204 = vsel %vm4157, %v4124, 0
      %v4207 = vsel %vm4157, %v4125, 0
      %v4210 = vsel %vm4157, %v4126, 0
      %v4213 = vsel %vm4157, %v4127, 0
      %v4216 = vsel %vm4157, %v4128, 0
      %v4219 = vsel %vm4157, %v4129, 0
      %v4222 = vsel %vm4157, %v4130, 0
      %v4225 = vsel %vm4157, %v4131, 0
      %v4228 = vsel %vm4157, %v4132, 0
      %v4231 = vsel %vm4157, %v4133, 0
      %v4234 = vsel %vm4157, %v4134, 0
      %v4237 = vsel %vm4157, %v4135, 0
      %v4240 = vsel %vm4157, %v4136, 0
      %v4243 = vsel %vm4157, %v4137, 0
      %v4246 = vsel %vm4157, %v4138, 0
      %v4249 = vsel %vm4157, %v4139, 0
      %v4252 = vsel %vm4157, %v4140, 0
      %4254 = vmatprep.subr.mxu0 0.0
      %4255 = vmatpush1.msra.mxu0 0.0
      %4256 = vmatprep.subr.mxu0 0.0
      %4257 = vmatpush1.msra.mxu0 0.0
      %4258 = vmatprep.subr.mxu0 0.0
      %4259 = vmatpush1.msra.mxu0 0.0
      %4260 = vmatprep.subr.mxu0 0.0
      %4261 = vmatpush1.msra.mxu0 0.0
      %4262 = vmatprep.subr.mxu0 0.0
      %4263 = vmatpush1.msra.mxu0 0.0
      %4264 = vmatprep.subr.mxu0 0.0
      %4265 = vmatpush1.msra.mxu0 0.0
      %4266 = vmatprep.subr.mxu0 0.0
      %4267 = vmatpush1.msra.mxu0 0.0
      %4268 = vmatprep.subr.mxu0 0.0
      %4269 = vmatpush1.msra.mxu0 %v4149
      %4270 = vmatprep.subr.mxu0 0.0
      %4271 = vmatpush1.msra.mxu0 %v4148
      %4272 = vmatprep.subr.mxu0 0.0
      %4273 = vmatpush1.msra.mxu0 %v4147
      %4274 = vmatprep.subr.mxu0 0.0
      %4275 = vmatpush1.msra.mxu0 %v4146
      %4276 = vmatprep.subr.mxu0 0.0
      %4277 = vmatpush1.msra.mxu0 %v4145
      %4278 = vmatprep.subr.mxu0 0.0
      %4279 = vmatpush1.msra.mxu0 %v4144
      %4280 = vmatprep.subr.mxu0 0.0
      %4281 = vmatpush1.msra.mxu0 %v4143
      %4282 = vmatprep.subr.mxu0 0.0
      %4283 = vmatpush1.msra.mxu0 %v4142
      %4284 = vmatprep.subr.mxu0 0.0
      %4285 = vmatpush1.msra.mxu0 %v4141
      %4286 = vmatprep.subr.mxu0 0.0
      %4287 = vmatpush2.msra.mxu0 0.0
      %4288 = vmatprep.subr.mxu0 0.0
      %4289 = vmatpush2.msra.mxu0 0.0
      %4290 = vmatprep.subr.mxu0 0.0
      %4291 = vmatpush2.msra.mxu0 0.0
      %4292 = vmatprep.subr.mxu0 0.0
      %4293 = vmatpush2.msra.mxu0 0.0
      %4294 = vmatprep.subr.mxu0 0.0
      %4295 = vmatpush2.msra.mxu0 0.0
      %4296 = vmatprep.subr.mxu0 0.0
      %4297 = vmatpush2.msra.mxu0 0.0
      %4298 = vmatprep.subr.mxu0 0.0
      %4299 = vmatpush2.msra.mxu0 0.0
      %4300 = vmatprep.subr.mxu0 0.0
      %4301 = vmatpush2.msra.mxu0 0.0
      %4302 = vmatprep.subr.mxu0 0.0
      %4303 = vmatpush2.msra.mxu0 0.0
      %4304 = vmatprep.subr.mxu0 0.0
      %4305 = vmatpush2.msra.mxu0 0.0
      %4306 = vmatprep.subr.mxu0 0.0
      %4307 = vmatpush2.msra.mxu0 0.0
      %4308 = vmatprep.subr.mxu0 0.0
      %4309 = vmatpush2.msra.mxu0 0.0
      %4310 = vmatprep.subr.mxu0 0.0
      %4311 = vmatpush2.msra.mxu0 0.0
      %4312 = vmatprep.subr.mxu0 0.0
      %4313 = vmatpush2.msra.mxu0 0.0
      %4314 = vmatprep.subr.mxu0 0.0
      %4315 = vmatpush2.msra.mxu0 0.0
      %4316 = vmatprep.subr.mxu0 0.0
      %4317 = vmatpush2.msra.mxu0 0.0
      %4318 = vmatprep.mubr.f32.mxu0 0.0
      %4319 = vmatmul.mubr.f32.gmra.mxu0 %v4159
      %v4320 = vpop.f32.mrf.mxu0
      %v4321 = vadd.f32 %v4155, %v4320
      %v4322 = vpop.f32.mrf.mxu0
      %4323 = vmatprep.mubr.f32.mxu0 0.0
      %4324 = vmatmul.mubr.f32.gmra.mxu0 %v4162
      %v4325 = vpop.f32.mrf.mxu0
      %v4326 = vadd.f32 %v4155, %v4325
      %v4327 = vpop.f32.mrf.mxu0
      %4328 = vmatprep.mubr.f32.mxu0 0.0
      %4329 = vmatmul.mubr.f32.gmra.mxu0 %v4165
      %v4330 = vpop.f32.mrf.mxu0
      %v4331 = vadd.f32 %v4155, %v4330
      %v4332 = vpop.f32.mrf.mxu0
      %4333 = vmatprep.mubr.f32.mxu0 0.0
      %4334 = vmatmul.mubr.f32.gmra.mxu0 %v4168
      %v4335 = vpop.f32.mrf.mxu0
      %v4336 = vadd.f32 %v4155, %v4335
      %v4337 = vpop.f32.mrf.mxu0
      %4338 = vmatprep.mubr.f32.mxu0 0.0
      %4339 = vmatmul.mubr.f32.gmra.mxu0 %v4171
      %v4340 = vpop.f32.mrf.mxu0
      %v4341 = vadd.f32 %v4155, %v4340
      %v4342 = vpop.f32.mrf.mxu0
      %4343 = vmatprep.mubr.f32.mxu0 0.0
      %4344 = vmatmul.mubr.f32.gmra.mxu0 %v4174
      %v4345 = vpop.f32.mrf.mxu0
      %v4346 = vadd.f32 %v4155, %v4345
      %v4347 = vpop.f32.mrf.mxu0
      %4348 = vmatprep.mubr.f32.mxu0 0.0
      %4349 = vmatmul.mubr.f32.gmra.mxu0 %v4177
      %v4350 = vpop.f32.mrf.mxu0
      %v4351 = vadd.f32 %v4155, %v4350
      %v4352 = vpop.f32.mrf.mxu0
      %4353 = vmatprep.mubr.f32.mxu0 0.0
      %4354 = vmatmul.mubr.f32.gmra.mxu0 %v4180
      %v4355 = vpop.f32.mrf.mxu0
      %v4356 = vadd.f32 %v4155, %v4355
      %v4357 = vpop.f32.mrf.mxu0
      %4358 = vmatprep.mubr.f32.mxu0 0.0
      %4359 = vmatmul.mubr.f32.gmra.mxu0 %v4183
      %v4360 = vpop.f32.mrf.mxu0
      %v4361 = vadd.f32 %v4155, %v4360
      %v4362 = vpop.f32.mrf.mxu0
      %4363 = vmatprep.mubr.f32.mxu0 0.0
      %4364 = vmatmul.mubr.f32.gmra.mxu0 %v4186
      %v4365 = vpop.f32.mrf.mxu0
      %v4366 = vadd.f32 %v4155, %v4365
      %v4367 = vpop.f32.mrf.mxu0
      %4368 = vmatprep.mubr.f32.mxu0 0.0
      %4369 = vmatmul.mubr.f32.gmra.mxu0 %v4189
      %v4370 = vpop.f32.mrf.mxu0
      %v4371 = vadd.f32 %v4155, %v4370
      %v4372 = vpop.f32.mrf.mxu0
      %4373 = vmatprep.mubr.f32.mxu0 0.0
      %4374 = vmatmul.mubr.f32.gmra.mxu0 %v4192
      %v4375 = vpop.f32.mrf.mxu0
      %v4376 = vadd.f32 %v4155, %v4375
      %v4377 = vpop.f32.mrf.mxu0
      %4378 = vmatprep.mubr.f32.mxu0 0.0
      %4379 = vmatmul.mubr.f32.gmra.mxu0 %v4195
      %v4380 = vpop.f32.mrf.mxu0
      %v4381 = vadd.f32 %v4155, %v4380
      %v4382 = vpop.f32.mrf.mxu0
      %4383 = vmatprep.mubr.f32.mxu0 0.0
      %4384 = vmatmul.mubr.f32.gmra.mxu0 %v4198
      %v4385 = vpop.f32.mrf.mxu0
      %v4386 = vadd.f32 %v4155, %v4385
      %v4387 = vpop.f32.mrf.mxu0
      %4388 = vmatprep.mubr.f32.mxu0 0.0
      %4389 = vmatmul.mubr.f32.gmra.mxu0 %v4201
      %v4390 = vpop.f32.mrf.mxu0
      %v4391 = vadd.f32 %v4155, %v4390
      %v4392 = vpop.f32.mrf.mxu0
      %4393 = vmatprep.mubr.f32.mxu0 0.0
      %4394 = vmatmul.mubr.f32.gmra.mxu0 %v4204
      %v4395 = vpop.f32.mrf.mxu0
      %v4396 = vadd.f32 %v4155, %v4395
      %v4397 = vpop.f32.mrf.mxu0
      %4398 = vmatprep.mubr.f32.mxu0 0.0
      %4399 = vmatmul.mubr.f32.gmra.mxu0 %v4207
      %v4400 = vpop.f32.mrf.mxu0
      %v4401 = vadd.f32 %v4155, %v4400
      %v4402 = vpop.f32.mrf.mxu0
      %4403 = vmatprep.mubr.f32.mxu0 0.0
      %4404 = vmatmul.mubr.f32.gmra.mxu0 %v4210
      %v4405 = vpop.f32.mrf.mxu0
      %v4406 = vadd.f32 %v4155, %v4405
      %v4407 = vpop.f32.mrf.mxu0
      %4408 = vmatprep.mubr.f32.mxu0 0.0
      %4409 = vmatmul.mubr.f32.gmra.mxu0 %v4213
      %v4410 = vpop.f32.mrf.mxu0
      %v4411 = vadd.f32 %v4155, %v4410
      %v4412 = vpop.f32.mrf.mxu0
      %4413 = vmatprep.mubr.f32.mxu0 0.0
      %4414 = vmatmul.mubr.f32.gmra.mxu0 %v4216
      %v4415 = vpop.f32.mrf.mxu0
      %v4416 = vadd.f32 %v4155, %v4415
      %v4417 = vpop.f32.mrf.mxu0
      %4418 = vmatprep.mubr.f32.mxu0 0.0
      %4419 = vmatmul.mubr.f32.gmra.mxu0 %v4219
      %v4420 = vpop.f32.mrf.mxu0
      %v4421 = vadd.f32 %v4155, %v4420
      %v4422 = vpop.f32.mrf.mxu0
      %4423 = vmatprep.mubr.f32.mxu0 0.0
      %4424 = vmatmul.mubr.f32.gmra.mxu0 %v4222
      %v4425 = vpop.f32.mrf.mxu0
      %v4426 = vadd.f32 %v4155, %v4425
      %v4427 = vpop.f32.mrf.mxu0
      %4428 = vmatprep.mubr.f32.mxu0 0.0
      %4429 = vmatmul.mubr.f32.gmra.mxu0 %v4225
      %v4430 = vpop.f32.mrf.mxu0
      %v4431 = vadd.f32 %v4155, %v4430
      %v4432 = vpop.f32.mrf.mxu0
      %4433 = vmatprep.mubr.f32.mxu0 0.0
      %4434 = vmatmul.mubr.f32.gmra.mxu0 %v4228
      %v4435 = vpop.f32.mrf.mxu0
      %v4436 = vadd.f32 %v4155, %v4435
      %v4437 = vpop.f32.mrf.mxu0
      %4438 = vmatprep.mubr.f32.mxu0 0.0
      %4439 = vmatmul.mubr.f32.gmra.mxu0 %v4231
      %v4440 = vpop.f32.mrf.mxu0
      %v4441 = vadd.f32 %v4155, %v4440
      %v4442 = vpop.f32.mrf.mxu0
      %4443 = vmatprep.mubr.f32.mxu0 0.0
      %4444 = vmatmul.mubr.f32.gmra.mxu0 %v4234
      %v4445 = vpop.f32.mrf.mxu0
      %v4446 = vadd.f32 %v4155, %v4445
      %v4447 = vpop.f32.mrf.mxu0
      %4448 = vmatprep.mubr.f32.mxu0 0.0
      %4449 = vmatmul.mubr.f32.gmra.mxu0 %v4237
      %v4450 = vpop.f32.mrf.mxu0
      %v4451 = vadd.f32 %v4155, %v4450
      %v4452 = vpop.f32.mrf.mxu0
      %4453 = vmatprep.mubr.f32.mxu0 0.0
      %4454 = vmatmul.mubr.f32.gmra.mxu0 %v4240
      %v4455 = vpop.f32.mrf.mxu0
      %v4456 = vadd.f32 %v4155, %v4455
      %v4457 = vpop.f32.mrf.mxu0
      %4458 = vmatprep.mubr.f32.mxu0 0.0
      %4459 = vmatmul.mubr.f32.gmra.mxu0 %v4243
      %v4460 = vpop.f32.mrf.mxu0
      %v4461 = vadd.f32 %v4155, %v4460
      %v4462 = vpop.f32.mrf.mxu0
      %4463 = vmatprep.mubr.f32.mxu0 0.0
      %4464 = vmatmul.mubr.f32.gmra.mxu0 %v4246
      %v4465 = vpop.f32.mrf.mxu0
      %v4466 = vadd.f32 %v4155, %v4465
      %v4467 = vpop.f32.mrf.mxu0
      %4468 = vmatprep.mubr.f32.mxu0 0.0
      %4469 = vmatmul.mubr.f32.gmra.mxu0 %v4249
      %v4470 = vpop.f32.mrf.mxu0
      %v4471 = vadd.f32 %v4155, %v4470
      %v4472 = vpop.f32.mrf.mxu0
      %4473 = vmatprep.mubr.f32.mxu0 0.0
      %4474 = vmatmul.mubr.f32.gmra.mxu0 %v4252
      %v4475 = vpop.f32.mrf.mxu0
      %v4476 = vadd.f32 %v4155, %v4475
      %v4477 = vpop.f32.mrf.mxu0
      %4478 = vdwg.mxu0
      %4511 = vrot.lane.b32.xlu0 %v2291, 120
      %v4512 = vpop.permute.xlu0 %4511
      %4513 = vrot.lane.b32.xlu0 %v2296, 120
      %v4514 = vpop.permute.xlu0 %4513
      %4515 = vrot.lane.b32.xlu0 %v2301, 120
      %v4516 = vpop.permute.xlu0 %4515
      %4517 = vrot.lane.b32.xlu0 %v2306, 120
      %v4518 = vpop.permute.xlu0 %4517
      %4519 = vrot.lane.b32.xlu0 %v2311, 120
      %v4520 = vpop.permute.xlu0 %4519
      %4521 = vrot.lane.b32.xlu0 %v2316, 120
      %v4522 = vpop.permute.xlu0 %4521
      %4523 = vrot.lane.b32.xlu0 %v2321, 120
      %v4524 = vpop.permute.xlu0 %4523
      %4525 = vrot.lane.b32.xlu0 %v2326, 120
      %v4526 = vpop.permute.xlu0 %4525
      %4527 = vrot.lane.b32.xlu0 %v2331, 120
      %v4528 = vpop.permute.xlu0 %4527
      %4529 = vrot.lane.b32.xlu0 %v2336, 120
      %v4530 = vpop.permute.xlu0 %4529
      %4531 = vrot.lane.b32.xlu0 %v2341, 120
      %v4532 = vpop.permute.xlu0 %4531
      %4533 = vrot.lane.b32.xlu0 %v2346, 120
      %v4534 = vpop.permute.xlu0 %4533
      %4535 = vrot.lane.b32.xlu0 %v2351, 120
      %v4536 = vpop.permute.xlu0 %4535
      %4537 = vrot.lane.b32.xlu0 %v2356, 120
      %v4538 = vpop.permute.xlu0 %4537
      %4539 = vrot.lane.b32.xlu0 %v2361, 120
      %v4540 = vpop.permute.xlu0 %4539
      %4541 = vrot.lane.b32.xlu0 %v2366, 120
      %v4542 = vpop.permute.xlu0 %4541
      %4543 = vrot.lane.b32.xlu0 %v2371, 120
      %v4544 = vpop.permute.xlu0 %4543
      %4545 = vrot.lane.b32.xlu0 %v2376, 120
      %v4546 = vpop.permute.xlu0 %4545
      %4547 = vrot.lane.b32.xlu0 %v2381, 120
      %v4548 = vpop.permute.xlu0 %4547
      %4549 = vrot.lane.b32.xlu0 %v2386, 120
      %v4550 = vpop.permute.xlu0 %4549
      %4551 = vrot.lane.b32.xlu0 %v2391, 120
      %v4552 = vpop.permute.xlu0 %4551
      %4553 = vrot.lane.b32.xlu0 %v2396, 120
      %v4554 = vpop.permute.xlu0 %4553
      %4555 = vrot.lane.b32.xlu0 %v2401, 120
      %v4556 = vpop.permute.xlu0 %4555
      %4557 = vrot.lane.b32.xlu0 %v2406, 120
      %v4558 = vpop.permute.xlu0 %4557
      %4559 = vrot.lane.b32.xlu0 %v2411, 120
      %v4560 = vpop.permute.xlu0 %4559
      %4561 = vrot.lane.b32.xlu0 %v2416, 120
      %v4562 = vpop.permute.xlu0 %4561
      %4563 = vrot.lane.b32.xlu0 %v2421, 120
      %v4564 = vpop.permute.xlu0 %4563
      %4565 = vrot.lane.b32.xlu0 %v2426, 120
      %v4566 = vpop.permute.xlu0 %4565
      %4567 = vrot.lane.b32.xlu0 %v2431, 120
      %v4568 = vpop.permute.xlu0 %4567
      %4569 = vrot.lane.b32.xlu0 %v2436, 120
      %v4570 = vpop.permute.xlu0 %4569
      %4571 = vrot.lane.b32.xlu0 %v2441, 120
      %v4572 = vpop.permute.xlu0 %4571
      %4573 = vrot.lane.b32.xlu0 %v2446, 120
      %v4574 = vpop.permute.xlu0 %4573
      %v4607 = vadd.f32 %v4321, %v4512
      %v4608 = vadd.f32 %v4326, %v4514
      %v4609 = vadd.f32 %v4331, %v4516
      %v4610 = vadd.f32 %v4336, %v4518
      %v4611 = vadd.f32 %v4341, %v4520
      %v4612 = vadd.f32 %v4346, %v4522
      %v4613 = vadd.f32 %v4351, %v4524
      %v4614 = vadd.f32 %v4356, %v4526
      %v4615 = vadd.f32 %v4361, %v4528
      %v4616 = vadd.f32 %v4366, %v4530
      %v4617 = vadd.f32 %v4371, %v4532
      %v4618 = vadd.f32 %v4376, %v4534
      %v4619 = vadd.f32 %v4381, %v4536
      %v4620 = vadd.f32 %v4386, %v4538
      %v4621 = vadd.f32 %v4391, %v4540
      %v4622 = vadd.f32 %v4396, %v4542
      %v4623 = vadd.f32 %v4401, %v4544
      %v4624 = vadd.f32 %v4406, %v4546
      %v4625 = vadd.f32 %v4411, %v4548
      %v4626 = vadd.f32 %v4416, %v4550
      %v4627 = vadd.f32 %v4421, %v4552
      %v4628 = vadd.f32 %v4426, %v4554
      %v4629 = vadd.f32 %v4431, %v4556
      %v4630 = vadd.f32 %v4436, %v4558
      %v4631 = vadd.f32 %v4441, %v4560
      %v4632 = vadd.f32 %v4446, %v4562
      %v4633 = vadd.f32 %v4451, %v4564
      %v4634 = vadd.f32 %v4456, %v4566
      %v4635 = vadd.f32 %v4461, %v4568
      %v4636 = vadd.f32 %v4466, %v4570
      %v4637 = vadd.f32 %v4471, %v4572
      %v4638 = vadd.f32 %v4476, %v4574
      %4639 = vst.msk [vmem:[%s224] sm:$0xff] %vm1851, %v4607
      %4640 = vst.msk [vmem:[%s224 + $0x8] sm:$0xff] %vm1851, %v4608
      %4641 = vst.msk [vmem:[%s224 + $0x10] sm:$0xff] %vm1851, %v4609
      %4642 = vst.msk [vmem:[%s224 + $0x18] sm:$0xff] %vm1851, %v4610
      %4643 = vst.msk [vmem:[%s224 + $0x20] sm:$0xff] %vm1851, %v4611
      %4644 = vst.msk [vmem:[%s224 + $0x28] sm:$0xff] %vm1851, %v4612
      %4645 = vst.msk [vmem:[%s224 + $0x30] sm:$0xff] %vm1851, %v4613
      %4646 = vst.msk [vmem:[%s224 + $0x38] sm:$0xff] %vm1851, %v4614
      %4647 = vst.msk [vmem:[%s224 + $0x40] sm:$0xff] %vm1851, %v4615
      %4648 = vst.msk [vmem:[%s224 + $0x48] sm:$0xff] %vm1851, %v4616
      %4649 = vst.msk [vmem:[%s224 + $0x50] sm:$0xff] %vm1851, %v4617
      %4650 = vst.msk [vmem:[%s224 + $0x58] sm:$0xff] %vm1851, %v4618
      %4651 = vst.msk [vmem:[%s224 + $0x60] sm:$0xff] %vm1851, %v4619
      %4652 = vst.msk [vmem:[%s224 + $0x68] sm:$0xff] %vm1851, %v4620
      %4653 = vst.msk [vmem:[%s224 + $0x70] sm:$0xff] %vm1851, %v4621
      %4654 = vst.msk [vmem:[%s224 + $0x78] sm:$0xff] %vm1851, %v4622
      %4655 = vst.msk [vmem:[%s224 + $0x80] sm:$0xff] %vm1851, %v4623
      %4656 = vst.msk [vmem:[%s224 + $0x88] sm:$0xff] %vm1851, %v4624
      %4657 = vst.msk [vmem:[%s224 + $0x90] sm:$0xff] %vm1851, %v4625
      %4658 = vst.msk [vmem:[%s224 + $0x98] sm:$0xff] %vm1851, %v4626
      %4659 = vst.msk [vmem:[%s224 + $0xa0] sm:$0xff] %vm1851, %v4627
      %4660 = vst.msk [vmem:[%s224 + $0xa8] sm:$0xff] %vm1851, %v4628
      %4661 = vst.msk [vmem:[%s224 + $0xb0] sm:$0xff] %vm1851, %v4629
      %4662 = vst.msk [vmem:[%s224 + $0xb8] sm:$0xff] %vm1851, %v4630
      %4663 = vst.msk [vmem:[%s224 + $0xc0] sm:$0xff] %vm1851, %v4631
      %4664 = vst.msk [vmem:[%s224 + $0xc8] sm:$0xff] %vm1851, %v4632
      %4665 = vst.msk [vmem:[%s224 + $0xd0] sm:$0xff] %vm1851, %v4633
      %4666 = vst.msk [vmem:[%s224 + $0xd8] sm:$0xff] %vm1851, %v4634
      %4667 = vst.msk [vmem:[%s224 + $0xe0] sm:$0xff] %vm1851, %v4635
      %4668 = vst.msk [vmem:[%s224 + $0xe8] sm:$0xff] %vm1851, %v4636
      %4669 = vst.msk [vmem:[%s224 + $0xf0] sm:$0xff] %vm1851, %v4637
      %4670 = vst.msk [vmem:[%s224 + $0xf8] sm:$0xff] %vm1851, %v4638
      %p4671 = scmp.lt.s32.totalorder %s16, 1
      %s4672 = scalar_select %p4671, %s16, 1
      %s4673 = smul.addr %s4672, 32
      %s4674 = smul.addr %s4673, 8
      %s4675 = scalar_lea.vmem %s5, %s4674
      // Predicated region
      $region41: #{tpu_custom_call.1} parent=39 // pred_check
        %p4676 = pneg %p144
      $region42: #{tpu_custom_call.1} parent=39 // pred_check_branch
        %4678 = sbr.rel (%p4676) target = $region44
      $region43: #{tpu_custom_call.1} parent=39 // pred_region
        _
      $region44: #{tpu_custom_call.1} parent=39 // pred_fallthru
        _
    $region40: #{tpu_custom_call.1} parent=5 // pred_fallthru
      _
    %p4679 = scmp.le.s32.totalorder 2, %s11
    // Predicated region
    $region45: #{tpu_custom_call.1} parent=5 // pred_check
      %p4680 = pneg %p4679
    $region46: #{tpu_custom_call.1} parent=5 // pred_check_branch
      %4682 = sbr.rel (%p4680) target = $region48
    $region47: #{tpu_custom_call.1} parent=5 // pred_region
      %s4683 = ssub.s32 %s11, 2
      // Predicated region
      $region49: #{tpu_custom_call.1} parent=47 // pred_check
        %p4684 = pneg %p150
      $region50: #{tpu_custom_call.1} parent=47 // pred_check_branch
        %4686 = sbr.rel (%p4684) target = $region52
      $region51: #{tpu_custom_call.1} parent=47 // pred_region
        %p4687 = scmp.lt.s32.totalorder %s17, 1
        %s4688 = scalar_select %p4687, %s17, 1
        %s4689 = smul.addr %s4688, 32
        %s4690 = smul.addr %s4689, 8
        %s4691 = scalar_lea.vmem %s5, %s4690
      $region52: #{tpu_custom_call.1} parent=47 // pred_fallthru
        _
    $region48: #{tpu_custom_call.1} parent=5 // pred_fallthru
      _
  $region6: #{tpu_custom_call.1} parent=0 // loop_footer
    %s15 = sadd.s32 1, %s11
  $region7: #{tpu_custom_call.1} parent=0 // loop_footer_branch
    %10 = sbr.rel target = $region3
  $region8: #{tpu_custom_call.1} parent=0 // loop_exit
    _

</llo_original>
